<compile_context>
chip_gen: v5e
topology: v5e:2x2
jax: 0.10.0
libtpu: 0.0.40
codegen_flags: <defaults>
</compile_context>

<pallas_src>
import functools

import jax
import jax.numpy as jnp
from jax.experimental import pallas as pl
from jax.experimental.pallas import tpu as pltpu

NEG_SLOPE = 0.01      # nn.LeakyReLU() default negative_slope
HIDDEN_NC = 128       # hidden_nc inside ExtractorAttn


def _lrelu(x):
    return jnp.where(x >= 0, x, NEG_SLOPE * x)


# ------------------------------ Pallas kernel -------------------------------

def extractor_attn_kernel(t_ref, s_ref, w1t_ref, w1s_ref, b1_ref,
                          w2_ref, b2_ref, o_ref, *, feat_c, ksq):
    """Fused ExtractorAttn core over a tile of M rows (1 row == 1 (b,h,w) site).

    t_ref / s_ref : (tm, ksq*feat_c)  target / source k x k patches, row layout (dy,dx,c)
    w1t / w1s     : (ksq*feat_c, 128) k x k stride-k conv, split into the target-
                    channel half and the source-channel half (fuses the cat)
    w2            : (128, ksq)        1x1 conv
    o_ref         : (tm, feat_c)      final pooled result
    """
    t = t_ref[...]
    s = s_ref[...]

    # Conv2d(2C, 128, k, stride=k)  ==  per-row GEMM over the two patch halves.
    h = jnp.dot(t, w1t_ref[...], preferred_element_type=jnp.float32)
    h = h + jnp.dot(s, w1s_ref[...], preferred_element_type=jnp.float32)
    h = _lrelu(h + b1_ref[...])

    # Conv2d(128, k*k, 1) + final activation (LeakyReLU under the default args).
    a = _lrelu(jnp.dot(h, w2_ref[...], preferred_element_type=jnp.float32)
               + b2_ref[...])

    # LocalAttnReshape + (attn * block_source) + avg_pool2d(k, k), fused:
    #   out[m, c] = (1/k^2) * sum_p a[m, p] * s[m, p*C + c]
    acc = jnp.zeros(o_ref.shape, jnp.float32)
    for p in range(ksq):                                  # static unroll (k*k)
        acc = acc + a[:, p:p + 1] * s[:, p * feat_c:(p + 1) * feat_c]
    o_ref[...] = acc * (1.0 / ksq)


# --------------------------- pallas_call wrapper -----------------------------

def _extractor_attn_core(t_patches, s_patches, params, *, feat_c, ksq,
                         tile_m=256):
    m = t_patches.shape[0]
    m_pad = pl.cdiv(m, tile_m) * tile_m
    if m_pad != m:
        pad = ((0, m_pad - m), (0, 0))
        t_patches = jnp.pad(t_patches, pad)
        s_patches = jnp.pad(s_patches, pad)

    kc = ksq * feat_c
    hid = params["w1t"].shape[1]
    kern = functools.partial(extractor_attn_kernel, feat_c=feat_c, ksq=ksq)

    flops = 2 * m_pad * (2 * kc * hid + hid * ksq) + 2 * m_pad * ksq * feat_c
    bytes_accessed = 4 * (2 * m_pad * kc + m_pad * feat_c
                          + 2 * kc * hid + hid + hid * ksq + ksq)

    out = pl.pallas_call(
        kern,
        out_shape=jax.ShapeDtypeStruct((m_pad, feat_c), jnp.float32),
        grid_spec=pltpu.PrefetchScalarGridSpec(
            num_scalar_prefetch=0,
            grid=(m_pad // tile_m,),
            in_specs=[
                pl.BlockSpec((tile_m, kc), lambda i: (i, 0)),   # target patches
                pl.BlockSpec((tile_m, kc), lambda i: (i, 0)),   # source patches
                pl.BlockSpec((kc, hid), lambda i: (0, 0)),      # w1 (target half)
                pl.BlockSpec((kc, hid), lambda i: (0, 0)),      # w1 (source half)
                pl.BlockSpec((1, hid), lambda i: (0, 0)),       # b1
                pl.BlockSpec((hid, ksq), lambda i: (0, 0)),     # w2
                pl.BlockSpec((1, ksq), lambda i: (0, 0)),       # b2
            ],
            out_specs=pl.BlockSpec((tile_m, feat_c), lambda i: (i, 0)),
        ),
        compiler_params=pltpu.CompilerParams(
            dimension_semantics=("parallel",),
            vmem_limit_bytes=32 * 1024 * 1024,
        ),
        cost_estimate=pl.CostEstimate(flops=flops, transcendentals=0,
                                      bytes_accessed=bytes_accessed),
    )(t_patches, s_patches, params["w1t"], params["w1s"], params["b1"],
      params["w2"], params["b2"])
    return out[:m]


# --------------------------------- JAX glue ----------------------------------

def extract_block_patches(feat_nhwc, flow_nhwc, k):
    """BlockExtractor: for every site (b, i, j), bilinearly sample the k x k block
    of `feat` anchored at (i + flow_y, j + flow_x). Returns (B*H*W, k*k*C) rows
    with layout (dy, dx, c); out-of-bounds samples clamp to the border."""
    # TODO(synk): the CUDA BlockExtractor op is not part of the spec; the flow
    # channel order (x, y), block anchoring (top-left vs centered) and border
    # rule (clamp vs zero) follow the common convention and may differ from the
    # original CUDA kernel by a constant offset / border handling.
    B, H, W, C = feat_nhwc.shape
    fx = flow_nhwc[..., 0]
    fy = flow_nhwc[..., 1]
    base_y = jnp.arange(H, dtype=jnp.float32)[None, :, None] + fy     # (B,H,W)
    base_x = jnp.arange(W, dtype=jnp.float32)[None, None, :] + fx
    y0f = jnp.floor(base_y)
    x0f = jnp.floor(base_x)
    ty = (base_y - y0f)[..., None, None, None]                        # (B,H,W,1,1,1)
    tx = (base_x - x0f)[..., None, None, None]
    y0 = y0f.astype(jnp.int32)
    x0 = x0f.astype(jnp.int32)

    dy = jnp.arange(k, dtype=jnp.int32)[:, None]                      # (k,1)
    dx = jnp.arange(k, dtype=jnp.int32)[None, :]                      # (1,k)
    yy = y0[..., None, None] + dy                                     # (B,H,W,k,1)
    xx = x0[..., None, None] + dx                                     # (B,H,W,1,k)

    flat = feat_nhwc.reshape(B, H * W, C)
    bidx = jnp.arange(B, dtype=jnp.int32)[:, None]

    def corner(oy, ox):
        cy = jnp.clip(yy + oy, 0, H - 1)
        cx = jnp.clip(xx + ox, 0, W - 1)
        lin = (cy * W + cx).reshape(B, H * W * k * k)
        g = flat[bidx, lin]                                           # (B,HWkk,C)
        return g.reshape(B, H, W, k, k, C)

    p00 = corner(0, 0)
    p01 = corner(0, 1)
    p10 = corner(1, 0)
    p11 = corner(1, 1)
    patch = ((1.0 - ty) * (1.0 - tx) * p00 + (1.0 - ty) * tx * p01
             + ty * (1.0 - tx) * p10 + ty * tx * p11)                 # (B,H,W,k,k,C)
    return patch.reshape(B * H * W, k * k * C)


def extractor_attn_forward(source, target, flow_field, params,
                           *, kernel_size=4, tile_m=256):
    """source/target: (B, C, H, W) NCHW; flow_field: (B, 2, H, W) -> (B, C, H, W)."""
    B, C, H, W = source.shape
    k = kernel_size
    src = jnp.transpose(source, (0, 2, 3, 1)).astype(jnp.float32)
    tgt = jnp.transpose(target, (0, 2, 3, 1)).astype(jnp.float32)
    flw = jnp.transpose(flow_field, (0, 2, 3, 1)).astype(jnp.float32)

    s_patches = extract_block_patches(src, flw, k)                    # block_source
    t_patches = extract_block_patches(tgt, jnp.zeros_like(flw), k)    # block_target

    out = _extractor_attn_core(t_patches, s_patches, params,
                               feat_c=C, ksq=k * k, tile_m=tile_m)
    out = out.reshape(B, H, W, C)
    return jnp.transpose(out, (0, 3, 1, 2))


# ------------------------------ parameter setup ------------------------------

def init_extractor_attn_params(key, feature_nc, kernel_size=4, hidden_nc=HIDDEN_NC):
    k = kernel_size
    k1, k2, k3, k4 = jax.random.split(key, 4)
    # PyTorch layouts: Conv2d(2C,128,k,k) and Conv2d(128,k*k,1,1)
    wc1 = jax.random.normal(k1, (hidden_nc, 2 * feature_nc, k, k), jnp.float32) * 0.05
    bc1 = jax.random.normal(k2, (hidden_nc,), jnp.float32) * 0.05
    wc2 = jax.random.normal(k3, (k * k, hidden_nc, 1, 1), jnp.float32) * 0.05
    bc2 = jax.random.normal(k4, (k * k,), jnp.float32) * 0.05
    # GEMM layouts: rows ordered (dy, dx, cin) to match the patch rows; conv1 is
    # split into its target-channel half and source-channel half (fuses the cat).
    w1t = jnp.transpose(wc1[:, :feature_nc], (2, 3, 1, 0)).reshape(
        k * k * feature_nc, hidden_nc)
    w1s = jnp.transpose(wc1[:, feature_nc:], (2, 3, 1, 0)).reshape(
        k * k * feature_nc, hidden_nc)
    w2 = jnp.transpose(wc2.reshape(k * k, hidden_nc), (1, 0))
    return dict(w1t=w1t, w1s=w1s, b1=bc1.reshape(1, hidden_nc),
                w2=w2, b2=bc2.reshape(1, k * k))


# --------------------------- pure-JAX reference ------------------------------

def extractor_attn_reference(source, target, flow_field, params, *, kernel_size=4):
    B, C, H, W = source.shape
    k = kernel_size
    src = jnp.transpose(source, (0, 2, 3, 1)).astype(jnp.float32)
    tgt = jnp.transpose(target, (0, 2, 3, 1)).astype(jnp.float32)
    flw = jnp.transpose(flow_field, (0, 2, 3, 1)).astype(jnp.float32)
    s_p = extract_block_patches(src, flw, k)
    t_p = extract_block_patches(tgt, jnp.zeros_like(flw), k)
    h = _lrelu(t_p @ params["w1t"] + s_p @ params["w1s"] + params["b1"])
    a = _lrelu(h @ params["w2"] + params["b2"])
    s_r = s_p.reshape(-1, k * k, C)
    out = jnp.sum(a[:, :, None] * s_r, axis=1) / (k * k)
    out = out.reshape(B, H, W, C)
    return jnp.transpose(out, (0, 3, 1, 2))


# ---------------------------------- main -------------------------------------

if __name__ == "__main__":
    key = jax.random.PRNGKey(0)
    ks_, kt_, kf_, kp_ = jax.random.split(key, 4)
    B, C, H, W, K = 2, 16, 16, 16, 4          # feature_nc=16, kernel_size=4
    source = jax.random.normal(ks_, (B, C, H, W), jnp.float32)
    target = jax.random.normal(kt_, (B, C, H, W), jnp.float32)
    flow = jax.random.normal(kf_, (B, 2, H, W), jnp.float32) * 2.0
    params = init_extractor_attn_params(kp_, C, K)

    fwd = jax.jit(functools.partial(extractor_attn_forward,
                                    params=params, kernel_size=K))
    out = fwd(source, target, flow)
    jax.block_until_ready(out)

    assert out.shape == (B, C, H, W), out.shape
    assert bool(jnp.all(jnp.isfinite(out)))

    ref = extractor_attn_reference(source, target, flow, params, kernel_size=K)
    err = float(jnp.max(jnp.abs(out - ref)))
    assert err < 2e-2, f"max abs err vs reference: {err}"
    print("KERNEL_OK")
</pallas_src>

<mosaic_0001>
module attributes {stable_mosaic.version = 11 : i64} {
  func.func @extractor_attn_kernel(%arg0: i32, %arg1: memref<256x256xf32, #tpu.memory_space<vmem>>, %arg2: memref<256x256xf32, #tpu.memory_space<vmem>>, %arg3: memref<256x128xf32, #tpu.memory_space<vmem>>, %arg4: memref<256x128xf32, #tpu.memory_space<vmem>>, %arg5: memref<1x128xf32, #tpu.memory_space<vmem>>, %arg6: memref<128x16xf32, #tpu.memory_space<vmem>>, %arg7: memref<1x16xf32, #tpu.memory_space<vmem>>, %arg8: memref<256x16xf32, #tpu.memory_space<vmem>>) attributes {dimension_semantics = [#tpu.dimension_semantics<parallel>], iteration_bounds = array<i64: 2>, scalar_prefetch = 0 : i64, scratch_operands = 0 : i64, tpu.core_type = #tpu.core_type<tc>, window_params = [{transform_indices = @transform_0, window_bounds = array<i64: 256, 256>}, {transform_indices = @transform_1, window_bounds = array<i64: 256, 256>}, {pipeline_mode = #tpu.pipeline_mode<synchronous>, transform_indices = @transform_2, window_bounds = array<i64: 256, 128>}, {pipeline_mode = #tpu.pipeline_mode<synchronous>, transform_indices = @transform_3, window_bounds = array<i64: 256, 128>}, {pipeline_mode = #tpu.pipeline_mode<synchronous>, transform_indices = @transform_4, window_bounds = array<i64: 1, 128>}, {pipeline_mode = #tpu.pipeline_mode<synchronous>, transform_indices = @transform_5, window_bounds = array<i64: 128, 16>}, {pipeline_mode = #tpu.pipeline_mode<synchronous>, transform_indices = @transform_6, window_bounds = array<i64: 1, 16>}, {transform_indices = @transform_7, window_bounds = array<i64: 256, 16>}]} {
    %c0 = arith.constant 0 : index
    %c0_0 = arith.constant 0 : index
    %0 = vector.load %arg1[%c0, %c0_0] : memref<256x256xf32, #tpu.memory_space<vmem>>, vector<256x256xf32>
    %c0_1 = arith.constant 0 : index
    %c0_2 = arith.constant 0 : index
    %1 = vector.load %arg2[%c0_1, %c0_2] : memref<256x256xf32, #tpu.memory_space<vmem>>, vector<256x256xf32>
    %c0_3 = arith.constant 0 : index
    %c0_4 = arith.constant 0 : index
    %2 = vector.load %arg3[%c0_3, %c0_4] : memref<256x128xf32, #tpu.memory_space<vmem>>, vector<256x128xf32>
    %cst = arith.constant dense<0.000000e+00> : vector<256x128xf32>
    %3 = tpu.matmul %0, %2, %cst {dimension_numbers = #tpu.dot_dimension_numbers<[1], [0], [0], [1], [0, 0, 1, 1], [], []>} : vector<256x256xf32>, vector<256x128xf32>, vector<256x128xf32> -> vector<256x128xf32>
    %c0_5 = arith.constant 0 : index
    %c0_6 = arith.constant 0 : index
    %4 = vector.load %arg4[%c0_5, %c0_6] : memref<256x128xf32, #tpu.memory_space<vmem>>, vector<256x128xf32>
    %cst_7 = arith.constant dense<0.000000e+00> : vector<256x128xf32>
    %5 = tpu.matmul %1, %4, %cst_7 {dimension_numbers = #tpu.dot_dimension_numbers<[1], [0], [0], [1], [0, 0, 1, 1], [], []>} : vector<256x256xf32>, vector<256x128xf32>, vector<256x128xf32> -> vector<256x128xf32>
    %6 = arith.addf %3, %5 : vector<256x128xf32>
    %c0_8 = arith.constant 0 : index
    %c0_9 = arith.constant 0 : index
    %7 = vector.load %arg5[%c0_8, %c0_9] : memref<1x128xf32, #tpu.memory_space<vmem>>, vector<1x128xf32>
    %8 = vector.broadcast %7 : vector<1x128xf32> to vector<256x128xf32>
    %9 = arith.addf %6, %8 : vector<256x128xf32>
    %cst_10 = arith.constant 0.000000e+00 : f32
    %10 = vector.broadcast %cst_10 : f32 to vector<256x128xf32>
    %11 = arith.cmpf oge, %9, %10 : vector<256x128xf32>
    %cst_11 = arith.constant 0.00999999977 : f32
    %12 = vector.broadcast %cst_11 : f32 to vector<256x128xf32>
    %13 = arith.mulf %12, %9 : vector<256x128xf32>
    %14 = arith.select %11, %9, %13 : vector<256x128xi1>, vector<256x128xf32>
    %c0_12 = arith.constant 0 : index
    %c0_13 = arith.constant 0 : index
    %15 = vector.load %arg6[%c0_12, %c0_13] : memref<128x16xf32, #tpu.memory_space<vmem>>, vector<128x16xf32>
    %cst_14 = arith.constant dense<0.000000e+00> : vector<256x16xf32>
    %16 = tpu.matmul %14, %15, %cst_14 {dimension_numbers = #tpu.dot_dimension_numbers<[1], [0], [0], [1], [0, 0, 1, 1], [], []>} : vector<256x128xf32>, vector<128x16xf32>, vector<256x16xf32> -> vector<256x16xf32>
    %c0_15 = arith.constant 0 : index
    %c0_16 = arith.constant 0 : index
    %17 = vector.load %arg7[%c0_15, %c0_16] : memref<1x16xf32, #tpu.memory_space<vmem>>, vector<1x16xf32>
    %18 = vector.broadcast %17 : vector<1x16xf32> to vector<256x16xf32>
    %19 = arith.addf %16, %18 : vector<256x16xf32>
    %cst_17 = arith.constant 0.000000e+00 : f32
    %20 = vector.broadcast %cst_17 : f32 to vector<256x16xf32>
    %21 = arith.cmpf oge, %19, %20 : vector<256x16xf32>
    %cst_18 = arith.constant 0.00999999977 : f32
    %22 = vector.broadcast %cst_18 : f32 to vector<256x16xf32>
    %23 = arith.mulf %22, %19 : vector<256x16xf32>
    %24 = arith.select %21, %19, %23 : vector<256x16xi1>, vector<256x16xf32>
    %cst_19 = arith.constant 0.000000e+00 : f32
    %25 = vector.broadcast %cst_19 : f32 to vector<256x16xf32>
    %26 = vector.extract_strided_slice %24 {offsets = [0, 0], sizes = [256, 1], strides = [1, 1]} : vector<256x16xf32> to vector<256x1xf32>
    %27 = vector.extract_strided_slice %1 {offsets = [0, 0], sizes = [256, 16], strides = [1, 1]} : vector<256x256xf32> to vector<256x16xf32>
    %28 = vector.broadcast %26 : vector<256x1xf32> to vector<256x16xf32>
    %29 = arith.mulf %28, %27 : vector<256x16xf32>
    %30 = arith.addf %25, %29 : vector<256x16xf32>
    %31 = vector.extract_strided_slice %24 {offsets = [0, 1], sizes = [256, 1], strides = [1, 1]} : vector<256x16xf32> to vector<256x1xf32>
    %32 = vector.extract_strided_slice %1 {offsets = [0, 16], sizes = [256, 16], strides = [1, 1]} : vector<256x256xf32> to vector<256x16xf32>
    %33 = vector.broadcast %31 : vector<256x1xf32> to vector<256x16xf32>
    %34 = arith.mulf %33, %32 : vector<256x16xf32>
    %35 = arith.addf %30, %34 : vector<256x16xf32>
    %36 = vector.extract_strided_slice %24 {offsets = [0, 2], sizes = [256, 1], strides = [1, 1]} : vector<256x16xf32> to vector<256x1xf32>
    %37 = vector.extract_strided_slice %1 {offsets = [0, 32], sizes = [256, 16], strides = [1, 1]} : vector<256x256xf32> to vector<256x16xf32>
    %38 = vector.broadcast %36 : vector<256x1xf32> to vector<256x16xf32>
    %39 = arith.mulf %38, %37 : vector<256x16xf32>
    %40 = arith.addf %35, %39 : vector<256x16xf32>
    %41 = vector.extract_strided_slice %24 {offsets = [0, 3], sizes = [256, 1], strides = [1, 1]} : vector<256x16xf32> to vector<256x1xf32>
    %42 = vector.extract_strided_slice %1 {offsets = [0, 48], sizes = [256, 16], strides = [1, 1]} : vector<256x256xf32> to vector<256x16xf32>
    %43 = vector.broadcast %41 : vector<256x1xf32> to vector<256x16xf32>
    %44 = arith.mulf %43, %42 : vector<256x16xf32>
    %45 = arith.addf %40, %44 : vector<256x16xf32>
    %46 = vector.extract_strided_slice %24 {offsets = [0, 4], sizes = [256, 1], strides = [1, 1]} : vector<256x16xf32> to vector<256x1xf32>
    %47 = vector.extract_strided_slice %1 {offsets = [0, 64], sizes = [256, 16], strides = [1, 1]} : vector<256x256xf32> to vector<256x16xf32>
    %48 = vector.broadcast %46 : vector<256x1xf32> to vector<256x16xf32>
    %49 = arith.mulf %48, %47 : vector<256x16xf32>
    %50 = arith.addf %45, %49 : vector<256x16xf32>
    %51 = vector.extract_strided_slice %24 {offsets = [0, 5], sizes = [256, 1], strides = [1, 1]} : vector<256x16xf32> to vector<256x1xf32>
    %52 = vector.extract_strided_slice %1 {offsets = [0, 80], sizes = [256, 16], strides = [1, 1]} : vector<256x256xf32> to vector<256x16xf32>
    %53 = vector.broadcast %51 : vector<256x1xf32> to vector<256x16xf32>
    %54 = arith.mulf %53, %52 : vector<256x16xf32>
    %55 = arith.addf %50, %54 : vector<256x16xf32>
    %56 = vector.extract_strided_slice %24 {offsets = [0, 6], sizes = [256, 1], strides = [1, 1]} : vector<256x16xf32> to vector<256x1xf32>
    %57 = vector.extract_strided_slice %1 {offsets = [0, 96], sizes = [256, 16], strides = [1, 1]} : vector<256x256xf32> to vector<256x16xf32>
    %58 = vector.broadcast %56 : vector<256x1xf32> to vector<256x16xf32>
    %59 = arith.mulf %58, %57 : vector<256x16xf32>
    %60 = arith.addf %55, %59 : vector<256x16xf32>
    %61 = vector.extract_strided_slice %24 {offsets = [0, 7], sizes = [256, 1], strides = [1, 1]} : vector<256x16xf32> to vector<256x1xf32>
    %62 = vector.extract_strided_slice %1 {offsets = [0, 112], sizes = [256, 16], strides = [1, 1]} : vector<256x256xf32> to vector<256x16xf32>
    %63 = vector.broadcast %61 : vector<256x1xf32> to vector<256x16xf32>
    %64 = arith.mulf %63, %62 : vector<256x16xf32>
    %65 = arith.addf %60, %64 : vector<256x16xf32>
    %66 = vector.extract_strided_slice %24 {offsets = [0, 8], sizes = [256, 1], strides = [1, 1]} : vector<256x16xf32> to vector<256x1xf32>
    %67 = vector.extract_strided_slice %1 {offsets = [0, 128], sizes = [256, 16], strides = [1, 1]} : vector<256x256xf32> to vector<256x16xf32>
    %68 = vector.broadcast %66 : vector<256x1xf32> to vector<256x16xf32>
    %69 = arith.mulf %68, %67 : vector<256x16xf32>
    %70 = arith.addf %65, %69 : vector<256x16xf32>
    %71 = vector.extract_strided_slice %24 {offsets = [0, 9], sizes = [256, 1], strides = [1, 1]} : vector<256x16xf32> to vector<256x1xf32>
    %72 = vector.extract_strided_slice %1 {offsets = [0, 144], sizes = [256, 16], strides = [1, 1]} : vector<256x256xf32> to vector<256x16xf32>
    %73 = vector.broadcast %71 : vector<256x1xf32> to vector<256x16xf32>
    %74 = arith.mulf %73, %72 : vector<256x16xf32>
    %75 = arith.addf %70, %74 : vector<256x16xf32>
    %76 = vector.extract_strided_slice %24 {offsets = [0, 10], sizes = [256, 1], strides = [1, 1]} : vector<256x16xf32> to vector<256x1xf32>
    %77 = vector.extract_strided_slice %1 {offsets = [0, 160], sizes = [256, 16], strides = [1, 1]} : vector<256x256xf32> to vector<256x16xf32>
    %78 = vector.broadcast %76 : vector<256x1xf32> to vector<256x16xf32>
    %79 = arith.mulf %78, %77 : vector<256x16xf32>
    %80 = arith.addf %75, %79 : vector<256x16xf32>
    %81 = vector.extract_strided_slice %24 {offsets = [0, 11], sizes = [256, 1], strides = [1, 1]} : vector<256x16xf32> to vector<256x1xf32>
    %82 = vector.extract_strided_slice %1 {offsets = [0, 176], sizes = [256, 16], strides = [1, 1]} : vector<256x256xf32> to vector<256x16xf32>
    %83 = vector.broadcast %81 : vector<256x1xf32> to vector<256x16xf32>
    %84 = arith.mulf %83, %82 : vector<256x16xf32>
    %85 = arith.addf %80, %84 : vector<256x16xf32>
    %86 = vector.extract_strided_slice %24 {offsets = [0, 12], sizes = [256, 1], strides = [1, 1]} : vector<256x16xf32> to vector<256x1xf32>
    %87 = vector.extract_strided_slice %1 {offsets = [0, 192], sizes = [256, 16], strides = [1, 1]} : vector<256x256xf32> to vector<256x16xf32>
    %88 = vector.broadcast %86 : vector<256x1xf32> to vector<256x16xf32>
    %89 = arith.mulf %88, %87 : vector<256x16xf32>
    %90 = arith.addf %85, %89 : vector<256x16xf32>
    %91 = vector.extract_strided_slice %24 {offsets = [0, 13], sizes = [256, 1], strides = [1, 1]} : vector<256x16xf32> to vector<256x1xf32>
    %92 = vector.extract_strided_slice %1 {offsets = [0, 208], sizes = [256, 16], strides = [1, 1]} : vector<256x256xf32> to vector<256x16xf32>
    %93 = vector.broadcast %91 : vector<256x1xf32> to vector<256x16xf32>
    %94 = arith.mulf %93, %92 : vector<256x16xf32>
    %95 = arith.addf %90, %94 : vector<256x16xf32>
    %96 = vector.extract_strided_slice %24 {offsets = [0, 14], sizes = [256, 1], strides = [1, 1]} : vector<256x16xf32> to vector<256x1xf32>
    %97 = vector.extract_strided_slice %1 {offsets = [0, 224], sizes = [256, 16], strides = [1, 1]} : vector<256x256xf32> to vector<256x16xf32>
    %98 = vector.broadcast %96 : vector<256x1xf32> to vector<256x16xf32>
    %99 = arith.mulf %98, %97 : vector<256x16xf32>
    %100 = arith.addf %95, %99 : vector<256x16xf32>
    %101 = vector.extract_strided_slice %24 {offsets = [0, 15], sizes = [256, 1], strides = [1, 1]} : vector<256x16xf32> to vector<256x1xf32>
    %102 = vector.extract_strided_slice %1 {offsets = [0, 240], sizes = [256, 16], strides = [1, 1]} : vector<256x256xf32> to vector<256x16xf32>
    %103 = vector.broadcast %101 : vector<256x1xf32> to vector<256x16xf32>
    %104 = arith.mulf %103, %102 : vector<256x16xf32>
    %105 = arith.addf %100, %104 : vector<256x16xf32>
    %cst_20 = arith.constant 6.250000e-02 : f32
    %106 = vector.broadcast %cst_20 : f32 to vector<256x16xf32>
    %107 = arith.mulf %105, %106 : vector<256x16xf32>
    %c0_21 = arith.constant 0 : index
    %c0_22 = arith.constant 0 : index
    %108 = vector.load %arg8[%c0_21, %c0_22] : memref<256x16xf32, #tpu.memory_space<vmem>>, vector<256x16xf32>
    tpu.vector_store %arg8[%c0_21, %c0_22], %107 {strides = array<i32>} : memref<256x16xf32, #tpu.memory_space<vmem>>, vector<256x16xf32>,
    return
  }
  func.func @transform_0(%arg0: i32) -> (i32, i32) {
    %c0_i32 = arith.constant 0 : i32
    %c0_i32_0 = arith.constant 0 : i32
    return %arg0, %c0_i32 : i32, i32
  }
  func.func @transform_1(%arg0: i32) -> (i32, i32) {
    %c0_i32 = arith.constant 0 : i32
    %c0_i32_0 = arith.constant 0 : i32
    return %arg0, %c0_i32 : i32, i32
  }
  func.func @transform_2(%arg0: i32) -> (i32, i32) {
    %c0_i32 = arith.constant 0 : i32
    %c0_i32_0 = arith.constant 0 : i32
    %c0_i32_1 = arith.constant 0 : i32
    return %c0_i32, %c0_i32_0 : i32, i32
  }
  func.func @transform_3(%arg0: i32) -> (i32, i32) {
    %c0_i32 = arith.constant 0 : i32
    %c0_i32_0 = arith.constant 0 : i32
    %c0_i32_1 = arith.constant 0 : i32
    return %c0_i32, %c0_i32_0 : i32, i32
  }
  func.func @transform_4(%arg0: i32) -> (i32, i32) {
    %c0_i32 = arith.constant 0 : i32
    %c0_i32_0 = arith.constant 0 : i32
    %c0_i32_1 = arith.constant 0 : i32
    return %c0_i32, %c0_i32_0 : i32, i32
  }
  func.func @transform_5(%arg0: i32) -> (i32, i32) {
    %c0_i32 = arith.constant 0 : i32
    %c0_i32_0 = arith.constant 0 : i32
    %c0_i32_1 = arith.constant 0 : i32
    return %c0_i32, %c0_i32_0 : i32, i32
  }
  func.func @transform_6(%arg0: i32) -> (i32, i32) {
    %c0_i32 = arith.constant 0 : i32
    %c0_i32_0 = arith.constant 0 : i32
    %c0_i32_1 = arith.constant 0 : i32
    return %c0_i32, %c0_i32_0 : i32, i32
  }
  func.func @transform_7(%arg0: i32) -> (i32, i32) {
    %c0_i32 = arith.constant 0 : i32
    %c0_i32_0 = arith.constant 0 : i32
    return %arg0, %c0_i32 : i32, i32
  }
}

</mosaic_0001>

<llo_original>
// kernel: extractor_attn_forward.1
$region0: #{extractor_attn_forward.1}
  #allocation0 [shape = 'u32[]', space=smem, size = 0x4, offset = 0x4, fixed_abs, tag = 'smem constant byte address 0x4 - core index']
  #allocation1 [shape = 'u32[72,128]{1,0:T(1,128)}', space=vmem, size = 0x9000, scoped, tag = 'internal scratch']
  %s0 = inlined_call_operand.vmem [shape: f32[512,256], index: 0, kind: input, shape index: {}]
  %s1 = inlined_call_operand.vmem [shape: f32[512,256], index: 1, kind: input, shape index: {}]
  %s2 = inlined_call_operand.vmem [shape: f32[256,128], index: 2, kind: input, shape index: {}]
  %s3 = inlined_call_operand.vmem [shape: f32[256,128], index: 3, kind: input, shape index: {}]
  %s4 = inlined_call_operand.vmem [shape: f32[1,128], index: 4, kind: input, shape index: {}]
  %s5 = inlined_call_operand.vmem [shape: f32[128,16], index: 5, kind: input, shape index: {}]
  %s6 = inlined_call_operand.vmem [shape: f32[1,16], index: 6, kind: input, shape index: {}]
  %s7 = inlined_call_operand.vmem [shape: f32[512,16], index: 7, kind: output, shape index: {}]
  %s8 = sld [smem:[#allocation0]]
  $region61: #{extractor_attn_forward.1} parent=0
    _
  %s10 = ssub.s32 1, %s8
  %s11 = scalar_select 0, %s10, %s8
  loop: start=0, step=1, limit=4
  $region2: #{extractor_attn_forward.1} parent=0 // loop_pre_header
    _
  $region3: #{extractor_attn_forward.1} parent=0 // loop_header
    %s13 = sphi 0, %s17
    %p14 = scmp.ge.s32.totalorder %s13, 4
    %s23 = sphi 0, %s25
    %s26 = sphi 0, %s23
    %s27 = sphi 0, %s26
    %s43 = sphi 0, %s27
    %s49 = sphi 0, %s51
    %s52 = sphi 0, %s49
    %s53 = sphi 0, %s52
    %s69 = sphi 0, %s53
    %s73 = sphi 0, %s73
    %s75 = sphi 0, %s73
    %s76 = sphi 0, %s75
    %s90 = sphi 0, %s76
    %s94 = sphi 0, %s94
    %s96 = sphi 0, %s94
    %s97 = sphi 0, %s96
    %s111 = sphi 0, %s97
    %s115 = sphi 0, %s115
    %s117 = sphi 0, %s115
    %s118 = sphi 0, %s117
    %s132 = sphi 0, %s118
    %s136 = sphi 0, %s136
    %s138 = sphi 0, %s136
    %s139 = sphi 0, %s138
    %s153 = sphi 0, %s139
    %s157 = sphi 0, %s157
    %s159 = sphi 0, %s157
    %s160 = sphi 0, %s159
    %s174 = sphi 0, %s160
    %s180 = sphi 0, %s182
    %s183 = sphi 0, %s180
    %s184 = sphi 0, %s183
    %s200 = sphi 0, %s184
  $region4: #{extractor_attn_forward.1} parent=0 // loop_header_branch
    %16 = sbr.rel (%p14) target = $region8
  $region5: #{extractor_attn_forward.1} parent=0 // loop_body
    %s18 = ssub.s32 %s13, 1
    %s19 = ssub.s32 %s13, 2
    %s20 = sadd.s32 %s13, 1
    %s21 = ssub.s32 %s13, %s20
    %p22 = scmp.eq.s32.totalorder %s21, 0
    %s24 = sadd.s32 %s23, 1
    %s25 = scalar_select %p22, %s23, %s24
    %p28 = pneg %p22
    %p29 = scmp.eq.s32.totalorder %s13, 1
    %p30 = por %p28, %p29
    %p31 = scmp.ne.s32.totalorder %s23, %s26
    %p32 = scmp.eq.s32.totalorder %s13, 0
    %p33 = por %p31, %p32
    %p34 = scmp.ne.s32.totalorder %s23, %s26
    %p35 = scmp.eq.s32.totalorder %s18, 1
    %p36 = por %p34, %p35
    %p37 = scmp.ne.s32.totalorder %s26, %s27
    %p38 = scmp.eq.s32.totalorder %s18, 0
    %p39 = por %p37, %p38
    %p40 = scmp.ne.s32.totalorder %s26, %s27
    %p41 = scmp.eq.s32.totalorder %s19, 1
    %p42 = por %p40, %p41
    %p44 = scmp.ne.s32.totalorder %s27, %s43
    %p45 = scmp.eq.s32.totalorder %s19, 0
    %p46 = por %p44, %p45
    %s47 = ssub.s32 %s13, %s20
    %p48 = scmp.eq.s32.totalorder %s47, 0
    %s50 = sadd.s32 %s49, 1
    %s51 = scalar_select %p48, %s49, %s50
    %p54 = pneg %p48
    %p55 = scmp.eq.s32.totalorder %s13, 1
    %p56 = por %p54, %p55
    %p57 = scmp.ne.s32.totalorder %s49, %s52
    %p58 = scmp.eq.s32.totalorder %s13, 0
    %p59 = por %p57, %p58
    %p60 = scmp.ne.s32.totalorder %s49, %s52
    %p61 = scmp.eq.s32.totalorder %s18, 1
    %p62 = por %p60, %p61
    %p63 = scmp.ne.s32.totalorder %s52, %s53
    %p64 = scmp.eq.s32.totalorder %s18, 0
    %p65 = por %p63, %p64
    %p66 = scmp.ne.s32.totalorder %s52, %s53
    %p67 = scmp.eq.s32.totalorder %s19, 1
    %p68 = por %p66, %p67
    %p70 = scmp.ne.s32.totalorder %s53, %s69
    %p71 = scmp.eq.s32.totalorder %s19, 0
    %p72 = por %p70, %p71
    %s74 = sadd.s32 %s73, 1
    %p77 = scmp.eq.s32.totalorder %s13, 1
    %p78 = scmp.ne.s32.totalorder %s73, %s75
    %p79 = scmp.eq.s32.totalorder %s13, 0
    %p80 = por %p78, %p79
    %p81 = scmp.ne.s32.totalorder %s73, %s75
    %p82 = scmp.eq.s32.totalorder %s18, 1
    %p83 = por %p81, %p82
    %p84 = scmp.ne.s32.totalorder %s75, %s76
    %p85 = scmp.eq.s32.totalorder %s18, 0
    %p86 = por %p84, %p85
    %p87 = scmp.ne.s32.totalorder %s75, %s76
    %p88 = scmp.eq.s32.totalorder %s19, 1
    %p89 = por %p87, %p88
    %p91 = scmp.ne.s32.totalorder %s76, %s90
    %p92 = scmp.eq.s32.totalorder %s19, 0
    %p93 = por %p91, %p92
    %s95 = sadd.s32 %s94, 1
    %p98 = scmp.eq.s32.totalorder %s13, 1
    %p99 = scmp.ne.s32.totalorder %s94, %s96
    %p100 = scmp.eq.s32.totalorder %s13, 0
    %p101 = por %p99, %p100
    %p102 = scmp.ne.s32.totalorder %s94, %s96
    %p103 = scmp.eq.s32.totalorder %s18, 1
    %p104 = por %p102, %p103
    %p105 = scmp.ne.s32.totalorder %s96, %s97
    %p106 = scmp.eq.s32.totalorder %s18, 0
    %p107 = por %p105, %p106
    %p108 = scmp.ne.s32.totalorder %s96, %s97
    %p109 = scmp.eq.s32.totalorder %s19, 1
    %p110 = por %p108, %p109
    %p112 = scmp.ne.s32.totalorder %s97, %s111
    %p113 = scmp.eq.s32.totalorder %s19, 0
    %p114 = por %p112, %p113
    %s116 = sadd.s32 %s115, 1
    %p119 = scmp.eq.s32.totalorder %s13, 1
    %p120 = scmp.ne.s32.totalorder %s115, %s117
    %p121 = scmp.eq.s32.totalorder %s13, 0
    %p122 = por %p120, %p121
    %p123 = scmp.ne.s32.totalorder %s115, %s117
    %p124 = scmp.eq.s32.totalorder %s18, 1
    %p125 = por %p123, %p124
    %p126 = scmp.ne.s32.totalorder %s117, %s118
    %p127 = scmp.eq.s32.totalorder %s18, 0
    %p128 = por %p126, %p127
    %p129 = scmp.ne.s32.totalorder %s117, %s118
    %p130 = scmp.eq.s32.totalorder %s19, 1
    %p131 = por %p129, %p130
    %p133 = scmp.ne.s32.totalorder %s118, %s132
    %p134 = scmp.eq.s32.totalorder %s19, 0
    %p135 = por %p133, %p134
    %s137 = sadd.s32 %s136, 1
    %p140 = scmp.eq.s32.totalorder %s13, 1
    %p141 = scmp.ne.s32.totalorder %s136, %s138
    %p142 = scmp.eq.s32.totalorder %s13, 0
    %p143 = por %p141, %p142
    %p144 = scmp.ne.s32.totalorder %s136, %s138
    %p145 = scmp.eq.s32.totalorder %s18, 1
    %p146 = por %p144, %p145
    %p147 = scmp.ne.s32.totalorder %s138, %s139
    %p148 = scmp.eq.s32.totalorder %s18, 0
    %p149 = por %p147, %p148
    %p150 = scmp.ne.s32.totalorder %s138, %s139
    %p151 = scmp.eq.s32.totalorder %s19, 1
    %p152 = por %p150, %p151
    %p154 = scmp.ne.s32.totalorder %s139, %s153
    %p155 = scmp.eq.s32.totalorder %s19, 0
    %p156 = por %p154, %p155
    %s158 = sadd.s32 %s157, 1
    %p161 = scmp.eq.s32.totalorder %s13, 1
    %p162 = scmp.ne.s32.totalorder %s157, %s159
    %p163 = scmp.eq.s32.totalorder %s13, 0
    %p164 = por %p162, %p163
    %p165 = scmp.ne.s32.totalorder %s157, %s159
    %p166 = scmp.eq.s32.totalorder %s18, 1
    %p167 = por %p165, %p166
    %p168 = scmp.ne.s32.totalorder %s159, %s160
    %p169 = scmp.eq.s32.totalorder %s18, 0
    %p170 = por %p168, %p169
    %p171 = scmp.ne.s32.totalorder %s159, %s160
    %p172 = scmp.eq.s32.totalorder %s19, 1
    %p173 = por %p171, %p172
    %p175 = scmp.ne.s32.totalorder %s160, %s174
    %p176 = scmp.eq.s32.totalorder %s19, 0
    %p177 = por %p175, %p176
    %s178 = ssub.s32 %s13, %s20
    %p179 = scmp.eq.s32.totalorder %s178, 0
    %s181 = sadd.s32 %s180, 1
    %s182 = scalar_select %p179, %s180, %s181
    %p185 = pneg %p179
    %p186 = scmp.eq.s32.totalorder %s13, 1
    %p187 = por %p185, %p186
    %p188 = scmp.ne.s32.totalorder %s180, %s183
    %p189 = scmp.eq.s32.totalorder %s13, 0
    %p190 = por %p188, %p189
    %p191 = scmp.ne.s32.totalorder %s180, %s183
    %p192 = scmp.eq.s32.totalorder %s18, 1
    %p193 = por %p191, %p192
    %p194 = scmp.ne.s32.totalorder %s183, %s184
    %p195 = scmp.eq.s32.totalorder %s18, 0
    %p196 = por %p194, %p195
    %p197 = scmp.ne.s32.totalorder %s183, %s184
    %p198 = scmp.eq.s32.totalorder %s19, 1
    %p199 = por %p197, %p198
    %p201 = scmp.ne.s32.totalorder %s184, %s200
    %p202 = scmp.eq.s32.totalorder %s19, 0
    %p203 = por %p201, %p202
    %p204 = scmp.le.s32.totalorder 1, %s13
    %p205 = scmp.lt.s32.totalorder %s13, 3
    %p206 = pnand %p204, %p205
    %p207 = pneg %p206
    // Predicated region
    $region9: #{extractor_attn_forward.1} parent=5 // pred_check
      _
    $region10: #{extractor_attn_forward.1} parent=5 // pred_check_branch
      %209 = sbr.rel (%p206) target = $region12
    $region11: #{extractor_attn_forward.1} parent=5 // pred_region
      %s210 = ssub.s32 %s13, 1
      // Predicated region
      $region13: #{extractor_attn_forward.1} parent=11 // pred_check
        %p211 = pneg %p86
      $region14: #{extractor_attn_forward.1} parent=11 // pred_check_branch
        %213 = sbr.rel (%p211) target = $region16
      $region15: #{extractor_attn_forward.1} parent=11 // pred_region
        _
      $region16: #{extractor_attn_forward.1} parent=11 // pred_fallthru
        _
      // Predicated region
      $region17: #{extractor_attn_forward.1} parent=11 // pred_check
        %p214 = pneg %p107
      $region18: #{extractor_attn_forward.1} parent=11 // pred_check_branch
        %216 = sbr.rel (%p214) target = $region20
      $region19: #{extractor_attn_forward.1} parent=11 // pred_region
        _
      $region20: #{extractor_attn_forward.1} parent=11 // pred_fallthru
        _
      // Predicated region
      $region21: #{extractor_attn_forward.1} parent=11 // pred_check
        %p217 = pneg %p128
      $region22: #{extractor_attn_forward.1} parent=11 // pred_check_branch
        %219 = sbr.rel (%p217) target = $region24
      $region23: #{extractor_attn_forward.1} parent=11 // pred_region
        _
      $region24: #{extractor_attn_forward.1} parent=11 // pred_fallthru
        _
      // Predicated region
      $region25: #{extractor_attn_forward.1} parent=11 // pred_check
        %p220 = pneg %p149
      $region26: #{extractor_attn_forward.1} parent=11 // pred_check_branch
        %222 = sbr.rel (%p220) target = $region28
      $region27: #{extractor_attn_forward.1} parent=11 // pred_region
        _
      $region28: #{extractor_attn_forward.1} parent=11 // pred_fallthru
        _
      // Predicated region
      $region29: #{extractor_attn_forward.1} parent=11 // pred_check
        %p223 = pneg %p170
      $region30: #{extractor_attn_forward.1} parent=11 // pred_check_branch
        %225 = sbr.rel (%p223) target = $region32
      $region31: #{extractor_attn_forward.1} parent=11 // pred_region
        _
      $region32: #{extractor_attn_forward.1} parent=11 // pred_fallthru
        _
    $region12: #{extractor_attn_forward.1} parent=5 // pred_fallthru
      _
    %p226 = scmp.lt.s32.totalorder %s13, 2
    // Predicated region
    $region33: #{extractor_attn_forward.1} parent=5 // pred_check
      %p227 = pneg %p226
    $region34: #{extractor_attn_forward.1} parent=5 // pred_check_branch
      %229 = sbr.rel (%p227) target = $region36
    $region35: #{extractor_attn_forward.1} parent=5 // pred_region
      // Predicated region
      $region37: #{extractor_attn_forward.1} parent=35 // pred_check
        %p230 = pneg %p33
      $region38: #{extractor_attn_forward.1} parent=35 // pred_check_branch
        %232 = sbr.rel (%p230) target = $region40
      $region39: #{extractor_attn_forward.1} parent=35 // pred_region
        %s233 = smul.u32 32, %s13
        %p234 = scmp.lt.s32.totalorder %s233, 63
        %s235 = scalar_select %p234, %s233, 63
        %s236 = smul.addr %s235, 2
        %s237 = smul.addr %s236, 8
        %s238 = scalar_lea.vmem %s0, %s237
        %s239 = smul.u32 32, %s13
      $region40: #{extractor_attn_forward.1} parent=35 // pred_fallthru
        _
      // Predicated region
      $region41: #{extractor_attn_forward.1} parent=35 // pred_check
        %p240 = pneg %p59
      $region42: #{extractor_attn_forward.1} parent=35 // pred_check_branch
        %242 = sbr.rel (%p240) target = $region44
      $region43: #{extractor_attn_forward.1} parent=35 // pred_region
        %s243 = smul.u32 32, %s13
        %p244 = scmp.lt.s32.totalorder %s243, 63
        %s245 = scalar_select %p244, %s243, 63
        %s246 = smul.addr %s245, 2
        %s247 = smul.addr %s246, 8
        %s248 = scalar_lea.vmem %s1, %s247
        %s249 = smul.u32 32, %s13
      $region44: #{extractor_attn_forward.1} parent=35 // pred_fallthru
        _
    $region36: #{extractor_attn_forward.1} parent=5 // pred_fallthru
      _
    %p250 = scmp.le.s32.totalorder 1, %s13
    %p251 = scmp.lt.s32.totalorder %s13, 3
    %p252 = pnand %p250, %p251
    %p253 = pneg %p252
    // Predicated region
    $region45: #{extractor_attn_forward.1} parent=5 // pred_check
      _
    $region46: #{extractor_attn_forward.1} parent=5 // pred_check_branch
      %255 = sbr.rel (%p252) target = $region48
    $region47: #{extractor_attn_forward.1} parent=5 // pred_region
      %s256 = ssub.s32 %s13, 1
      %s257 = smul.u32 32, %s18
      %p258 = scmp.lt.s32.totalorder %s257, 63
      %s259 = scalar_select %p258, %s257, 63
      %s260 = smul.addr %s259, 2
      %s261 = smul.addr %s260, 8
      %s262 = scalar_lea.vmem %s0, %s261
      %p263 = pneg %p39
      %p264 = pneg %p36
      %s265 = smul.u32 32, %s18
      %p266 = scmp.lt.s32.totalorder %s265, 63
      %s267 = scalar_select %p266, %s265, 63
      %s268 = smul.addr %s267, 2
      %s269 = smul.addr %s268, 8
      %s270 = scalar_lea.vmem %s1, %s269
      %p271 = pneg %p65
      %p272 = pneg %p62
      %p273 = pneg %p86
      %p274 = pneg %p83
      %p275 = pneg %p107
      %p276 = pneg %p104
      %p277 = pneg %p128
      %p278 = pneg %p125
      %p279 = pneg %p149
      %p280 = pneg %p146
      %p281 = pneg %p170
      %p282 = pneg %p167
      %p283 = pneg %p196
      %p284 = pneg %p193
      %s285 = smul.u32 32, %s18
      %p286 = scmp.lt.s32.totalorder %s285, 63
      %s287 = scalar_select %p286, %s285, 63
      %s288 = smul.addr %s287, 8
      %s289 = scalar_lea.vmem %s7, %s288
      %s290 = smul.u32 32, %s18
      %p291 = scmp.lt.s32.totalorder %s290, 63
      %s292 = scalar_select %p291, %s290, 63
      %s293 = smul.addr %s292, 2
      %s294 = smul.addr %s293, 8
      %s295 = scalar_lea.vmem %s0, %s294
      %s296 = smul.u32 32, %s18
      %s297 = smul.u32 32, %s18
      %p298 = scmp.lt.s32.totalorder %s297, 63
      %s299 = scalar_select %p298, %s297, 63
      %s300 = smul.addr %s299, 2
      %s301 = smul.addr %s300, 8
      %s302 = scalar_lea.vmem %s1, %s301
      %s303 = smul.u32 32, %s18
      %s304 = smul.u32 32, %s18
      %p305 = scmp.lt.s32.totalorder %s304, 63
      %s306 = scalar_select %p305, %s304, 63
      %s307 = smul.addr %s306, 8
      %s308 = scalar_lea.vmem %s7, %s307
      %s309 = smul.u32 32, %s18
      %v310 = vld [vmem:[%s295] sm:$0xff]
      %v311 = vld [vmem:[%s295 + $0x8] sm:$0xff]
      %v312 = vld [vmem:[%s295 + $0x10] sm:$0xff]
      %v313 = vld [vmem:[%s295 + $0x18] sm:$0xff]
      %v314 = vld [vmem:[%s295 + $0x20] sm:$0xff]
      %v315 = vld [vmem:[%s295 + $0x28] sm:$0xff]
      %v316 = vld [vmem:[%s295 + $0x30] sm:$0xff]
      %v317 = vld [vmem:[%s295 + $0x38] sm:$0xff]
      %v318 = vld [vmem:[%s295 + $0x40] sm:$0xff]
      %v319 = vld [vmem:[%s295 + $0x48] sm:$0xff]
      %v320 = vld [vmem:[%s295 + $0x50] sm:$0xff]
      %v321 = vld [vmem:[%s295 + $0x58] sm:$0xff]
      %v322 = vld [vmem:[%s295 + $0x60] sm:$0xff]
      %v323 = vld [vmem:[%s295 + $0x68] sm:$0xff]
      %v324 = vld [vmem:[%s295 + $0x70] sm:$0xff]
      %v325 = vld [vmem:[%s295 + $0x78] sm:$0xff]
      %v326 = vld [vmem:[%s295 + $0x80] sm:$0xff]
      %v327 = vld [vmem:[%s295 + $0x88] sm:$0xff]
      %v328 = vld [vmem:[%s295 + $0x90] sm:$0xff]
      %v329 = vld [vmem:[%s295 + $0x98] sm:$0xff]
      %v330 = vld [vmem:[%s295 + $0xa0] sm:$0xff]
      %v331 = vld [vmem:[%s295 + $0xa8] sm:$0xff]
      %v332 = vld [vmem:[%s295 + $0xb0] sm:$0xff]
      %v333 = vld [vmem:[%s295 + $0xb8] sm:$0xff]
      %v334 = vld [vmem:[%s295 + $0xc0] sm:$0xff]
      %v335 = vld [vmem:[%s295 + $0xc8] sm:$0xff]
      %v336 = vld [vmem:[%s295 + $0xd0] sm:$0xff]
      %v337 = vld [vmem:[%s295 + $0xd8] sm:$0xff]
      %v338 = vld [vmem:[%s295 + $0xe0] sm:$0xff]
      %v339 = vld [vmem:[%s295 + $0xe8] sm:$0xff]
      %v340 = vld [vmem:[%s295 + $0xf0] sm:$0xff]
      %v341 = vld [vmem:[%s295 + $0xf8] sm:$0xff]
      %v342 = vld [vmem:[%s295 + $0x100] sm:$0xff]
      %v343 = vld [vmem:[%s295 + $0x108] sm:$0xff]
      %v344 = vld [vmem:[%s295 + $0x110] sm:$0xff]
      %v345 = vld [vmem:[%s295 + $0x118] sm:$0xff]
      %v346 = vld [vmem:[%s295 + $0x120] sm:$0xff]
      %v347 = vld [vmem:[%s295 + $0x128] sm:$0xff]
      %v348 = vld [vmem:[%s295 + $0x130] sm:$0xff]
      %v349 = vld [vmem:[%s295 + $0x138] sm:$0xff]
      %v350 = vld [vmem:[%s295 + $0x140] sm:$0xff]
      %v351 = vld [vmem:[%s295 + $0x148] sm:$0xff]
      %v352 = vld [vmem:[%s295 + $0x150] sm:$0xff]
      %v353 = vld [vmem:[%s295 + $0x158] sm:$0xff]
      %v354 = vld [vmem:[%s295 + $0x160] sm:$0xff]
      %v355 = vld [vmem:[%s295 + $0x168] sm:$0xff]
      %v356 = vld [vmem:[%s295 + $0x170] sm:$0xff]
      %v357 = vld [vmem:[%s295 + $0x178] sm:$0xff]
      %v358 = vld [vmem:[%s295 + $0x180] sm:$0xff]
      %v359 = vld [vmem:[%s295 + $0x188] sm:$0xff]
      %v360 = vld [vmem:[%s295 + $0x190] sm:$0xff]
      %v361 = vld [vmem:[%s295 + $0x198] sm:$0xff]
      %v362 = vld [vmem:[%s295 + $0x1a0] sm:$0xff]
      %v363 = vld [vmem:[%s295 + $0x1a8] sm:$0xff]
      %v364 = vld [vmem:[%s295 + $0x1b0] sm:$0xff]
      %v365 = vld [vmem:[%s295 + $0x1b8] sm:$0xff]
      %v366 = vld [vmem:[%s295 + $0x1c0] sm:$0xff]
      %v367 = vld [vmem:[%s295 + $0x1c8] sm:$0xff]
      %v368 = vld [vmem:[%s295 + $0x1d0] sm:$0xff]
      %v369 = vld [vmem:[%s295 + $0x1d8] sm:$0xff]
      %v370 = vld [vmem:[%s295 + $0x1e0] sm:$0xff]
      %v371 = vld [vmem:[%s295 + $0x1e8] sm:$0xff]
      %v372 = vld [vmem:[%s295 + $0x1f0] sm:$0xff]
      %v373 = vld [vmem:[%s295 + $0x1f8] sm:$0xff]
      %v374 = vld [vmem:[%s302] sm:$0xff]
      %v375 = vld [vmem:[%s302 + $0x8] sm:$0xff]
      %v376 = vld [vmem:[%s302 + $0x10] sm:$0xff]
      %v377 = vld [vmem:[%s302 + $0x18] sm:$0xff]
      %v378 = vld [vmem:[%s302 + $0x20] sm:$0xff]
      %v379 = vld [vmem:[%s302 + $0x28] sm:$0xff]
      %v380 = vld [vmem:[%s302 + $0x30] sm:$0xff]
      %v381 = vld [vmem:[%s302 + $0x38] sm:$0xff]
      %v382 = vld [vmem:[%s302 + $0x40] sm:$0xff]
      %v383 = vld [vmem:[%s302 + $0x48] sm:$0xff]
      %v384 = vld [vmem:[%s302 + $0x50] sm:$0xff]
      %v385 = vld [vmem:[%s302 + $0x58] sm:$0xff]
      %v386 = vld [vmem:[%s302 + $0x60] sm:$0xff]
      %v387 = vld [vmem:[%s302 + $0x68] sm:$0xff]
      %v388 = vld [vmem:[%s302 + $0x70] sm:$0xff]
      %v389 = vld [vmem:[%s302 + $0x78] sm:$0xff]
      %v390 = vld [vmem:[%s302 + $0x80] sm:$0xff]
      %v391 = vld [vmem:[%s302 + $0x88] sm:$0xff]
      %v392 = vld [vmem:[%s302 + $0x90] sm:$0xff]
      %v393 = vld [vmem:[%s302 + $0x98] sm:$0xff]
      %v394 = vld [vmem:[%s302 + $0xa0] sm:$0xff]
      %v395 = vld [vmem:[%s302 + $0xa8] sm:$0xff]
      %v396 = vld [vmem:[%s302 + $0xb0] sm:$0xff]
      %v397 = vld [vmem:[%s302 + $0xb8] sm:$0xff]
      %v398 = vld [vmem:[%s302 + $0xc0] sm:$0xff]
      %v399 = vld [vmem:[%s302 + $0xc8] sm:$0xff]
      %v400 = vld [vmem:[%s302 + $0xd0] sm:$0xff]
      %v401 = vld [vmem:[%s302 + $0xd8] sm:$0xff]
      %v402 = vld [vmem:[%s302 + $0xe0] sm:$0xff]
      %v403 = vld [vmem:[%s302 + $0xe8] sm:$0xff]
      %v404 = vld [vmem:[%s302 + $0xf0] sm:$0xff]
      %v405 = vld [vmem:[%s302 + $0xf8] sm:$0xff]
      %v406 = vld [vmem:[%s302 + $0x100] sm:$0xff]
      %v407 = vld [vmem:[%s302 + $0x108] sm:$0xff]
      %v408 = vld [vmem:[%s302 + $0x110] sm:$0xff]
      %v409 = vld [vmem:[%s302 + $0x118] sm:$0xff]
      %v410 = vld [vmem:[%s302 + $0x120] sm:$0xff]
      %v411 = vld [vmem:[%s302 + $0x128] sm:$0xff]
      %v412 = vld [vmem:[%s302 + $0x130] sm:$0xff]
      %v413 = vld [vmem:[%s302 + $0x138] sm:$0xff]
      %v414 = vld [vmem:[%s302 + $0x140] sm:$0xff]
      %v415 = vld [vmem:[%s302 + $0x148] sm:$0xff]
      %v416 = vld [vmem:[%s302 + $0x150] sm:$0xff]
      %v417 = vld [vmem:[%s302 + $0x158] sm:$0xff]
      %v418 = vld [vmem:[%s302 + $0x160] sm:$0xff]
      %v419 = vld [vmem:[%s302 + $0x168] sm:$0xff]
      %v420 = vld [vmem:[%s302 + $0x170] sm:$0xff]
      %v421 = vld [vmem:[%s302 + $0x178] sm:$0xff]
      %v422 = vld [vmem:[%s302 + $0x180] sm:$0xff]
      %v423 = vld [vmem:[%s302 + $0x188] sm:$0xff]
      %v424 = vld [vmem:[%s302 + $0x190] sm:$0xff]
      %v425 = vld [vmem:[%s302 + $0x198] sm:$0xff]
      %v426 = vld [vmem:[%s302 + $0x1a0] sm:$0xff]
      %v427 = vld [vmem:[%s302 + $0x1a8] sm:$0xff]
      %v428 = vld [vmem:[%s302 + $0x1b0] sm:$0xff]
      %v429 = vld [vmem:[%s302 + $0x1b8] sm:$0xff]
      %v430 = vld [vmem:[%s302 + $0x1c0] sm:$0xff]
      %v431 = vld [vmem:[%s302 + $0x1c8] sm:$0xff]
      %v432 = vld [vmem:[%s302 + $0x1d0] sm:$0xff]
      %v433 = vld [vmem:[%s302 + $0x1d8] sm:$0xff]
      %v434 = vld [vmem:[%s302 + $0x1e0] sm:$0xff]
      %v435 = vld [vmem:[%s302 + $0x1e8] sm:$0xff]
      %v436 = vld [vmem:[%s302 + $0x1f0] sm:$0xff]
      %v437 = vld [vmem:[%s302 + $0x1f8] sm:$0xff]
      %v438 = vld [vmem:[%s2] sm:$0xff]
      %v439 = vld [vmem:[%s2 + $0x8] sm:$0xff]
      %v440 = vld [vmem:[%s2 + $0x10] sm:$0xff]
      %v441 = vld [vmem:[%s2 + $0x18] sm:$0xff]
      %v442 = vld [vmem:[%s2 + $0x20] sm:$0xff]
      %v443 = vld [vmem:[%s2 + $0x28] sm:$0xff]
      %v444 = vld [vmem:[%s2 + $0x30] sm:$0xff]
      %v445 = vld [vmem:[%s2 + $0x38] sm:$0xff]
      %v446 = vld [vmem:[%s2 + $0x40] sm:$0xff]
      %v447 = vld [vmem:[%s2 + $0x48] sm:$0xff]
      %v448 = vld [vmem:[%s2 + $0x50] sm:$0xff]
      %v449 = vld [vmem:[%s2 + $0x58] sm:$0xff]
      %v450 = vld [vmem:[%s2 + $0x60] sm:$0xff]
      %v451 = vld [vmem:[%s2 + $0x68] sm:$0xff]
      %v452 = vld [vmem:[%s2 + $0x70] sm:$0xff]
      %v453 = vld [vmem:[%s2 + $0x78] sm:$0xff]
      %v454 = vld [vmem:[%s2 + $0x80] sm:$0xff]
      %v455 = vld [vmem:[%s2 + $0x88] sm:$0xff]
      %v456 = vld [vmem:[%s2 + $0x90] sm:$0xff]
      %v457 = vld [vmem:[%s2 + $0x98] sm:$0xff]
      %v458 = vld [vmem:[%s2 + $0xa0] sm:$0xff]
      %v459 = vld [vmem:[%s2 + $0xa8] sm:$0xff]
      %v460 = vld [vmem:[%s2 + $0xb0] sm:$0xff]
      %v461 = vld [vmem:[%s2 + $0xb8] sm:$0xff]
      %v462 = vld [vmem:[%s2 + $0xc0] sm:$0xff]
      %v463 = vld [vmem:[%s2 + $0xc8] sm:$0xff]
      %v464 = vld [vmem:[%s2 + $0xd0] sm:$0xff]
      %v465 = vld [vmem:[%s2 + $0xd8] sm:$0xff]
      %v466 = vld [vmem:[%s2 + $0xe0] sm:$0xff]
      %v467 = vld [vmem:[%s2 + $0xe8] sm:$0xff]
      %v468 = vld [vmem:[%s2 + $0xf0] sm:$0xff]
      %v469 = vld [vmem:[%s2 + $0xf8] sm:$0xff]
      %v470 = vld [vmem:[%s3] sm:$0xff]
      %v471 = vld [vmem:[%s3 + $0x8] sm:$0xff]
      %v472 = vld [vmem:[%s3 + $0x10] sm:$0xff]
      %v473 = vld [vmem:[%s3 + $0x18] sm:$0xff]
      %v474 = vld [vmem:[%s3 + $0x20] sm:$0xff]
      %v475 = vld [vmem:[%s3 + $0x28] sm:$0xff]
      %v476 = vld [vmem:[%s3 + $0x30] sm:$0xff]
      %v477 = vld [vmem:[%s3 + $0x38] sm:$0xff]
      %v478 = vld [vmem:[%s3 + $0x40] sm:$0xff]
      %v479 = vld [vmem:[%s3 + $0x48] sm:$0xff]
      %v480 = vld [vmem:[%s3 + $0x50] sm:$0xff]
      %v481 = vld [vmem:[%s3 + $0x58] sm:$0xff]
      %v482 = vld [vmem:[%s3 + $0x60] sm:$0xff]
      %v483 = vld [vmem:[%s3 + $0x68] sm:$0xff]
      %v484 = vld [vmem:[%s3 + $0x70] sm:$0xff]
      %v485 = vld [vmem:[%s3 + $0x78] sm:$0xff]
      %v486 = vld [vmem:[%s3 + $0x80] sm:$0xff]
      %v487 = vld [vmem:[%s3 + $0x88] sm:$0xff]
      %v488 = vld [vmem:[%s3 + $0x90] sm:$0xff]
      %v489 = vld [vmem:[%s3 + $0x98] sm:$0xff]
      %v490 = vld [vmem:[%s3 + $0xa0] sm:$0xff]
      %v491 = vld [vmem:[%s3 + $0xa8] sm:$0xff]
      %v492 = vld [vmem:[%s3 + $0xb0] sm:$0xff]
      %v493 = vld [vmem:[%s3 + $0xb8] sm:$0xff]
      %v494 = vld [vmem:[%s3 + $0xc0] sm:$0xff]
      %v495 = vld [vmem:[%s3 + $0xc8] sm:$0xff]
      %v496 = vld [vmem:[%s3 + $0xd0] sm:$0xff]
      %v497 = vld [vmem:[%s3 + $0xd8] sm:$0xff]
      %v498 = vld [vmem:[%s3 + $0xe0] sm:$0xff]
      %v499 = vld [vmem:[%s3 + $0xe8] sm:$0xff]
      %v500 = vld [vmem:[%s3 + $0xf0] sm:$0xff]
      %v501 = vld [vmem:[%s3 + $0xf8] sm:$0xff]
      %502 = vmatpush.msra.mxu0 %v485
      %503 = vmatpush.msra.mxu0 %v484
      %504 = vmatpush.msra.mxu0 %v483
      %505 = vmatpush.msra.mxu0 %v482
      %506 = vmatpush.msra.mxu0 %v481
      %507 = vmatpush.msra.mxu0 %v480
      %508 = vmatpush.msra.mxu0 %v479
      %509 = vmatpush.msra.mxu0 %v478
      %510 = vmatpush.msra.mxu0 %v477
      %511 = vmatpush.msra.mxu0 %v476
      %512 = vmatpush.msra.mxu0 %v475
      %513 = vmatpush.msra.mxu0 %v474
      %514 = vmatpush.msra.mxu0 %v473
      %515 = vmatpush.msra.mxu0 %v472
      %516 = vmatpush.msra.mxu0 %v471
      %517 = vmatpush.msra.mxu0 %v470
      %518 = vmatmul.f32.gmra.mxu0 %v374
      %v519 = vpop.f32.mrf.mxu0
      %v520 = vadd.f32 0.0, %v519
      %521 = vmatmul.f32.gmra.mxu0 %v376
      %v522 = vpop.f32.mrf.mxu0
      %v523 = vadd.f32 0.0, %v522
      %524 = vmatmul.f32.gmra.mxu0 %v378
      %v525 = vpop.f32.mrf.mxu0
      %v526 = vadd.f32 0.0, %v525
      %527 = vmatmul.f32.gmra.mxu0 %v380
      %v528 = vpop.f32.mrf.mxu0
      %v529 = vadd.f32 0.0, %v528
      %530 = vmatmul.f32.gmra.mxu0 %v382
      %v531 = vpop.f32.mrf.mxu0
      %v532 = vadd.f32 0.0, %v531
      %533 = vmatmul.f32.gmra.mxu0 %v384
      %v534 = vpop.f32.mrf.mxu0
      %v535 = vadd.f32 0.0, %v534
      %536 = vmatmul.f32.gmra.mxu0 %v386
      %v537 = vpop.f32.mrf.mxu0
      %v538 = vadd.f32 0.0, %v537
      %539 = vmatmul.f32.gmra.mxu0 %v388
      %v540 = vpop.f32.mrf.mxu0
      %v541 = vadd.f32 0.0, %v540
      %542 = vmatmul.f32.gmra.mxu0 %v390
      %v543 = vpop.f32.mrf.mxu0
      %v544 = vadd.f32 0.0, %v543
      %545 = vmatmul.f32.gmra.mxu0 %v392
      %v546 = vpop.f32.mrf.mxu0
      %v547 = vadd.f32 0.0, %v546
      %548 = vmatmul.f32.gmra.mxu0 %v394
      %v549 = vpop.f32.mrf.mxu0
      %v550 = vadd.f32 0.0, %v549
      %551 = vmatmul.f32.gmra.mxu0 %v396
      %v552 = vpop.f32.mrf.mxu0
      %v553 = vadd.f32 0.0, %v552
      %554 = vmatmul.f32.gmra.mxu0 %v398
      %v555 = vpop.f32.mrf.mxu0
      %v556 = vadd.f32 0.0, %v555
      %557 = vmatmul.f32.gmra.mxu0 %v400
      %v558 = vpop.f32.mrf.mxu0
      %v559 = vadd.f32 0.0, %v558
      %560 = vmatmul.f32.gmra.mxu0 %v402
      %v561 = vpop.f32.mrf.mxu0
      %v562 = vadd.f32 0.0, %v561
      %563 = vmatmul.f32.gmra.mxu0 %v404
      %v564 = vpop.f32.mrf.mxu0
      %v565 = vadd.f32 0.0, %v564
      %566 = vmatmul.f32.gmra.mxu0 %v406
      %v567 = vpop.f32.mrf.mxu0
      %v568 = vadd.f32 0.0, %v567
      %569 = vmatmul.f32.gmra.mxu0 %v408
      %v570 = vpop.f32.mrf.mxu0
      %v571 = vadd.f32 0.0, %v570
      %572 = vmatmul.f32.gmra.mxu0 %v410
      %v573 = vpop.f32.mrf.mxu0
      %v574 = vadd.f32 0.0, %v573
      %575 = vmatmul.f32.gmra.mxu0 %v412
      %v576 = vpop.f32.mrf.mxu0
      %v577 = vadd.f32 0.0, %v576
      %578 = vmatmul.f32.gmra.mxu0 %v414
      %v579 = vpop.f32.mrf.mxu0
      %v580 = vadd.f32 0.0, %v579
      %581 = vmatmul.f32.gmra.mxu0 %v416
      %v582 = vpop.f32.mrf.mxu0
      %v583 = vadd.f32 0.0, %v582
      %584 = vmatmul.f32.gmra.mxu0 %v418
      %v585 = vpop.f32.mrf.mxu0
      %v586 = vadd.f32 0.0, %v585
      %587 = vmatmul.f32.gmra.mxu0 %v420
      %v588 = vpop.f32.mrf.mxu0
      %v589 = vadd.f32 0.0, %v588
      %590 = vmatmul.f32.gmra.mxu0 %v422
      %v591 = vpop.f32.mrf.mxu0
      %v592 = vadd.f32 0.0, %v591
      %593 = vmatmul.f32.gmra.mxu0 %v424
      %v594 = vpop.f32.mrf.mxu0
      %v595 = vadd.f32 0.0, %v594
      %596 = vmatmul.f32.gmra.mxu0 %v426
      %v597 = vpop.f32.mrf.mxu0
      %v598 = vadd.f32 0.0, %v597
      %599 = vmatmul.f32.gmra.mxu0 %v428
      %v600 = vpop.f32.mrf.mxu0
      %v601 = vadd.f32 0.0, %v600
      %602 = vmatmul.f32.gmra.mxu0 %v430
      %v603 = vpop.f32.mrf.mxu0
      %v604 = vadd.f32 0.0, %v603
      %605 = vmatmul.f32.gmra.mxu0 %v432
      %v606 = vpop.f32.mrf.mxu0
      %v607 = vadd.f32 0.0, %v606
      %608 = vmatmul.f32.gmra.mxu0 %v434
      %v609 = vpop.f32.mrf.mxu0
      %v610 = vadd.f32 0.0, %v609
      %611 = vmatmul.f32.gmra.mxu0 %v436
      %v612 = vpop.f32.mrf.mxu0
      %v613 = vadd.f32 0.0, %v612
      %614 = vdwg.mxu0
      %615 = vmatpush.msra.mxu0 %v501
      %616 = vmatpush.msra.mxu0 %v500
      %617 = vmatpush.msra.mxu0 %v499
      %618 = vmatpush.msra.mxu0 %v498
      %619 = vmatpush.msra.mxu0 %v497
      %620 = vmatpush.msra.mxu0 %v496
      %621 = vmatpush.msra.mxu0 %v495
      %622 = vmatpush.msra.mxu0 %v494
      %623 = vmatpush.msra.mxu0 %v493
      %624 = vmatpush.msra.mxu0 %v492
      %625 = vmatpush.msra.mxu0 %v491
      %626 = vmatpush.msra.mxu0 %v490
      %627 = vmatpush.msra.mxu0 %v489
      %628 = vmatpush.msra.mxu0 %v488
      %629 = vmatpush.msra.mxu0 %v487
      %630 = vmatpush.msra.mxu0 %v486
      %631 = vmatmul.f32.gmra.mxu0 %v375
      %v632 = vpop.f32.mrf.mxu0
      %v633 = vadd.f32 %v520, %v632
      %634 = vmatmul.f32.gmra.mxu0 %v377
      %v635 = vpop.f32.mrf.mxu0
      %v636 = vadd.f32 %v523, %v635
      %637 = vmatmul.f32.gmra.mxu0 %v379
      %v638 = vpop.f32.mrf.mxu0
      %v639 = vadd.f32 %v526, %v638
      %640 = vmatmul.f32.gmra.mxu0 %v381
      %v641 = vpop.f32.mrf.mxu0
      %v642 = vadd.f32 %v529, %v641
      %643 = vmatmul.f32.gmra.mxu0 %v383
      %v644 = vpop.f32.mrf.mxu0
      %v645 = vadd.f32 %v532, %v644
      %646 = vmatmul.f32.gmra.mxu0 %v385
      %v647 = vpop.f32.mrf.mxu0
      %v648 = vadd.f32 %v535, %v647
      %649 = vmatmul.f32.gmra.mxu0 %v387
      %v650 = vpop.f32.mrf.mxu0
      %v651 = vadd.f32 %v538, %v650
      %652 = vmatmul.f32.gmra.mxu0 %v389
      %v653 = vpop.f32.mrf.mxu0
      %v654 = vadd.f32 %v541, %v653
      %655 = vmatmul.f32.gmra.mxu0 %v391
      %v656 = vpop.f32.mrf.mxu0
      %v657 = vadd.f32 %v544, %v656
      %658 = vmatmul.f32.gmra.mxu0 %v393
      %v659 = vpop.f32.mrf.mxu0
      %v660 = vadd.f32 %v547, %v659
      %661 = vmatmul.f32.gmra.mxu0 %v395
      %v662 = vpop.f32.mrf.mxu0
      %v663 = vadd.f32 %v550, %v662
      %664 = vmatmul.f32.gmra.mxu0 %v397
      %v665 = vpop.f32.mrf.mxu0
      %v666 = vadd.f32 %v553, %v665
      %667 = vmatmul.f32.gmra.mxu0 %v399
      %v668 = vpop.f32.mrf.mxu0
      %v669 = vadd.f32 %v556, %v668
      %670 = vmatmul.f32.gmra.mxu0 %v401
      %v671 = vpop.f32.mrf.mxu0
      %v672 = vadd.f32 %v559, %v671
      %673 = vmatmul.f32.gmra.mxu0 %v403
      %v674 = vpop.f32.mrf.mxu0
      %v675 = vadd.f32 %v562, %v674
      %676 = vmatmul.f32.gmra.mxu0 %v405
      %v677 = vpop.f32.mrf.mxu0
      %v678 = vadd.f32 %v565, %v677
      %679 = vmatmul.f32.gmra.mxu0 %v407
      %v680 = vpop.f32.mrf.mxu0
      %v681 = vadd.f32 %v568, %v680
      %682 = vmatmul.f32.gmra.mxu0 %v409
      %v683 = vpop.f32.mrf.mxu0
      %v684 = vadd.f32 %v571, %v683
      %685 = vmatmul.f32.gmra.mxu0 %v411
      %v686 = vpop.f32.mrf.mxu0
      %v687 = vadd.f32 %v574, %v686
      %688 = vmatmul.f32.gmra.mxu0 %v413
      %v689 = vpop.f32.mrf.mxu0
      %v690 = vadd.f32 %v577, %v689
      %691 = vmatmul.f32.gmra.mxu0 %v415
      %v692 = vpop.f32.mrf.mxu0
      %v693 = vadd.f32 %v580, %v692
      %694 = vmatmul.f32.gmra.mxu0 %v417
      %v695 = vpop.f32.mrf.mxu0
      %v696 = vadd.f32 %v583, %v695
      %697 = vmatmul.f32.gmra.mxu0 %v419
      %v698 = vpop.f32.mrf.mxu0
      %v699 = vadd.f32 %v586, %v698
      %700 = vmatmul.f32.gmra.mxu0 %v421
      %v701 = vpop.f32.mrf.mxu0
      %v702 = vadd.f32 %v589, %v701
      %703 = vmatmul.f32.gmra.mxu0 %v423
      %v704 = vpop.f32.mrf.mxu0
      %v705 = vadd.f32 %v592, %v704
      %706 = vmatmul.f32.gmra.mxu0 %v425
      %v707 = vpop.f32.mrf.mxu0
      %v708 = vadd.f32 %v595, %v707
      %709 = vmatmul.f32.gmra.mxu0 %v427
      %v710 = vpop.f32.mrf.mxu0
      %v711 = vadd.f32 %v598, %v710
      %712 = vmatmul.f32.gmra.mxu0 %v429
      %v713 = vpop.f32.mrf.mxu0
      %v714 = vadd.f32 %v601, %v713
      %715 = vmatmul.f32.gmra.mxu0 %v431
      %v716 = vpop.f32.mrf.mxu0
      %v717 = vadd.f32 %v604, %v716
      %718 = vmatmul.f32.gmra.mxu0 %v433
      %v719 = vpop.f32.mrf.mxu0
      %v720 = vadd.f32 %v607, %v719
      %721 = vmatmul.f32.gmra.mxu0 %v435
      %v722 = vpop.f32.mrf.mxu0
      %v723 = vadd.f32 %v610, %v722
      %724 = vmatmul.f32.gmra.mxu0 %v437
      %v725 = vpop.f32.mrf.mxu0
      %v726 = vadd.f32 %v613, %v725
      %727 = vdwg.mxu0
      %728 = vmatpush.msra.mxu0 %v453
      %729 = vmatpush.msra.mxu0 %v452
      %730 = vmatpush.msra.mxu0 %v451
      %731 = vmatpush.msra.mxu0 %v450
      %732 = vmatpush.msra.mxu0 %v449
      %733 = vmatpush.msra.mxu0 %v448
      %734 = vmatpush.msra.mxu0 %v447
      %735 = vmatpush.msra.mxu0 %v446
      %736 = vmatpush.msra.mxu0 %v445
      %737 = vmatpush.msra.mxu0 %v444
      %738 = vmatpush.msra.mxu0 %v443
      %739 = vmatpush.msra.mxu0 %v442
      %740 = vmatpush.msra.mxu0 %v441
      %741 = vmatpush.msra.mxu0 %v440
      %742 = vmatpush.msra.mxu0 %v439
      %743 = vmatpush.msra.mxu0 %v438
      %744 = vmatmul.f32.gmra.mxu0 %v310
      %v745 = vpop.f32.mrf.mxu0
      %v746 = vadd.f32 %v633, %v745
      %747 = vmatmul.f32.gmra.mxu0 %v312
      %v748 = vpop.f32.mrf.mxu0
      %v749 = vadd.f32 %v636, %v748
      %750 = vmatmul.f32.gmra.mxu0 %v314
      %v751 = vpop.f32.mrf.mxu0
      %v752 = vadd.f32 %v639, %v751
      %753 = vmatmul.f32.gmra.mxu0 %v316
      %v754 = vpop.f32.mrf.mxu0
      %v755 = vadd.f32 %v642, %v754
      %756 = vmatmul.f32.gmra.mxu0 %v318
      %v757 = vpop.f32.mrf.mxu0
      %v758 = vadd.f32 %v645, %v757
      %759 = vmatmul.f32.gmra.mxu0 %v320
      %v760 = vpop.f32.mrf.mxu0
      %v761 = vadd.f32 %v648, %v760
      %762 = vmatmul.f32.gmra.mxu0 %v322
      %v763 = vpop.f32.mrf.mxu0
      %v764 = vadd.f32 %v651, %v763
      %765 = vmatmul.f32.gmra.mxu0 %v324
      %v766 = vpop.f32.mrf.mxu0
      %v767 = vadd.f32 %v654, %v766
      %768 = vmatmul.f32.gmra.mxu0 %v326
      %v769 = vpop.f32.mrf.mxu0
      %v770 = vadd.f32 %v657, %v769
      %771 = vmatmul.f32.gmra.mxu0 %v328
      %v772 = vpop.f32.mrf.mxu0
      %v773 = vadd.f32 %v660, %v772
      %774 = vmatmul.f32.gmra.mxu0 %v330
      %v775 = vpop.f32.mrf.mxu0
      %v776 = vadd.f32 %v663, %v775
      %777 = vmatmul.f32.gmra.mxu0 %v332
      %v778 = vpop.f32.mrf.mxu0
      %v779 = vadd.f32 %v666, %v778
      %780 = vmatmul.f32.gmra.mxu0 %v334
      %v781 = vpop.f32.mrf.mxu0
      %v782 = vadd.f32 %v669, %v781
      %783 = vmatmul.f32.gmra.mxu0 %v336
      %v784 = vpop.f32.mrf.mxu0
      %v785 = vadd.f32 %v672, %v784
      %786 = vmatmul.f32.gmra.mxu0 %v338
      %v787 = vpop.f32.mrf.mxu0
      %v788 = vadd.f32 %v675, %v787
      %789 = vmatmul.f32.gmra.mxu0 %v340
      %v790 = vpop.f32.mrf.mxu0
      %v791 = vadd.f32 %v678, %v790
      %792 = vmatmul.f32.gmra.mxu0 %v342
      %v793 = vpop.f32.mrf.mxu0
      %v794 = vadd.f32 %v681, %v793
      %795 = vmatmul.f32.gmra.mxu0 %v344
      %v796 = vpop.f32.mrf.mxu0
      %v797 = vadd.f32 %v684, %v796
      %798 = vmatmul.f32.gmra.mxu0 %v346
      %v799 = vpop.f32.mrf.mxu0
      %v800 = vadd.f32 %v687, %v799
      %801 = vmatmul.f32.gmra.mxu0 %v348
      %v802 = vpop.f32.mrf.mxu0
      %v803 = vadd.f32 %v690, %v802
      %804 = vmatmul.f32.gmra.mxu0 %v350
      %v805 = vpop.f32.mrf.mxu0
      %v806 = vadd.f32 %v693, %v805
      %807 = vmatmul.f32.gmra.mxu0 %v352
      %v808 = vpop.f32.mrf.mxu0
      %v809 = vadd.f32 %v696, %v808
      %810 = vmatmul.f32.gmra.mxu0 %v354
      %v811 = vpop.f32.mrf.mxu0
      %v812 = vadd.f32 %v699, %v811
      %813 = vmatmul.f32.gmra.mxu0 %v356
      %v814 = vpop.f32.mrf.mxu0
      %v815 = vadd.f32 %v702, %v814
      %816 = vmatmul.f32.gmra.mxu0 %v358
      %v817 = vpop.f32.mrf.mxu0
      %v818 = vadd.f32 %v705, %v817
      %819 = vmatmul.f32.gmra.mxu0 %v360
      %v820 = vpop.f32.mrf.mxu0
      %v821 = vadd.f32 %v708, %v820
      %822 = vmatmul.f32.gmra.mxu0 %v362
      %v823 = vpop.f32.mrf.mxu0
      %v824 = vadd.f32 %v711, %v823
      %825 = vmatmul.f32.gmra.mxu0 %v364
      %v826 = vpop.f32.mrf.mxu0
      %v827 = vadd.f32 %v714, %v826
      %828 = vmatmul.f32.gmra.mxu0 %v366
      %v829 = vpop.f32.mrf.mxu0
      %v830 = vadd.f32 %v717, %v829
      %831 = vmatmul.f32.gmra.mxu0 %v368
      %v832 = vpop.f32.mrf.mxu0
      %v833 = vadd.f32 %v720, %v832
      %834 = vmatmul.f32.gmra.mxu0 %v370
      %v835 = vpop.f32.mrf.mxu0
      %v836 = vadd.f32 %v723, %v835
      %837 = vmatmul.f32.gmra.mxu0 %v372
      %v838 = vpop.f32.mrf.mxu0
      %v839 = vadd.f32 %v726, %v838
      %840 = vdwg.mxu0
      %841 = vmatpush.msra.mxu0 %v469
      %842 = vmatpush.msra.mxu0 %v468
      %843 = vmatpush.msra.mxu0 %v467
      %844 = vmatpush.msra.mxu0 %v466
      %845 = vmatpush.msra.mxu0 %v465
      %846 = vmatpush.msra.mxu0 %v464
      %847 = vmatpush.msra.mxu0 %v463
      %848 = vmatpush.msra.mxu0 %v462
      %849 = vmatpush.msra.mxu0 %v461
      %850 = vmatpush.msra.mxu0 %v460
      %851 = vmatpush.msra.mxu0 %v459
      %852 = vmatpush.msra.mxu0 %v458
      %853 = vmatpush.msra.mxu0 %v457
      %854 = vmatpush.msra.mxu0 %v456
      %855 = vmatpush.msra.mxu0 %v455
      %856 = vmatpush.msra.mxu0 %v454
      %857 = vmatmul.f32.gmra.mxu0 %v311
      %v858 = vpop.f32.mrf.mxu0
      %v859 = vadd.f32 %v746, %v858
      %860 = vmatmul.f32.gmra.mxu0 %v313
      %v861 = vpop.f32.mrf.mxu0
      %v862 = vadd.f32 %v749, %v861
      %863 = vmatmul.f32.gmra.mxu0 %v315
      %v864 = vpop.f32.mrf.mxu0
      %v865 = vadd.f32 %v752, %v864
      %866 = vmatmul.f32.gmra.mxu0 %v317
      %v867 = vpop.f32.mrf.mxu0
      %v868 = vadd.f32 %v755, %v867
      %869 = vmatmul.f32.gmra.mxu0 %v319
      %v870 = vpop.f32.mrf.mxu0
      %v871 = vadd.f32 %v758, %v870
      %872 = vmatmul.f32.gmra.mxu0 %v321
      %v873 = vpop.f32.mrf.mxu0
      %v874 = vadd.f32 %v761, %v873
      %875 = vmatmul.f32.gmra.mxu0 %v323
      %v876 = vpop.f32.mrf.mxu0
      %v877 = vadd.f32 %v764, %v876
      %878 = vmatmul.f32.gmra.mxu0 %v325
      %v879 = vpop.f32.mrf.mxu0
      %v880 = vadd.f32 %v767, %v879
      %881 = vmatmul.f32.gmra.mxu0 %v327
      %v882 = vpop.f32.mrf.mxu0
      %v883 = vadd.f32 %v770, %v882
      %884 = vmatmul.f32.gmra.mxu0 %v329
      %v885 = vpop.f32.mrf.mxu0
      %v886 = vadd.f32 %v773, %v885
      %887 = vmatmul.f32.gmra.mxu0 %v331
      %v888 = vpop.f32.mrf.mxu0
      %v889 = vadd.f32 %v776, %v888
      %890 = vmatmul.f32.gmra.mxu0 %v333
      %v891 = vpop.f32.mrf.mxu0
      %v892 = vadd.f32 %v779, %v891
      %893 = vmatmul.f32.gmra.mxu0 %v335
      %v894 = vpop.f32.mrf.mxu0
      %v895 = vadd.f32 %v782, %v894
      %896 = vmatmul.f32.gmra.mxu0 %v337
      %v897 = vpop.f32.mrf.mxu0
      %v898 = vadd.f32 %v785, %v897
      %899 = vmatmul.f32.gmra.mxu0 %v339
      %v900 = vpop.f32.mrf.mxu0
      %v901 = vadd.f32 %v788, %v900
      %902 = vmatmul.f32.gmra.mxu0 %v341
      %v903 = vpop.f32.mrf.mxu0
      %v904 = vadd.f32 %v791, %v903
      %905 = vmatmul.f32.gmra.mxu0 %v343
      %v906 = vpop.f32.mrf.mxu0
      %v907 = vadd.f32 %v794, %v906
      %908 = vmatmul.f32.gmra.mxu0 %v345
      %v909 = vpop.f32.mrf.mxu0
      %v910 = vadd.f32 %v797, %v909
      %911 = vmatmul.f32.gmra.mxu0 %v347
      %v912 = vpop.f32.mrf.mxu0
      %v913 = vadd.f32 %v800, %v912
      %914 = vmatmul.f32.gmra.mxu0 %v349
      %v915 = vpop.f32.mrf.mxu0
      %v916 = vadd.f32 %v803, %v915
      %917 = vmatmul.f32.gmra.mxu0 %v351
      %v918 = vpop.f32.mrf.mxu0
      %v919 = vadd.f32 %v806, %v918
      %920 = vmatmul.f32.gmra.mxu0 %v353
      %v921 = vpop.f32.mrf.mxu0
      %v922 = vadd.f32 %v809, %v921
      %923 = vmatmul.f32.gmra.mxu0 %v355
      %v924 = vpop.f32.mrf.mxu0
      %v925 = vadd.f32 %v812, %v924
      %926 = vmatmul.f32.gmra.mxu0 %v357
      %v927 = vpop.f32.mrf.mxu0
      %v928 = vadd.f32 %v815, %v927
      %929 = vmatmul.f32.gmra.mxu0 %v359
      %v930 = vpop.f32.mrf.mxu0
      %v931 = vadd.f32 %v818, %v930
      %932 = vmatmul.f32.gmra.mxu0 %v361
      %v933 = vpop.f32.mrf.mxu0
      %v934 = vadd.f32 %v821, %v933
      %935 = vmatmul.f32.gmra.mxu0 %v363
      %v936 = vpop.f32.mrf.mxu0
      %v937 = vadd.f32 %v824, %v936
      %938 = vmatmul.f32.gmra.mxu0 %v365
      %v939 = vpop.f32.mrf.mxu0
      %v940 = vadd.f32 %v827, %v939
      %941 = vmatmul.f32.gmra.mxu0 %v367
      %v942 = vpop.f32.mrf.mxu0
      %v943 = vadd.f32 %v830, %v942
      %944 = vmatmul.f32.gmra.mxu0 %v369
      %v945 = vpop.f32.mrf.mxu0
      %v946 = vadd.f32 %v833, %v945
      %947 = vmatmul.f32.gmra.mxu0 %v371
      %v948 = vpop.f32.mrf.mxu0
      %v949 = vadd.f32 %v836, %v948
      %950 = vmatmul.f32.gmra.mxu0 %v373
      %v951 = vpop.f32.mrf.mxu0
      %v952 = vadd.f32 %v839, %v951
      %953 = vdwg.mxu0
      %v954 = vld [vmem:[%s4] sm:$0x1]
      %v956 = vperm.slane %v954, 0
      %v958 = vadd.f32 %v859, %v956
      %v959 = vadd.f32 %v862, %v956
      %v960 = vadd.f32 %v865, %v956
      %v961 = vadd.f32 %v868, %v956
      %v962 = vadd.f32 %v871, %v956
      %v963 = vadd.f32 %v874, %v956
      %v964 = vadd.f32 %v877, %v956
      %v965 = vadd.f32 %v880, %v956
      %v966 = vadd.f32 %v883, %v956
      %v967 = vadd.f32 %v886, %v956
      %v968 = vadd.f32 %v889, %v956
      %v969 = vadd.f32 %v892, %v956
      %v970 = vadd.f32 %v895, %v956
      %v971 = vadd.f32 %v898, %v956
      %v972 = vadd.f32 %v901, %v956
      %v973 = vadd.f32 %v904, %v956
      %v974 = vadd.f32 %v907, %v956
      %v975 = vadd.f32 %v910, %v956
      %v976 = vadd.f32 %v913, %v956
      %v977 = vadd.f32 %v916, %v956
      %v978 = vadd.f32 %v919, %v956
      %v979 = vadd.f32 %v922, %v956
      %v980 = vadd.f32 %v925, %v956
      %v981 = vadd.f32 %v928, %v956
      %v982 = vadd.f32 %v931, %v956
      %v983 = vadd.f32 %v934, %v956
      %v984 = vadd.f32 %v937, %v956
      %v985 = vadd.f32 %v940, %v956
      %v986 = vadd.f32 %v943, %v956
      %v987 = vadd.f32 %v946, %v956
      %v988 = vadd.f32 %v949, %v956
      %v989 = vadd.f32 %v952, %v956
      %vm990 = vcmp.ge.f32.partialorder %v958, 0.0
      %vm991 = vcmp.ge.f32.partialorder %v959, 0.0
      %vm992 = vcmp.ge.f32.partialorder %v960, 0.0
      %vm993 = vcmp.ge.f32.partialorder %v961, 0.0
      %vm994 = vcmp.ge.f32.partialorder %v962, 0.0
      %vm995 = vcmp.ge.f32.partialorder %v963, 0.0
      %vm996 = vcmp.ge.f32.partialorder %v964, 0.0
      %vm997 = vcmp.ge.f32.partialorder %v965, 0.0
      %vm998 = vcmp.ge.f32.partialorder %v966, 0.0
      %vm999 = vcmp.ge.f32.partialorder %v967, 0.0
      %vm1000 = vcmp.ge.f32.partialorder %v968, 0.0
      %vm1001 = vcmp.ge.f32.partialorder %v969, 0.0
      %vm1002 = vcmp.ge.f32.partialorder %v970, 0.0
      %vm1003 = vcmp.ge.f32.partialorder %v971, 0.0
      %vm1004 = vcmp.ge.f32.partialorder %v972, 0.0
      %vm1005 = vcmp.ge.f32.partialorder %v973, 0.0
      %vm1006 = vcmp.ge.f32.partialorder %v974, 0.0
      %vm1007 = vcmp.ge.f32.partialorder %v975, 0.0
      %vm1008 = vcmp.ge.f32.partialorder %v976, 0.0
      %vm1009 = vcmp.ge.f32.partialorder %v977, 0.0
      %vm1010 = vcmp.ge.f32.partialorder %v978, 0.0
      %vm1011 = vcmp.ge.f32.partialorder %v979, 0.0
      %vm1012 = vcmp.ge.f32.partialorder %v980, 0.0
      %vm1013 = vcmp.ge.f32.partialorder %v981, 0.0
      %vm1014 = vcmp.ge.f32.partialorder %v982, 0.0
      %vm1015 = vcmp.ge.f32.partialorder %v983, 0.0
      %vm1016 = vcmp.ge.f32.partialorder %v984, 0.0
      %vm1017 = vcmp.ge.f32.partialorder %v985, 0.0
      %vm1018 = vcmp.ge.f32.partialorder %v986, 0.0
      %vm1019 = vcmp.ge.f32.partialorder %v987, 0.0
      %vm1020 = vcmp.ge.f32.partialorder %v988, 0.0
      %vm1021 = vcmp.ge.f32.partialorder %v989, 0.0
      %v1022 = vmul.f32 %v958, 0.01
      %v1023 = vmul.f32 %v959, 0.01
      %v1024 = vmul.f32 %v960, 0.01
      %v1025 = vmul.f32 %v961, 0.01
      %v1026 = vmul.f32 %v962, 0.01
      %v1027 = vmul.f32 %v963, 0.01
      %v1028 = vmul.f32 %v964, 0.01
      %v1029 = vmul.f32 %v965, 0.01
      %v1030 = vmul.f32 %v966, 0.01
      %v1031 = vmul.f32 %v967, 0.01
      %v1032 = vmul.f32 %v968, 0.01
      %v1033 = vmul.f32 %v969, 0.01
      %v1034 = vmul.f32 %v970, 0.01
      %v1035 = vmul.f32 %v971, 0.01
      %v1036 = vmul.f32 %v972, 0.01
      %v1037 = vmul.f32 %v973, 0.01
      %v1038 = vmul.f32 %v974, 0.01
      %v1039 = vmul.f32 %v975, 0.01
      %v1040 = vmul.f32 %v976, 0.01
      %v1041 = vmul.f32 %v977, 0.01
      %v1042 = vmul.f32 %v978, 0.01
      %v1043 = vmul.f32 %v979, 0.01
      %v1044 = vmul.f32 %v980, 0.01
      %v1045 = vmul.f32 %v981, 0.01
      %v1046 = vmul.f32 %v982, 0.01
      %v1047 = vmul.f32 %v983, 0.01
      %v1048 = vmul.f32 %v984, 0.01
      %v1049 = vmul.f32 %v985, 0.01
      %v1050 = vmul.f32 %v986, 0.01
      %v1051 = vmul.f32 %v987, 0.01
      %v1052 = vmul.f32 %v988, 0.01
      %v1053 = vmul.f32 %v989, 0.01
      %v1054 = vsel %vm990, %v958, %v1022
      %v1055 = vsel %vm991, %v959, %v1023
      %v1056 = vsel %vm992, %v960, %v1024
      %v1057 = vsel %vm993, %v961, %v1025
      %v1058 = vsel %vm994, %v962, %v1026
      %v1059 = vsel %vm995, %v963, %v1027
      %v1060 = vsel %vm996, %v964, %v1028
      %v1061 = vsel %vm997, %v965, %v1029
      %v1062 = vsel %vm998, %v966, %v1030
      %v1063 = vsel %vm999, %v967, %v1031
      %v1064 = vsel %vm1000, %v968, %v1032
      %v1065 = vsel %vm1001, %v969, %v1033
      %v1066 = vsel %vm1002, %v970, %v1034
      %v1067 = vsel %vm1003, %v971, %v1035
      %v1068 = vsel %vm1004, %v972, %v1036
      %v1069 = vsel %vm1005, %v973, %v1037
      %v1070 = vsel %vm1006, %v974, %v1038
      %v1071 = vsel %vm1007, %v975, %v1039
      %v1072 = vsel %vm1008, %v976, %v1040
      %v1073 = vsel %vm1009, %v977, %v1041
      %v1074 = vsel %vm1010, %v978, %v1042
      %v1075 = vsel %vm1011, %v979, %v1043
      %v1076 = vsel %vm1012, %v980, %v1044
      %v1077 = vsel %vm1013, %v981, %v1045
      %v1078 = vsel %vm1014, %v982, %v1046
      %v1079 = vsel %vm1015, %v983, %v1047
      %v1080 = vsel %vm1016, %v984, %v1048
      %v1081 = vsel %vm1017, %v985, %v1049
      %v1082 = vsel %vm1018, %v986, %v1050
      %v1083 = vsel %vm1019, %v987, %v1051
      %v1084 = vsel %vm1020, %v988, %v1052
      %v1085 = vsel %vm1021, %v989, %v1053
      %v1086 = vld [vmem:[%s5] sm:$0xff]
      %v1087 = vld [vmem:[%s5 + $0x8] sm:$0xff]
      %v1088 = vld [vmem:[%s5 + $0x10] sm:$0xff]
      %v1089 = vld [vmem:[%s5 + $0x18] sm:$0xff]
      %v1090 = vld [vmem:[%s5 + $0x20] sm:$0xff]
      %v1091 = vld [vmem:[%s5 + $0x28] sm:$0xff]
      %v1092 = vld [vmem:[%s5 + $0x30] sm:$0xff]
      %v1093 = vld [vmem:[%s5 + $0x38] sm:$0xff]
      %v1094 = vld [vmem:[%s5 + $0x40] sm:$0xff]
      %v1095 = vld [vmem:[%s5 + $0x48] sm:$0xff]
      %v1096 = vld [vmem:[%s5 + $0x50] sm:$0xff]
      %v1097 = vld [vmem:[%s5 + $0x58] sm:$0xff]
      %v1098 = vld [vmem:[%s5 + $0x60] sm:$0xff]
      %v1099 = vld [vmem:[%s5 + $0x68] sm:$0xff]
      %v1100 = vld [vmem:[%s5 + $0x70] sm:$0xff]
      %v1101 = vld [vmem:[%s5 + $0x78] sm:$0xff]
      %v1102 = vld [vmem:[%s6] sm:$0x1]
      %v1104 = vperm.slane %v1102, 0
      %1106 = vmatpush.msra.mxu0 %v1101
      %1107 = vmatpush.msra.mxu0 %v1100
      %1108 = vmatpush.msra.mxu0 %v1099
      %1109 = vmatpush.msra.mxu0 %v1098
      %1110 = vmatpush.msra.mxu0 %v1097
      %1111 = vmatpush.msra.mxu0 %v1096
      %1112 = vmatpush.msra.mxu0 %v1095
      %1113 = vmatpush.msra.mxu0 %v1094
      %1114 = vmatpush.msra.mxu0 %v1093
      %1115 = vmatpush.msra.mxu0 %v1092
      %1116 = vmatpush.msra.mxu0 %v1091
      %1117 = vmatpush.msra.mxu0 %v1090
      %1118 = vmatpush.msra.mxu0 %v1089
      %1119 = vmatpush.msra.mxu0 %v1088
      %1120 = vmatpush.msra.mxu0 %v1087
      %1121 = vmatpush.msra.mxu0 %v1086
      %1122 = vmatmul.f32.gmra.mxu0 %v1054
      %v1123 = vpop.f32.mrf.mxu0
      %v1124 = vadd.f32 %v1104, %v1123
      %1125 = vmatmul.f32.gmra.mxu0 %v1055
      %v1126 = vpop.f32.mrf.mxu0
      %v1127 = vadd.f32 %v1104, %v1126
      %1128 = vmatmul.f32.gmra.mxu0 %v1056
      %v1129 = vpop.f32.mrf.mxu0
      %v1130 = vadd.f32 %v1104, %v1129
      %1131 = vmatmul.f32.gmra.mxu0 %v1057
      %v1132 = vpop.f32.mrf.mxu0
      %v1133 = vadd.f32 %v1104, %v1132
      %1134 = vmatmul.f32.gmra.mxu0 %v1058
      %v1135 = vpop.f32.mrf.mxu0
      %v1136 = vadd.f32 %v1104, %v1135
      %1137 = vmatmul.f32.gmra.mxu0 %v1059
      %v1138 = vpop.f32.mrf.mxu0
      %v1139 = vadd.f32 %v1104, %v1138
      %1140 = vmatmul.f32.gmra.mxu0 %v1060
      %v1141 = vpop.f32.mrf.mxu0
      %v1142 = vadd.f32 %v1104, %v1141
      %1143 = vmatmul.f32.gmra.mxu0 %v1061
      %v1144 = vpop.f32.mrf.mxu0
      %v1145 = vadd.f32 %v1104, %v1144
      %1146 = vmatmul.f32.gmra.mxu0 %v1062
      %v1147 = vpop.f32.mrf.mxu0
      %v1148 = vadd.f32 %v1104, %v1147
      %1149 = vmatmul.f32.gmra.mxu0 %v1063
      %v1150 = vpop.f32.mrf.mxu0
      %v1151 = vadd.f32 %v1104, %v1150
      %1152 = vmatmul.f32.gmra.mxu0 %v1064
      %v1153 = vpop.f32.mrf.mxu0
      %v1154 = vadd.f32 %v1104, %v1153
      %1155 = vmatmul.f32.gmra.mxu0 %v1065
      %v1156 = vpop.f32.mrf.mxu0
      %v1157 = vadd.f32 %v1104, %v1156
      %1158 = vmatmul.f32.gmra.mxu0 %v1066
      %v1159 = vpop.f32.mrf.mxu0
      %v1160 = vadd.f32 %v1104, %v1159
      %1161 = vmatmul.f32.gmra.mxu0 %v1067
      %v1162 = vpop.f32.mrf.mxu0
      %v1163 = vadd.f32 %v1104, %v1162
      %1164 = vmatmul.f32.gmra.mxu0 %v1068
      %v1165 = vpop.f32.mrf.mxu0
      %v1166 = vadd.f32 %v1104, %v1165
      %1167 = vmatmul.f32.gmra.mxu0 %v1069
      %v1168 = vpop.f32.mrf.mxu0
      %v1169 = vadd.f32 %v1104, %v1168
      %1170 = vmatmul.f32.gmra.mxu0 %v1070
      %v1171 = vpop.f32.mrf.mxu0
      %v1172 = vadd.f32 %v1104, %v1171
      %1173 = vmatmul.f32.gmra.mxu0 %v1071
      %v1174 = vpop.f32.mrf.mxu0
      %v1175 = vadd.f32 %v1104, %v1174
      %1176 = vmatmul.f32.gmra.mxu0 %v1072
      %v1177 = vpop.f32.mrf.mxu0
      %v1178 = vadd.f32 %v1104, %v1177
      %1179 = vmatmul.f32.gmra.mxu0 %v1073
      %v1180 = vpop.f32.mrf.mxu0
      %v1181 = vadd.f32 %v1104, %v1180
      %1182 = vmatmul.f32.gmra.mxu0 %v1074
      %v1183 = vpop.f32.mrf.mxu0
      %v1184 = vadd.f32 %v1104, %v1183
      %1185 = vmatmul.f32.gmra.mxu0 %v1075
      %v1186 = vpop.f32.mrf.mxu0
      %v1187 = vadd.f32 %v1104, %v1186
      %1188 = vmatmul.f32.gmra.mxu0 %v1076
      %v1189 = vpop.f32.mrf.mxu0
      %v1190 = vadd.f32 %v1104, %v1189
      %1191 = vmatmul.f32.gmra.mxu0 %v1077
      %v1192 = vpop.f32.mrf.mxu0
      %v1193 = vadd.f32 %v1104, %v1192
      %1194 = vmatmul.f32.gmra.mxu0 %v1078
      %v1195 = vpop.f32.mrf.mxu0
      %v1196 = vadd.f32 %v1104, %v1195
      %1197 = vmatmul.f32.gmra.mxu0 %v1079
      %v1198 = vpop.f32.mrf.mxu0
      %v1199 = vadd.f32 %v1104, %v1198
      %1200 = vmatmul.f32.gmra.mxu0 %v1080
      %v1201 = vpop.f32.mrf.mxu0
      %v1202 = vadd.f32 %v1104, %v1201
      %1203 = vmatmul.f32.gmra.mxu0 %v1081
      %v1204 = vpop.f32.mrf.mxu0
      %v1205 = vadd.f32 %v1104, %v1204
      %1206 = vmatmul.f32.gmra.mxu0 %v1082
      %v1207 = vpop.f32.mrf.mxu0
      %v1208 = vadd.f32 %v1104, %v1207
      %1209 = vmatmul.f32.gmra.mxu0 %v1083
      %v1210 = vpop.f32.mrf.mxu0
      %v1211 = vadd.f32 %v1104, %v1210
      %1212 = vmatmul.f32.gmra.mxu0 %v1084
      %v1213 = vpop.f32.mrf.mxu0
      %v1214 = vadd.f32 %v1104, %v1213
      %1215 = vmatmul.f32.gmra.mxu0 %v1085
      %v1216 = vpop.f32.mrf.mxu0
      %v1217 = vadd.f32 %v1104, %v1216
      %1218 = vdwg.mxu0
      %vm1219 = vcmp.ge.f32.partialorder %v1124, 0.0
      %vm1220 = vcmp.ge.f32.partialorder %v1127, 0.0
      %vm1221 = vcmp.ge.f32.partialorder %v1130, 0.0
      %vm1222 = vcmp.ge.f32.partialorder %v1133, 0.0
      %vm1223 = vcmp.ge.f32.partialorder %v1136, 0.0
      %vm1224 = vcmp.ge.f32.partialorder %v1139, 0.0
      %vm1225 = vcmp.ge.f32.partialorder %v1142, 0.0
      %vm1226 = vcmp.ge.f32.partialorder %v1145, 0.0
      %vm1227 = vcmp.ge.f32.partialorder %v1148, 0.0
      %vm1228 = vcmp.ge.f32.partialorder %v1151, 0.0
      %vm1229 = vcmp.ge.f32.partialorder %v1154, 0.0
      %vm1230 = vcmp.ge.f32.partialorder %v1157, 0.0
      %vm1231 = vcmp.ge.f32.partialorder %v1160, 0.0
      %vm1232 = vcmp.ge.f32.partialorder %v1163, 0.0
      %vm1233 = vcmp.ge.f32.partialorder %v1166, 0.0
      %vm1234 = vcmp.ge.f32.partialorder %v1169, 0.0
      %vm1235 = vcmp.ge.f32.partialorder %v1172, 0.0
      %vm1236 = vcmp.ge.f32.partialorder %v1175, 0.0
      %vm1237 = vcmp.ge.f32.partialorder %v1178, 0.0
      %vm1238 = vcmp.ge.f32.partialorder %v1181, 0.0
      %vm1239 = vcmp.ge.f32.partialorder %v1184, 0.0
      %vm1240 = vcmp.ge.f32.partialorder %v1187, 0.0
      %vm1241 = vcmp.ge.f32.partialorder %v1190, 0.0
      %vm1242 = vcmp.ge.f32.partialorder %v1193, 0.0
      %vm1243 = vcmp.ge.f32.partialorder %v1196, 0.0
      %vm1244 = vcmp.ge.f32.partialorder %v1199, 0.0
      %vm1245 = vcmp.ge.f32.partialorder %v1202, 0.0
      %vm1246 = vcmp.ge.f32.partialorder %v1205, 0.0
      %vm1247 = vcmp.ge.f32.partialorder %v1208, 0.0
      %vm1248 = vcmp.ge.f32.partialorder %v1211, 0.0
      %vm1249 = vcmp.ge.f32.partialorder %v1214, 0.0
      %vm1250 = vcmp.ge.f32.partialorder %v1217, 0.0
      %v1251 = vmul.f32 %v1124, 0.01
      %v1252 = vmul.f32 %v1127, 0.01
      %v1253 = vmul.f32 %v1130, 0.01
      %v1254 = vmul.f32 %v1133, 0.01
      %v1255 = vmul.f32 %v1136, 0.01
      %v1256 = vmul.f32 %v1139, 0.01
      %v1257 = vmul.f32 %v1142, 0.01
      %v1258 = vmul.f32 %v1145, 0.01
      %v1259 = vmul.f32 %v1148, 0.01
      %v1260 = vmul.f32 %v1151, 0.01
      %v1261 = vmul.f32 %v1154, 0.01
      %v1262 = vmul.f32 %v1157, 0.01
      %v1263 = vmul.f32 %v1160, 0.01
      %v1264 = vmul.f32 %v1163, 0.01
      %v1265 = vmul.f32 %v1166, 0.01
      %v1266 = vmul.f32 %v1169, 0.01
      %v1267 = vmul.f32 %v1172, 0.01
      %v1268 = vmul.f32 %v1175, 0.01
      %v1269 = vmul.f32 %v1178, 0.01
      %v1270 = vmul.f32 %v1181, 0.01
      %v1271 = vmul.f32 %v1184, 0.01
      %v1272 = vmul.f32 %v1187, 0.01
      %v1273 = vmul.f32 %v1190, 0.01
      %v1274 = vmul.f32 %v1193, 0.01
      %v1275 = vmul.f32 %v1196, 0.01
      %v1276 = vmul.f32 %v1199, 0.01
      %v1277 = vmul.f32 %v1202, 0.01
      %v1278 = vmul.f32 %v1205, 0.01
      %v1279 = vmul.f32 %v1208, 0.01
      %v1280 = vmul.f32 %v1211, 0.01
      %v1281 = vmul.f32 %v1214, 0.01
      %v1282 = vmul.f32 %v1217, 0.01
      %v1283 = vsel %vm1219, %v1124, %v1251
      %v1284 = vsel %vm1220, %v1127, %v1252
      %v1285 = vsel %vm1221, %v1130, %v1253
      %v1286 = vsel %vm1222, %v1133, %v1254
      %v1287 = vsel %vm1223, %v1136, %v1255
      %v1288 = vsel %vm1224, %v1139, %v1256
      %v1289 = vsel %vm1225, %v1142, %v1257
      %v1290 = vsel %vm1226, %v1145, %v1258
      %v1291 = vsel %vm1227, %v1148, %v1259
      %v1292 = vsel %vm1228, %v1151, %v1260
      %v1293 = vsel %vm1229, %v1154, %v1261
      %v1294 = vsel %vm1230, %v1157, %v1262
      %v1295 = vsel %vm1231, %v1160, %v1263
      %v1296 = vsel %vm1232, %v1163, %v1264
      %v1297 = vsel %vm1233, %v1166, %v1265
      %v1298 = vsel %vm1234, %v1169, %v1266
      %v1299 = vsel %vm1235, %v1172, %v1267
      %v1300 = vsel %vm1236, %v1175, %v1268
      %v1301 = vsel %vm1237, %v1178, %v1269
      %v1302 = vsel %vm1238, %v1181, %v1270
      %v1303 = vsel %vm1239, %v1184, %v1271
      %v1304 = vsel %vm1240, %v1187, %v1272
      %v1305 = vsel %vm1241, %v1190, %v1273
      %v1306 = vsel %vm1242, %v1193, %v1274
      %v1307 = vsel %vm1243, %v1196, %v1275
      %v1308 = vsel %vm1244, %v1199, %v1276
      %v1309 = vsel %vm1245, %v1202, %v1277
      %v1310 = vsel %vm1246, %v1205, %v1278
      %v1311 = vsel %vm1247, %v1208, %v1279
      %v1312 = vsel %vm1248, %v1211, %v1280
      %v1313 = vsel %vm1249, %v1214, %v1281
      %v1314 = vsel %vm1250, %v1217, %v1282
      %1316 = vset.pattern.permute.xlu0 0
      %1317 = vperm.xlu0 %1316, %v1283
      %v1318 = vpop.permute.xlu0 %1317
      %1321 = vset.pattern.permute.xlu0 0
      %1322 = vperm.xlu0 %1321, %v1284
      %v1323 = vpop.permute.xlu0 %1322
      %1326 = vset.pattern.permute.xlu0 0
      %1327 = vperm.xlu0 %1326, %v1285
      %v1328 = vpop.permute.xlu0 %1327
      %1331 = vset.pattern.permute.xlu0 0
      %1332 = vperm.xlu0 %1331, %v1286
      %v1333 = vpop.permute.xlu0 %1332
      %1336 = vset.pattern.permute.xlu0 0
      %1337 = vperm.xlu0 %1336, %v1287
      %v1338 = vpop.permute.xlu0 %1337
      %1341 = vset.pattern.permute.xlu0 0
      %1342 = vperm.xlu0 %1341, %v1288
      %v1343 = vpop.permute.xlu0 %1342
      %1346 = vset.pattern.permute.xlu0 0
      %1347 = vperm.xlu0 %1346, %v1289
      %v1348 = vpop.permute.xlu0 %1347
      %1351 = vset.pattern.permute.xlu0 0
      %1352 = vperm.xlu0 %1351, %v1290
      %v1353 = vpop.permute.xlu0 %1352
      %1356 = vset.pattern.permute.xlu0 0
      %1357 = vperm.xlu0 %1356, %v1291
      %v1358 = vpop.permute.xlu0 %1357
      %1361 = vset.pattern.permute.xlu0 0
      %1362 = vperm.xlu0 %1361, %v1292
      %v1363 = vpop.permute.xlu0 %1362
      %1366 = vset.pattern.permute.xlu0 0
      %1367 = vperm.xlu0 %1366, %v1293
      %v1368 = vpop.permute.xlu0 %1367
      %1371 = vset.pattern.permute.xlu0 0
      %1372 = vperm.xlu0 %1371, %v1294
      %v1373 = vpop.permute.xlu0 %1372
      %1376 = vset.pattern.permute.xlu0 0
      %1377 = vperm.xlu0 %1376, %v1295
      %v1378 = vpop.permute.xlu0 %1377
      %1381 = vset.pattern.permute.xlu0 0
      %1382 = vperm.xlu0 %1381, %v1296
      %v1383 = vpop.permute.xlu0 %1382
      %1386 = vset.pattern.permute.xlu0 0
      %1387 = vperm.xlu0 %1386, %v1297
      %v1388 = vpop.permute.xlu0 %1387
      %1391 = vset.pattern.permute.xlu0 0
      %1392 = vperm.xlu0 %1391, %v1298
      %v1393 = vpop.permute.xlu0 %1392
      %1396 = vset.pattern.permute.xlu0 0
      %1397 = vperm.xlu0 %1396, %v1299
      %v1398 = vpop.permute.xlu0 %1397
      %1401 = vset.pattern.permute.xlu0 0
      %1402 = vperm.xlu0 %1401, %v1300
      %v1403 = vpop.permute.xlu0 %1402
      %1406 = vset.pattern.permute.xlu0 0
      %1407 = vperm.xlu0 %1406, %v1301
      %v1408 = vpop.permute.xlu0 %1407
      %1411 = vset.pattern.permute.xlu0 0
      %1412 = vperm.xlu0 %1411, %v1302
      %v1413 = vpop.permute.xlu0 %1412
      %1416 = vset.pattern.permute.xlu0 0
      %1417 = vperm.xlu0 %1416, %v1303
      %v1418 = vpop.permute.xlu0 %1417
      %1421 = vset.pattern.permute.xlu0 0
      %1422 = vperm.xlu0 %1421, %v1304
      %v1423 = vpop.permute.xlu0 %1422
      %1426 = vset.pattern.permute.xlu0 0
      %1427 = vperm.xlu0 %1426, %v1305
      %v1428 = vpop.permute.xlu0 %1427
      %1431 = vset.pattern.permute.xlu0 0
      %1432 = vperm.xlu0 %1431, %v1306
      %v1433 = vpop.permute.xlu0 %1432
      %1436 = vset.pattern.permute.xlu0 0
      %1437 = vperm.xlu0 %1436, %v1307
      %v1438 = vpop.permute.xlu0 %1437
      %1441 = vset.pattern.permute.xlu0 0
      %1442 = vperm.xlu0 %1441, %v1308
      %v1443 = vpop.permute.xlu0 %1442
      %1446 = vset.pattern.permute.xlu0 0
      %1447 = vperm.xlu0 %1446, %v1309
      %v1448 = vpop.permute.xlu0 %1447
      %1451 = vset.pattern.permute.xlu0 0
      %1452 = vperm.xlu0 %1451, %v1310
      %v1453 = vpop.permute.xlu0 %1452
      %1456 = vset.pattern.permute.xlu0 0
      %1457 = vperm.xlu0 %1456, %v1311
      %v1458 = vpop.permute.xlu0 %1457
      %1461 = vset.pattern.permute.xlu0 0
      %1462 = vperm.xlu0 %1461, %v1312
      %v1463 = vpop.permute.xlu0 %1462
      %1466 = vset.pattern.permute.xlu0 0
      %1467 = vperm.xlu0 %1466, %v1313
      %v1468 = vpop.permute.xlu0 %1467
      %1471 = vset.pattern.permute.xlu0 0
      %1472 = vperm.xlu0 %1471, %v1314
      %v1473 = vpop.permute.xlu0 %1472
      %v1475 = vmul.f32 %v1318, %v374
      %v1476 = vmul.f32 %v1323, %v376
      %v1477 = vmul.f32 %v1328, %v378
      %v1478 = vmul.f32 %v1333, %v380
      %v1479 = vmul.f32 %v1338, %v382
      %v1480 = vmul.f32 %v1343, %v384
      %v1481 = vmul.f32 %v1348, %v386
      %v1482 = vmul.f32 %v1353, %v388
      %v1483 = vmul.f32 %v1358, %v390
      %v1484 = vmul.f32 %v1363, %v392
      %v1485 = vmul.f32 %v1368, %v394
      %v1486 = vmul.f32 %v1373, %v396
      %v1487 = vmul.f32 %v1378, %v398
      %v1488 = vmul.f32 %v1383, %v400
      %v1489 = vmul.f32 %v1388, %v402
      %v1490 = vmul.f32 %v1393, %v404
      %v1491 = vmul.f32 %v1398, %v406
      %v1492 = vmul.f32 %v1403, %v408
      %v1493 = vmul.f32 %v1408, %v410
      %v1494 = vmul.f32 %v1413, %v412
      %v1495 = vmul.f32 %v1418, %v414
      %v1496 = vmul.f32 %v1423, %v416
      %v1497 = vmul.f32 %v1428, %v418
      %v1498 = vmul.f32 %v1433, %v420
      %v1499 = vmul.f32 %v1438, %v422
      %v1500 = vmul.f32 %v1443, %v424
      %v1501 = vmul.f32 %v1448, %v426
      %v1502 = vmul.f32 %v1453, %v428
      %v1503 = vmul.f32 %v1458, %v430
      %v1504 = vmul.f32 %v1463, %v432
      %v1505 = vmul.f32 %v1468, %v434
      %v1506 = vmul.f32 %v1473, %v436
      %v1507 = vadd.f32 %v1475, 0.0
      %v1508 = vadd.f32 %v1476, 0.0
      %v1509 = vadd.f32 %v1477, 0.0
      %v1510 = vadd.f32 %v1478, 0.0
      %v1511 = vadd.f32 %v1479, 0.0
      %v1512 = vadd.f32 %v1480, 0.0
      %v1513 = vadd.f32 %v1481, 0.0
      %v1514 = vadd.f32 %v1482, 0.0
      %v1515 = vadd.f32 %v1483, 0.0
      %v1516 = vadd.f32 %v1484, 0.0
      %v1517 = vadd.f32 %v1485, 0.0
      %v1518 = vadd.f32 %v1486, 0.0
      %v1519 = vadd.f32 %v1487, 0.0
      %v1520 = vadd.f32 %v1488, 0.0
      %v1521 = vadd.f32 %v1489, 0.0
      %v1522 = vadd.f32 %v1490, 0.0
      %v1523 = vadd.f32 %v1491, 0.0
      %v1524 = vadd.f32 %v1492, 0.0
      %v1525 = vadd.f32 %v1493, 0.0
      %v1526 = vadd.f32 %v1494, 0.0
      %v1527 = vadd.f32 %v1495, 0.0
      %v1528 = vadd.f32 %v1496, 0.0
      %v1529 = vadd.f32 %v1497, 0.0
      %v1530 = vadd.f32 %v1498, 0.0
      %v1531 = vadd.f32 %v1499, 0.0
      %v1532 = vadd.f32 %v1500, 0.0
      %v1533 = vadd.f32 %v1501, 0.0
      %v1534 = vadd.f32 %v1502, 0.0
      %v1535 = vadd.f32 %v1503, 0.0
      %v1536 = vadd.f32 %v1504, 0.0
      %v1537 = vadd.f32 %v1505, 0.0
      %v1538 = vadd.f32 %v1506, 0.0
      %1539 = vset.pattern.permute.xlu0 1
      %1540 = vperm.xlu0 %1539, %v1283
      %v1541 = vpop.permute.xlu0 %1540
      %1543 = vset.pattern.permute.xlu0 1
      %1544 = vperm.xlu0 %1543, %v1284
      %v1545 = vpop.permute.xlu0 %1544
      %1547 = vset.pattern.permute.xlu0 1
      %1548 = vperm.xlu0 %1547, %v1285
      %v1549 = vpop.permute.xlu0 %1548
      %1551 = vset.pattern.permute.xlu0 1
      %1552 = vperm.xlu0 %1551, %v1286
      %v1553 = vpop.permute.xlu0 %1552
      %1555 = vset.pattern.permute.xlu0 1
      %1556 = vperm.xlu0 %1555, %v1287
      %v1557 = vpop.permute.xlu0 %1556
      %1559 = vset.pattern.permute.xlu0 1
      %1560 = vperm.xlu0 %1559, %v1288
      %v1561 = vpop.permute.xlu0 %1560
      %1563 = vset.pattern.permute.xlu0 1
      %1564 = vperm.xlu0 %1563, %v1289
      %v1565 = vpop.permute.xlu0 %1564
      %1567 = vset.pattern.permute.xlu0 1
      %1568 = vperm.xlu0 %1567, %v1290
      %v1569 = vpop.permute.xlu0 %1568
      %1571 = vset.pattern.permute.xlu0 1
      %1572 = vperm.xlu0 %1571, %v1291
      %v1573 = vpop.permute.xlu0 %1572
      %1575 = vset.pattern.permute.xlu0 1
      %1576 = vperm.xlu0 %1575, %v1292
      %v1577 = vpop.permute.xlu0 %1576
      %1579 = vset.pattern.permute.xlu0 1
      %1580 = vperm.xlu0 %1579, %v1293
      %v1581 = vpop.permute.xlu0 %1580
      %1583 = vset.pattern.permute.xlu0 1
      %1584 = vperm.xlu0 %1583, %v1294
      %v1585 = vpop.permute.xlu0 %1584
      %1587 = vset.pattern.permute.xlu0 1
      %1588 = vperm.xlu0 %1587, %v1295
      %v1589 = vpop.permute.xlu0 %1588
      %1591 = vset.pattern.permute.xlu0 1
      %1592 = vperm.xlu0 %1591, %v1296
      %v1593 = vpop.permute.xlu0 %1592
      %1595 = vset.pattern.permute.xlu0 1
      %1596 = vperm.xlu0 %1595, %v1297
      %v1597 = vpop.permute.xlu0 %1596
      %1599 = vset.pattern.permute.xlu0 1
      %1600 = vperm.xlu0 %1599, %v1298
      %v1601 = vpop.permute.xlu0 %1600
      %1603 = vset.pattern.permute.xlu0 1
      %1604 = vperm.xlu0 %1603, %v1299
      %v1605 = vpop.permute.xlu0 %1604
      %1607 = vset.pattern.permute.xlu0 1
      %1608 = vperm.xlu0 %1607, %v1300
      %v1609 = vpop.permute.xlu0 %1608
      %1611 = vset.pattern.permute.xlu0 1
      %1612 = vperm.xlu0 %1611, %v1301
      %v1613 = vpop.permute.xlu0 %1612
      %1615 = vset.pattern.permute.xlu0 1
      %1616 = vperm.xlu0 %1615, %v1302
      %v1617 = vpop.permute.xlu0 %1616
      %1619 = vset.pattern.permute.xlu0 1
      %1620 = vperm.xlu0 %1619, %v1303
      %v1621 = vpop.permute.xlu0 %1620
      %1623 = vset.pattern.permute.xlu0 1
      %1624 = vperm.xlu0 %1623, %v1304
      %v1625 = vpop.permute.xlu0 %1624
      %1627 = vset.pattern.permute.xlu0 1
      %1628 = vperm.xlu0 %1627, %v1305
      %v1629 = vpop.permute.xlu0 %1628
      %1631 = vset.pattern.permute.xlu0 1
      %1632 = vperm.xlu0 %1631, %v1306
      %v1633 = vpop.permute.xlu0 %1632
      %1635 = vset.pattern.permute.xlu0 1
      %1636 = vperm.xlu0 %1635, %v1307
      %v1637 = vpop.permute.xlu0 %1636
      %1639 = vset.pattern.permute.xlu0 1
      %1640 = vperm.xlu0 %1639, %v1308
      %v1641 = vpop.permute.xlu0 %1640
      %1643 = vset.pattern.permute.xlu0 1
      %1644 = vperm.xlu0 %1643, %v1309
      %v1645 = vpop.permute.xlu0 %1644
      %1647 = vset.pattern.permute.xlu0 1
      %1648 = vperm.xlu0 %1647, %v1310
      %v1649 = vpop.permute.xlu0 %1648
      %1651 = vset.pattern.permute.xlu0 1
      %1652 = vperm.xlu0 %1651, %v1311
      %v1653 = vpop.permute.xlu0 %1652
      %1655 = vset.pattern.permute.xlu0 1
      %1656 = vperm.xlu0 %1655, %v1312
      %v1657 = vpop.permute.xlu0 %1656
      %1659 = vset.pattern.permute.xlu0 1
      %1660 = vperm.xlu0 %1659, %v1313
      %v1661 = vpop.permute.xlu0 %1660
      %1663 = vset.pattern.permute.xlu0 1
      %1664 = vperm.xlu0 %1663, %v1314
      %v1665 = vpop.permute.xlu0 %1664
      %v1667 = vmul.f32 %v1541, %v374
      %v1668 = vmul.f32 %v1545, %v376
      %v1669 = vmul.f32 %v1549, %v378
      %v1670 = vmul.f32 %v1553, %v380
      %v1671 = vmul.f32 %v1557, %v382
      %v1672 = vmul.f32 %v1561, %v384
      %v1673 = vmul.f32 %v1565, %v386
      %v1674 = vmul.f32 %v1569, %v388
      %v1675 = vmul.f32 %v1573, %v390
      %v1676 = vmul.f32 %v1577, %v392
      %v1677 = vmul.f32 %v1581, %v394
      %v1678 = vmul.f32 %v1585, %v396
      %v1679 = vmul.f32 %v1589, %v398
      %v1680 = vmul.f32 %v1593, %v400
      %v1681 = vmul.f32 %v1597, %v402
      %v1682 = vmul.f32 %v1601, %v404
      %v1683 = vmul.f32 %v1605, %v406
      %v1684 = vmul.f32 %v1609, %v408
      %v1685 = vmul.f32 %v1613, %v410
      %v1686 = vmul.f32 %v1617, %v412
      %v1687 = vmul.f32 %v1621, %v414
      %v1688 = vmul.f32 %v1625, %v416
      %v1689 = vmul.f32 %v1629, %v418
      %v1690 = vmul.f32 %v1633, %v420
      %v1691 = vmul.f32 %v1637, %v422
      %v1692 = vmul.f32 %v1641, %v424
      %v1693 = vmul.f32 %v1645, %v426
      %v1694 = vmul.f32 %v1649, %v428
      %v1695 = vmul.f32 %v1653, %v430
      %v1696 = vmul.f32 %v1657, %v432
      %v1697 = vmul.f32 %v1661, %v434
      %v1698 = vmul.f32 %v1665, %v436
      %1731 = vrot.lane.b32.xlu0 %v1667, 112
      %v1732 = vpop.permute.xlu0 %1731
      %1733 = vrot.lane.b32.xlu0 %v1668, 112
      %v1734 = vpop.permute.xlu0 %1733
      %1735 = vrot.lane.b32.xlu0 %v1669, 112
      %v1736 = vpop.permute.xlu0 %1735
      %1737 = vrot.lane.b32.xlu0 %v1670, 112
      %v1738 = vpop.permute.xlu0 %1737
      %1739 = vrot.lane.b32.xlu0 %v1671, 112
      %v1740 = vpop.permute.xlu0 %1739
      %1741 = vrot.lane.b32.xlu0 %v1672, 112
      %v1742 = vpop.permute.xlu0 %1741
      %1743 = vrot.lane.b32.xlu0 %v1673, 112
      %v1744 = vpop.permute.xlu0 %1743
      %1745 = vrot.lane.b32.xlu0 %v1674, 112
      %v1746 = vpop.permute.xlu0 %1745
      %1747 = vrot.lane.b32.xlu0 %v1675, 112
      %v1748 = vpop.permute.xlu0 %1747
      %1749 = vrot.lane.b32.xlu0 %v1676, 112
      %v1750 = vpop.permute.xlu0 %1749
      %1751 = vrot.lane.b32.xlu0 %v1677, 112
      %v1752 = vpop.permute.xlu0 %1751
      %1753 = vrot.lane.b32.xlu0 %v1678, 112
      %v1754 = vpop.permute.xlu0 %1753
      %1755 = vrot.lane.b32.xlu0 %v1679, 112
      %v1756 = vpop.permute.xlu0 %1755
      %1757 = vrot.lane.b32.xlu0 %v1680, 112
      %v1758 = vpop.permute.xlu0 %1757
      %1759 = vrot.lane.b32.xlu0 %v1681, 112
      %v1760 = vpop.permute.xlu0 %1759
      %1761 = vrot.lane.b32.xlu0 %v1682, 112
      %v1762 = vpop.permute.xlu0 %1761
      %1763 = vrot.lane.b32.xlu0 %v1683, 112
      %v1764 = vpop.permute.xlu0 %1763
      %1765 = vrot.lane.b32.xlu0 %v1684, 112
      %v1766 = vpop.permute.xlu0 %1765
      %1767 = vrot.lane.b32.xlu0 %v1685, 112
      %v1768 = vpop.permute.xlu0 %1767
      %1769 = vrot.lane.b32.xlu0 %v1686, 112
      %v1770 = vpop.permute.xlu0 %1769
      %1771 = vrot.lane.b32.xlu0 %v1687, 112
      %v1772 = vpop.permute.xlu0 %1771
      %1773 = vrot.lane.b32.xlu0 %v1688, 112
      %v1774 = vpop.permute.xlu0 %1773
      %1775 = vrot.lane.b32.xlu0 %v1689, 112
      %v1776 = vpop.permute.xlu0 %1775
      %1777 = vrot.lane.b32.xlu0 %v1690, 112
      %v1778 = vpop.permute.xlu0 %1777
      %1779 = vrot.lane.b32.xlu0 %v1691, 112
      %v1780 = vpop.permute.xlu0 %1779
      %1781 = vrot.lane.b32.xlu0 %v1692, 112
      %v1782 = vpop.permute.xlu0 %1781
      %1783 = vrot.lane.b32.xlu0 %v1693, 112
      %v1784 = vpop.permute.xlu0 %1783
      %1785 = vrot.lane.b32.xlu0 %v1694, 112
      %v1786 = vpop.permute.xlu0 %1785
      %1787 = vrot.lane.b32.xlu0 %v1695, 112
      %v1788 = vpop.permute.xlu0 %1787
      %1789 = vrot.lane.b32.xlu0 %v1696, 112
      %v1790 = vpop.permute.xlu0 %1789
      %1791 = vrot.lane.b32.xlu0 %v1697, 112
      %v1792 = vpop.permute.xlu0 %1791
      %1793 = vrot.lane.b32.xlu0 %v1698, 112
      %v1794 = vpop.permute.xlu0 %1793
      %v1827 = vadd.f32 %v1507, %v1732
      %v1828 = vadd.f32 %v1508, %v1734
      %v1829 = vadd.f32 %v1509, %v1736
      %v1830 = vadd.f32 %v1510, %v1738
      %v1831 = vadd.f32 %v1511, %v1740
      %v1832 = vadd.f32 %v1512, %v1742
      %v1833 = vadd.f32 %v1513, %v1744
      %v1834 = vadd.f32 %v1514, %v1746
      %v1835 = vadd.f32 %v1515, %v1748
      %v1836 = vadd.f32 %v1516, %v1750
      %v1837 = vadd.f32 %v1517, %v1752
      %v1838 = vadd.f32 %v1518, %v1754
      %v1839 = vadd.f32 %v1519, %v1756
      %v1840 = vadd.f32 %v1520, %v1758
      %v1841 = vadd.f32 %v1521, %v1760
      %v1842 = vadd.f32 %v1522, %v1762
      %v1843 = vadd.f32 %v1523, %v1764
      %v1844 = vadd.f32 %v1524, %v1766
      %v1845 = vadd.f32 %v1525, %v1768
      %v1846 = vadd.f32 %v1526, %v1770
      %v1847 = vadd.f32 %v1527, %v1772
      %v1848 = vadd.f32 %v1528, %v1774
      %v1849 = vadd.f32 %v1529, %v1776
      %v1850 = vadd.f32 %v1530, %v1778
      %v1851 = vadd.f32 %v1531, %v1780
      %v1852 = vadd.f32 %v1532, %v1782
      %v1853 = vadd.f32 %v1533, %v1784
      %v1854 = vadd.f32 %v1534, %v1786
      %v1855 = vadd.f32 %v1535, %v1788
      %v1856 = vadd.f32 %v1536, %v1790
      %v1857 = vadd.f32 %v1537, %v1792
      %v1858 = vadd.f32 %v1538, %v1794
      %1859 = vset.pattern.permute.xlu0 2
      %1860 = vperm.xlu0 %1859, %v1283
      %v1861 = vpop.permute.xlu0 %1860
      %1863 = vset.pattern.permute.xlu0 2
      %1864 = vperm.xlu0 %1863, %v1284
      %v1865 = vpop.permute.xlu0 %1864
      %1867 = vset.pattern.permute.xlu0 2
      %1868 = vperm.xlu0 %1867, %v1285
      %v1869 = vpop.permute.xlu0 %1868
      %1871 = vset.pattern.permute.xlu0 2
      %1872 = vperm.xlu0 %1871, %v1286
      %v1873 = vpop.permute.xlu0 %1872
      %1875 = vset.pattern.permute.xlu0 2
      %1876 = vperm.xlu0 %1875, %v1287
      %v1877 = vpop.permute.xlu0 %1876
      %1879 = vset.pattern.permute.xlu0 2
      %1880 = vperm.xlu0 %1879, %v1288
      %v1881 = vpop.permute.xlu0 %1880
      %1883 = vset.pattern.permute.xlu0 2
      %1884 = vperm.xlu0 %1883, %v1289
      %v1885 = vpop.permute.xlu0 %1884
      %1887 = vset.pattern.permute.xlu0 2
      %1888 = vperm.xlu0 %1887, %v1290
      %v1889 = vpop.permute.xlu0 %1888
      %1891 = vset.pattern.permute.xlu0 2
      %1892 = vperm.xlu0 %1891, %v1291
      %v1893 = vpop.permute.xlu0 %1892
      %1895 = vset.pattern.permute.xlu0 2
      %1896 = vperm.xlu0 %1895, %v1292
      %v1897 = vpop.permute.xlu0 %1896
      %1899 = vset.pattern.permute.xlu0 2
      %1900 = vperm.xlu0 %1899, %v1293
      %v1901 = vpop.permute.xlu0 %1900
      %1903 = vset.pattern.permute.xlu0 2
      %1904 = vperm.xlu0 %1903, %v1294
      %v1905 = vpop.permute.xlu0 %1904
      %1907 = vset.pattern.permute.xlu0 2
      %1908 = vperm.xlu0 %1907, %v1295
      %v1909 = vpop.permute.xlu0 %1908
      %1911 = vset.pattern.permute.xlu0 2
      %1912 = vperm.xlu0 %1911, %v1296
      %v1913 = vpop.permute.xlu0 %1912
      %1915 = vset.pattern.permute.xlu0 2
      %1916 = vperm.xlu0 %1915, %v1297
      %v1917 = vpop.permute.xlu0 %1916
      %1919 = vset.pattern.permute.xlu0 2
      %1920 = vperm.xlu0 %1919, %v1298
      %v1921 = vpop.permute.xlu0 %1920
      %1923 = vset.pattern.permute.xlu0 2
      %1924 = vperm.xlu0 %1923, %v1299
      %v1925 = vpop.permute.xlu0 %1924
      %1927 = vset.pattern.permute.xlu0 2
      %1928 = vperm.xlu0 %1927, %v1300
      %v1929 = vpop.permute.xlu0 %1928
      %1931 = vset.pattern.permute.xlu0 2
      %1932 = vperm.xlu0 %1931, %v1301
      %v1933 = vpop.permute.xlu0 %1932
      %1935 = vset.pattern.permute.xlu0 2
      %1936 = vperm.xlu0 %1935, %v1302
      %v1937 = vpop.permute.xlu0 %1936
      %1939 = vset.pattern.permute.xlu0 2
      %1940 = vperm.xlu0 %1939, %v1303
      %v1941 = vpop.permute.xlu0 %1940
      %1943 = vset.pattern.permute.xlu0 2
      %1944 = vperm.xlu0 %1943, %v1304
      %v1945 = vpop.permute.xlu0 %1944
      %1947 = vset.pattern.permute.xlu0 2
      %1948 = vperm.xlu0 %1947, %v1305
      %v1949 = vpop.permute.xlu0 %1948
      %1951 = vset.pattern.permute.xlu0 2
      %1952 = vperm.xlu0 %1951, %v1306
      %v1953 = vpop.permute.xlu0 %1952
      %1955 = vset.pattern.permute.xlu0 2
      %1956 = vperm.xlu0 %1955, %v1307
      %v1957 = vpop.permute.xlu0 %1956
      %1959 = vset.pattern.permute.xlu0 2
      %1960 = vperm.xlu0 %1959, %v1308
      %v1961 = vpop.permute.xlu0 %1960
      %1963 = vset.pattern.permute.xlu0 2
      %1964 = vperm.xlu0 %1963, %v1309
      %v1965 = vpop.permute.xlu0 %1964
      %1967 = vset.pattern.permute.xlu0 2
      %1968 = vperm.xlu0 %1967, %v1310
      %v1969 = vpop.permute.xlu0 %1968
      %1971 = vset.pattern.permute.xlu0 2
      %1972 = vperm.xlu0 %1971, %v1311
      %v1973 = vpop.permute.xlu0 %1972
      %1975 = vset.pattern.permute.xlu0 2
      %1976 = vperm.xlu0 %1975, %v1312
      %v1977 = vpop.permute.xlu0 %1976
      %1979 = vset.pattern.permute.xlu0 2
      %1980 = vperm.xlu0 %1979, %v1313
      %v1981 = vpop.permute.xlu0 %1980
      %1983 = vset.pattern.permute.xlu0 2
      %1984 = vperm.xlu0 %1983, %v1314
      %v1985 = vpop.permute.xlu0 %1984
      %v1987 = vmul.f32 %v1861, %v374
      %v1988 = vmul.f32 %v1865, %v376
      %v1989 = vmul.f32 %v1869, %v378
      %v1990 = vmul.f32 %v1873, %v380
      %v1991 = vmul.f32 %v1877, %v382
      %v1992 = vmul.f32 %v1881, %v384
      %v1993 = vmul.f32 %v1885, %v386
      %v1994 = vmul.f32 %v1889, %v388
      %v1995 = vmul.f32 %v1893, %v390
      %v1996 = vmul.f32 %v1897, %v392
      %v1997 = vmul.f32 %v1901, %v394
      %v1998 = vmul.f32 %v1905, %v396
      %v1999 = vmul.f32 %v1909, %v398
      %v2000 = vmul.f32 %v1913, %v400
      %v2001 = vmul.f32 %v1917, %v402
      %v2002 = vmul.f32 %v1921, %v404
      %v2003 = vmul.f32 %v1925, %v406
      %v2004 = vmul.f32 %v1929, %v408
      %v2005 = vmul.f32 %v1933, %v410
      %v2006 = vmul.f32 %v1937, %v412
      %v2007 = vmul.f32 %v1941, %v414
      %v2008 = vmul.f32 %v1945, %v416
      %v2009 = vmul.f32 %v1949, %v418
      %v2010 = vmul.f32 %v1953, %v420
      %v2011 = vmul.f32 %v1957, %v422
      %v2012 = vmul.f32 %v1961, %v424
      %v2013 = vmul.f32 %v1965, %v426
      %v2014 = vmul.f32 %v1969, %v428
      %v2015 = vmul.f32 %v1973, %v430
      %v2016 = vmul.f32 %v1977, %v432
      %v2017 = vmul.f32 %v1981, %v434
      %v2018 = vmul.f32 %v1985, %v436
      %2051 = vrot.lane.b32.xlu0 %v1987, 96
      %v2052 = vpop.permute.xlu0 %2051
      %2053 = vrot.lane.b32.xlu0 %v1988, 96
      %v2054 = vpop.permute.xlu0 %2053
      %2055 = vrot.lane.b32.xlu0 %v1989, 96
      %v2056 = vpop.permute.xlu0 %2055
      %2057 = vrot.lane.b32.xlu0 %v1990, 96
      %v2058 = vpop.permute.xlu0 %2057
      %2059 = vrot.lane.b32.xlu0 %v1991, 96
      %v2060 = vpop.permute.xlu0 %2059
      %2061 = vrot.lane.b32.xlu0 %v1992, 96
      %v2062 = vpop.permute.xlu0 %2061
      %2063 = vrot.lane.b32.xlu0 %v1993, 96
      %v2064 = vpop.permute.xlu0 %2063
      %2065 = vrot.lane.b32.xlu0 %v1994, 96
      %v2066 = vpop.permute.xlu0 %2065
      %2067 = vrot.lane.b32.xlu0 %v1995, 96
      %v2068 = vpop.permute.xlu0 %2067
      %2069 = vrot.lane.b32.xlu0 %v1996, 96
      %v2070 = vpop.permute.xlu0 %2069
      %2071 = vrot.lane.b32.xlu0 %v1997, 96
      %v2072 = vpop.permute.xlu0 %2071
      %2073 = vrot.lane.b32.xlu0 %v1998, 96
      %v2074 = vpop.permute.xlu0 %2073
      %2075 = vrot.lane.b32.xlu0 %v1999, 96
      %v2076 = vpop.permute.xlu0 %2075
      %2077 = vrot.lane.b32.xlu0 %v2000, 96
      %v2078 = vpop.permute.xlu0 %2077
      %2079 = vrot.lane.b32.xlu0 %v2001, 96
      %v2080 = vpop.permute.xlu0 %2079
      %2081 = vrot.lane.b32.xlu0 %v2002, 96
      %v2082 = vpop.permute.xlu0 %2081
      %2083 = vrot.lane.b32.xlu0 %v2003, 96
      %v2084 = vpop.permute.xlu0 %2083
      %2085 = vrot.lane.b32.xlu0 %v2004, 96
      %v2086 = vpop.permute.xlu0 %2085
      %2087 = vrot.lane.b32.xlu0 %v2005, 96
      %v2088 = vpop.permute.xlu0 %2087
      %2089 = vrot.lane.b32.xlu0 %v2006, 96
      %v2090 = vpop.permute.xlu0 %2089
      %2091 = vrot.lane.b32.xlu0 %v2007, 96
      %v2092 = vpop.permute.xlu0 %2091
      %2093 = vrot.lane.b32.xlu0 %v2008, 96
      %v2094 = vpop.permute.xlu0 %2093
      %2095 = vrot.lane.b32.xlu0 %v2009, 96
      %v2096 = vpop.permute.xlu0 %2095
      %2097 = vrot.lane.b32.xlu0 %v2010, 96
      %v2098 = vpop.permute.xlu0 %2097
      %2099 = vrot.lane.b32.xlu0 %v2011, 96
      %v2100 = vpop.permute.xlu0 %2099
      %2101 = vrot.lane.b32.xlu0 %v2012, 96
      %v2102 = vpop.permute.xlu0 %2101
      %2103 = vrot.lane.b32.xlu0 %v2013, 96
      %v2104 = vpop.permute.xlu0 %2103
      %2105 = vrot.lane.b32.xlu0 %v2014, 96
      %v2106 = vpop.permute.xlu0 %2105
      %2107 = vrot.lane.b32.xlu0 %v2015, 96
      %v2108 = vpop.permute.xlu0 %2107
      %2109 = vrot.lane.b32.xlu0 %v2016, 96
      %v2110 = vpop.permute.xlu0 %2109
      %2111 = vrot.lane.b32.xlu0 %v2017, 96
      %v2112 = vpop.permute.xlu0 %2111
      %2113 = vrot.lane.b32.xlu0 %v2018, 96
      %v2114 = vpop.permute.xlu0 %2113
      %v2147 = vadd.f32 %v1827, %v2052
      %v2148 = vadd.f32 %v1828, %v2054
      %v2149 = vadd.f32 %v1829, %v2056
      %v2150 = vadd.f32 %v1830, %v2058
      %v2151 = vadd.f32 %v1831, %v2060
      %v2152 = vadd.f32 %v1832, %v2062
      %v2153 = vadd.f32 %v1833, %v2064
      %v2154 = vadd.f32 %v1834, %v2066
      %v2155 = vadd.f32 %v1835, %v2068
      %v2156 = vadd.f32 %v1836, %v2070
      %v2157 = vadd.f32 %v1837, %v2072
      %v2158 = vadd.f32 %v1838, %v2074
      %v2159 = vadd.f32 %v1839, %v2076
      %v2160 = vadd.f32 %v1840, %v2078
      %v2161 = vadd.f32 %v1841, %v2080
      %v2162 = vadd.f32 %v1842, %v2082
      %v2163 = vadd.f32 %v1843, %v2084
      %v2164 = vadd.f32 %v1844, %v2086
      %v2165 = vadd.f32 %v1845, %v2088
      %v2166 = vadd.f32 %v1846, %v2090
      %v2167 = vadd.f32 %v1847, %v2092
      %v2168 = vadd.f32 %v1848, %v2094
      %v2169 = vadd.f32 %v1849, %v2096
      %v2170 = vadd.f32 %v1850, %v2098
      %v2171 = vadd.f32 %v1851, %v2100
      %v2172 = vadd.f32 %v1852, %v2102
      %v2173 = vadd.f32 %v1853, %v2104
      %v2174 = vadd.f32 %v1854, %v2106
      %v2175 = vadd.f32 %v1855, %v2108
      %v2176 = vadd.f32 %v1856, %v2110
      %v2177 = vadd.f32 %v1857, %v2112
      %v2178 = vadd.f32 %v1858, %v2114
      %2179 = vset.pattern.permute.xlu0 3
      %2180 = vperm.xlu0 %2179, %v1283
      %v2181 = vpop.permute.xlu0 %2180
      %2183 = vset.pattern.permute.xlu0 3
      %2184 = vperm.xlu0 %2183, %v1284
      %v2185 = vpop.permute.xlu0 %2184
      %2187 = vset.pattern.permute.xlu0 3
      %2188 = vperm.xlu0 %2187, %v1285
      %v2189 = vpop.permute.xlu0 %2188
      %2191 = vset.pattern.permute.xlu0 3
      %2192 = vperm.xlu0 %2191, %v1286
      %v2193 = vpop.permute.xlu0 %2192
      %2195 = vset.pattern.permute.xlu0 3
      %2196 = vperm.xlu0 %2195, %v1287
      %v2197 = vpop.permute.xlu0 %2196
      %2199 = vset.pattern.permute.xlu0 3
      %2200 = vperm.xlu0 %2199, %v1288
      %v2201 = vpop.permute.xlu0 %2200
      %2203 = vset.pattern.permute.xlu0 3
      %2204 = vperm.xlu0 %2203, %v1289
      %v2205 = vpop.permute.xlu0 %2204
      %2207 = vset.pattern.permute.xlu0 3
      %2208 = vperm.xlu0 %2207, %v1290
      %v2209 = vpop.permute.xlu0 %2208
      %2211 = vset.pattern.permute.xlu0 3
      %2212 = vperm.xlu0 %2211, %v1291
      %v2213 = vpop.permute.xlu0 %2212
      %2215 = vset.pattern.permute.xlu0 3
      %2216 = vperm.xlu0 %2215, %v1292
      %v2217 = vpop.permute.xlu0 %2216
      %2219 = vset.pattern.permute.xlu0 3
      %2220 = vperm.xlu0 %2219, %v1293
      %v2221 = vpop.permute.xlu0 %2220
      %2223 = vset.pattern.permute.xlu0 3
      %2224 = vperm.xlu0 %2223, %v1294
      %v2225 = vpop.permute.xlu0 %2224
      %2227 = vset.pattern.permute.xlu0 3
      %2228 = vperm.xlu0 %2227, %v1295
      %v2229 = vpop.permute.xlu0 %2228
      %2231 = vset.pattern.permute.xlu0 3
      %2232 = vperm.xlu0 %2231, %v1296
      %v2233 = vpop.permute.xlu0 %2232
      %2235 = vset.pattern.permute.xlu0 3
      %2236 = vperm.xlu0 %2235, %v1297
      %v2237 = vpop.permute.xlu0 %2236
      %2239 = vset.pattern.permute.xlu0 3
      %2240 = vperm.xlu0 %2239, %v1298
      %v2241 = vpop.permute.xlu0 %2240
      %2243 = vset.pattern.permute.xlu0 3
      %2244 = vperm.xlu0 %2243, %v1299
      %v2245 = vpop.permute.xlu0 %2244
      %2247 = vset.pattern.permute.xlu0 3
      %2248 = vperm.xlu0 %2247, %v1300
      %v2249 = vpop.permute.xlu0 %2248
      %2251 = vset.pattern.permute.xlu0 3
      %2252 = vperm.xlu0 %2251, %v1301
      %v2253 = vpop.permute.xlu0 %2252
      %2255 = vset.pattern.permute.xlu0 3
      %2256 = vperm.xlu0 %2255, %v1302
      %v2257 = vpop.permute.xlu0 %2256
      %2259 = vset.pattern.permute.xlu0 3
      %2260 = vperm.xlu0 %2259, %v1303
      %v2261 = vpop.permute.xlu0 %2260
      %2263 = vset.pattern.permute.xlu0 3
      %2264 = vperm.xlu0 %2263, %v1304
      %v2265 = vpop.permute.xlu0 %2264
      %2267 = vset.pattern.permute.xlu0 3
      %2268 = vperm.xlu0 %2267, %v1305
      %v2269 = vpop.permute.xlu0 %2268
      %2271 = vset.pattern.permute.xlu0 3
      %2272 = vperm.xlu0 %2271, %v1306
      %v2273 = vpop.permute.xlu0 %2272
      %2275 = vset.pattern.permute.xlu0 3
      %2276 = vperm.xlu0 %2275, %v1307
      %v2277 = vpop.permute.xlu0 %2276
      %2279 = vset.pattern.permute.xlu0 3
      %2280 = vperm.xlu0 %2279, %v1308
      %v2281 = vpop.permute.xlu0 %2280
      %2283 = vset.pattern.permute.xlu0 3
      %2284 = vperm.xlu0 %2283, %v1309
      %v2285 = vpop.permute.xlu0 %2284
      %2287 = vset.pattern.permute.xlu0 3
      %2288 = vperm.xlu0 %2287, %v1310
      %v2289 = vpop.permute.xlu0 %2288
      %2291 = vset.pattern.permute.xlu0 3
      %2292 = vperm.xlu0 %2291, %v1311
      %v2293 = vpop.permute.xlu0 %2292
      %2295 = vset.pattern.permute.xlu0 3
      %2296 = vperm.xlu0 %2295, %v1312
      %v2297 = vpop.permute.xlu0 %2296
      %2299 = vset.pattern.permute.xlu0 3
      %2300 = vperm.xlu0 %2299, %v1313
      %v2301 = vpop.permute.xlu0 %2300
      %2303 = vset.pattern.permute.xlu0 3
      %2304 = vperm.xlu0 %2303, %v1314
      %v2305 = vpop.permute.xlu0 %2304
      %v2307 = vmul.f32 %v2181, %v374
      %v2308 = vmul.f32 %v2185, %v376
      %v2309 = vmul.f32 %v2189, %v378
      %v2310 = vmul.f32 %v2193, %v380
      %v2311 = vmul.f32 %v2197, %v382
      %v2312 = vmul.f32 %v2201, %v384
      %v2313 = vmul.f32 %v2205, %v386
      %v2314 = vmul.f32 %v2209, %v388
      %v2315 = vmul.f32 %v2213, %v390
      %v2316 = vmul.f32 %v2217, %v392
      %v2317 = vmul.f32 %v2221, %v394
      %v2318 = vmul.f32 %v2225, %v396
      %v2319 = vmul.f32 %v2229, %v398
      %v2320 = vmul.f32 %v2233, %v400
      %v2321 = vmul.f32 %v2237, %v402
      %v2322 = vmul.f32 %v2241, %v404
      %v2323 = vmul.f32 %v2245, %v406
      %v2324 = vmul.f32 %v2249, %v408
      %v2325 = vmul.f32 %v2253, %v410
      %v2326 = vmul.f32 %v2257, %v412
      %v2327 = vmul.f32 %v2261, %v414
      %v2328 = vmul.f32 %v2265, %v416
      %v2329 = vmul.f32 %v2269, %v418
      %v2330 = vmul.f32 %v2273, %v420
      %v2331 = vmul.f32 %v2277, %v422
      %v2332 = vmul.f32 %v2281, %v424
      %v2333 = vmul.f32 %v2285, %v426
      %v2334 = vmul.f32 %v2289, %v428
      %v2335 = vmul.f32 %v2293, %v430
      %v2336 = vmul.f32 %v2297, %v432
      %v2337 = vmul.f32 %v2301, %v434
      %v2338 = vmul.f32 %v2305, %v436
      %2371 = vrot.lane.b32.xlu0 %v2307, 80
      %v2372 = vpop.permute.xlu0 %2371
      %2373 = vrot.lane.b32.xlu0 %v2308, 80
      %v2374 = vpop.permute.xlu0 %2373
      %2375 = vrot.lane.b32.xlu0 %v2309, 80
      %v2376 = vpop.permute.xlu0 %2375
      %2377 = vrot.lane.b32.xlu0 %v2310, 80
      %v2378 = vpop.permute.xlu0 %2377
      %2379 = vrot.lane.b32.xlu0 %v2311, 80
      %v2380 = vpop.permute.xlu0 %2379
      %2381 = vrot.lane.b32.xlu0 %v2312, 80
      %v2382 = vpop.permute.xlu0 %2381
      %2383 = vrot.lane.b32.xlu0 %v2313, 80
      %v2384 = vpop.permute.xlu0 %2383
      %2385 = vrot.lane.b32.xlu0 %v2314, 80
      %v2386 = vpop.permute.xlu0 %2385
      %2387 = vrot.lane.b32.xlu0 %v2315, 80
      %v2388 = vpop.permute.xlu0 %2387
      %2389 = vrot.lane.b32.xlu0 %v2316, 80
      %v2390 = vpop.permute.xlu0 %2389
      %2391 = vrot.lane.b32.xlu0 %v2317, 80
      %v2392 = vpop.permute.xlu0 %2391
      %2393 = vrot.lane.b32.xlu0 %v2318, 80
      %v2394 = vpop.permute.xlu0 %2393
      %2395 = vrot.lane.b32.xlu0 %v2319, 80
      %v2396 = vpop.permute.xlu0 %2395
      %2397 = vrot.lane.b32.xlu0 %v2320, 80
      %v2398 = vpop.permute.xlu0 %2397
      %2399 = vrot.lane.b32.xlu0 %v2321, 80
      %v2400 = vpop.permute.xlu0 %2399
      %2401 = vrot.lane.b32.xlu0 %v2322, 80
      %v2402 = vpop.permute.xlu0 %2401
      %2403 = vrot.lane.b32.xlu0 %v2323, 80
      %v2404 = vpop.permute.xlu0 %2403
      %2405 = vrot.lane.b32.xlu0 %v2324, 80
      %v2406 = vpop.permute.xlu0 %2405
      %2407 = vrot.lane.b32.xlu0 %v2325, 80
      %v2408 = vpop.permute.xlu0 %2407
      %2409 = vrot.lane.b32.xlu0 %v2326, 80
      %v2410 = vpop.permute.xlu0 %2409
      %2411 = vrot.lane.b32.xlu0 %v2327, 80
      %v2412 = vpop.permute.xlu0 %2411
      %2413 = vrot.lane.b32.xlu0 %v2328, 80
      %v2414 = vpop.permute.xlu0 %2413
      %2415 = vrot.lane.b32.xlu0 %v2329, 80
      %v2416 = vpop.permute.xlu0 %2415
      %2417 = vrot.lane.b32.xlu0 %v2330, 80
      %v2418 = vpop.permute.xlu0 %2417
      %2419 = vrot.lane.b32.xlu0 %v2331, 80
      %v2420 = vpop.permute.xlu0 %2419
      %2421 = vrot.lane.b32.xlu0 %v2332, 80
      %v2422 = vpop.permute.xlu0 %2421
      %2423 = vrot.lane.b32.xlu0 %v2333, 80
      %v2424 = vpop.permute.xlu0 %2423
      %2425 = vrot.lane.b32.xlu0 %v2334, 80
      %v2426 = vpop.permute.xlu0 %2425
      %2427 = vrot.lane.b32.xlu0 %v2335, 80
      %v2428 = vpop.permute.xlu0 %2427
      %2429 = vrot.lane.b32.xlu0 %v2336, 80
      %v2430 = vpop.permute.xlu0 %2429
      %2431 = vrot.lane.b32.xlu0 %v2337, 80
      %v2432 = vpop.permute.xlu0 %2431
      %2433 = vrot.lane.b32.xlu0 %v2338, 80
      %v2434 = vpop.permute.xlu0 %2433
      %v2467 = vadd.f32 %v2147, %v2372
      %v2468 = vadd.f32 %v2148, %v2374
      %v2469 = vadd.f32 %v2149, %v2376
      %v2470 = vadd.f32 %v2150, %v2378
      %v2471 = vadd.f32 %v2151, %v2380
      %v2472 = vadd.f32 %v2152, %v2382
      %v2473 = vadd.f32 %v2153, %v2384
      %v2474 = vadd.f32 %v2154, %v2386
      %v2475 = vadd.f32 %v2155, %v2388
      %v2476 = vadd.f32 %v2156, %v2390
      %v2477 = vadd.f32 %v2157, %v2392
      %v2478 = vadd.f32 %v2158, %v2394
      %v2479 = vadd.f32 %v2159, %v2396
      %v2480 = vadd.f32 %v2160, %v2398
      %v2481 = vadd.f32 %v2161, %v2400
      %v2482 = vadd.f32 %v2162, %v2402
      %v2483 = vadd.f32 %v2163, %v2404
      %v2484 = vadd.f32 %v2164, %v2406
      %v2485 = vadd.f32 %v2165, %v2408
      %v2486 = vadd.f32 %v2166, %v2410
      %v2487 = vadd.f32 %v2167, %v2412
      %v2488 = vadd.f32 %v2168, %v2414
      %v2489 = vadd.f32 %v2169, %v2416
      %v2490 = vadd.f32 %v2170, %v2418
      %v2491 = vadd.f32 %v2171, %v2420
      %v2492 = vadd.f32 %v2172, %v2422
      %v2493 = vadd.f32 %v2173, %v2424
      %v2494 = vadd.f32 %v2174, %v2426
      %v2495 = vadd.f32 %v2175, %v2428
      %v2496 = vadd.f32 %v2176, %v2430
      %v2497 = vadd.f32 %v2177, %v2432
      %v2498 = vadd.f32 %v2178, %v2434
      %2499 = vset.pattern.permute.xlu0 4
      %2500 = vperm.xlu0 %2499, %v1283
      %v2501 = vpop.permute.xlu0 %2500
      %2503 = vset.pattern.permute.xlu0 4
      %2504 = vperm.xlu0 %2503, %v1284
      %v2505 = vpop.permute.xlu0 %2504
      %2507 = vset.pattern.permute.xlu0 4
      %2508 = vperm.xlu0 %2507, %v1285
      %v2509 = vpop.permute.xlu0 %2508
      %2511 = vset.pattern.permute.xlu0 4
      %2512 = vperm.xlu0 %2511, %v1286
      %v2513 = vpop.permute.xlu0 %2512
      %2515 = vset.pattern.permute.xlu0 4
      %2516 = vperm.xlu0 %2515, %v1287
      %v2517 = vpop.permute.xlu0 %2516
      %2519 = vset.pattern.permute.xlu0 4
      %2520 = vperm.xlu0 %2519, %v1288
      %v2521 = vpop.permute.xlu0 %2520
      %2523 = vset.pattern.permute.xlu0 4
      %2524 = vperm.xlu0 %2523, %v1289
      %v2525 = vpop.permute.xlu0 %2524
      %2527 = vset.pattern.permute.xlu0 4
      %2528 = vperm.xlu0 %2527, %v1290
      %v2529 = vpop.permute.xlu0 %2528
      %2531 = vset.pattern.permute.xlu0 4
      %2532 = vperm.xlu0 %2531, %v1291
      %v2533 = vpop.permute.xlu0 %2532
      %2535 = vset.pattern.permute.xlu0 4
      %2536 = vperm.xlu0 %2535, %v1292
      %v2537 = vpop.permute.xlu0 %2536
      %2539 = vset.pattern.permute.xlu0 4
      %2540 = vperm.xlu0 %2539, %v1293
      %v2541 = vpop.permute.xlu0 %2540
      %2543 = vset.pattern.permute.xlu0 4
      %2544 = vperm.xlu0 %2543, %v1294
      %v2545 = vpop.permute.xlu0 %2544
      %2547 = vset.pattern.permute.xlu0 4
      %2548 = vperm.xlu0 %2547, %v1295
      %v2549 = vpop.permute.xlu0 %2548
      %2551 = vset.pattern.permute.xlu0 4
      %2552 = vperm.xlu0 %2551, %v1296
      %v2553 = vpop.permute.xlu0 %2552
      %2555 = vset.pattern.permute.xlu0 4
      %2556 = vperm.xlu0 %2555, %v1297
      %v2557 = vpop.permute.xlu0 %2556
      %2559 = vset.pattern.permute.xlu0 4
      %2560 = vperm.xlu0 %2559, %v1298
      %v2561 = vpop.permute.xlu0 %2560
      %2563 = vset.pattern.permute.xlu0 4
      %2564 = vperm.xlu0 %2563, %v1299
      %v2565 = vpop.permute.xlu0 %2564
      %2567 = vset.pattern.permute.xlu0 4
      %2568 = vperm.xlu0 %2567, %v1300
      %v2569 = vpop.permute.xlu0 %2568
      %2571 = vset.pattern.permute.xlu0 4
      %2572 = vperm.xlu0 %2571, %v1301
      %v2573 = vpop.permute.xlu0 %2572
      %2575 = vset.pattern.permute.xlu0 4
      %2576 = vperm.xlu0 %2575, %v1302
      %v2577 = vpop.permute.xlu0 %2576
      %2579 = vset.pattern.permute.xlu0 4
      %2580 = vperm.xlu0 %2579, %v1303
      %v2581 = vpop.permute.xlu0 %2580
      %2583 = vset.pattern.permute.xlu0 4
      %2584 = vperm.xlu0 %2583, %v1304
      %v2585 = vpop.permute.xlu0 %2584
      %2587 = vset.pattern.permute.xlu0 4
      %2588 = vperm.xlu0 %2587, %v1305
      %v2589 = vpop.permute.xlu0 %2588
      %2591 = vset.pattern.permute.xlu0 4
      %2592 = vperm.xlu0 %2591, %v1306
      %v2593 = vpop.permute.xlu0 %2592
      %2595 = vset.pattern.permute.xlu0 4
      %2596 = vperm.xlu0 %2595, %v1307
      %v2597 = vpop.permute.xlu0 %2596
      %2599 = vset.pattern.permute.xlu0 4
      %2600 = vperm.xlu0 %2599, %v1308
      %v2601 = vpop.permute.xlu0 %2600
      %2603 = vset.pattern.permute.xlu0 4
      %2604 = vperm.xlu0 %2603, %v1309
      %v2605 = vpop.permute.xlu0 %2604
      %2607 = vset.pattern.permute.xlu0 4
      %2608 = vperm.xlu0 %2607, %v1310
      %v2609 = vpop.permute.xlu0 %2608
      %2611 = vset.pattern.permute.xlu0 4
      %2612 = vperm.xlu0 %2611, %v1311
      %v2613 = vpop.permute.xlu0 %2612
      %2615 = vset.pattern.permute.xlu0 4
      %2616 = vperm.xlu0 %2615, %v1312
      %v2617 = vpop.permute.xlu0 %2616
      %2619 = vset.pattern.permute.xlu0 4
      %2620 = vperm.xlu0 %2619, %v1313
      %v2621 = vpop.permute.xlu0 %2620
      %2623 = vset.pattern.permute.xlu0 4
      %2624 = vperm.xlu0 %2623, %v1314
      %v2625 = vpop.permute.xlu0 %2624
      %v2627 = vmul.f32 %v2501, %v374
      %v2628 = vmul.f32 %v2505, %v376
      %v2629 = vmul.f32 %v2509, %v378
      %v2630 = vmul.f32 %v2513, %v380
      %v2631 = vmul.f32 %v2517, %v382
      %v2632 = vmul.f32 %v2521, %v384
      %v2633 = vmul.f32 %v2525, %v386
      %v2634 = vmul.f32 %v2529, %v388
      %v2635 = vmul.f32 %v2533, %v390
      %v2636 = vmul.f32 %v2537, %v392
      %v2637 = vmul.f32 %v2541, %v394
      %v2638 = vmul.f32 %v2545, %v396
      %v2639 = vmul.f32 %v2549, %v398
      %v2640 = vmul.f32 %v2553, %v400
      %v2641 = vmul.f32 %v2557, %v402
      %v2642 = vmul.f32 %v2561, %v404
      %v2643 = vmul.f32 %v2565, %v406
      %v2644 = vmul.f32 %v2569, %v408
      %v2645 = vmul.f32 %v2573, %v410
      %v2646 = vmul.f32 %v2577, %v412
      %v2647 = vmul.f32 %v2581, %v414
      %v2648 = vmul.f32 %v2585, %v416
      %v2649 = vmul.f32 %v2589, %v418
      %v2650 = vmul.f32 %v2593, %v420
      %v2651 = vmul.f32 %v2597, %v422
      %v2652 = vmul.f32 %v2601, %v424
      %v2653 = vmul.f32 %v2605, %v426
      %v2654 = vmul.f32 %v2609, %v428
      %v2655 = vmul.f32 %v2613, %v430
      %v2656 = vmul.f32 %v2617, %v432
      %v2657 = vmul.f32 %v2621, %v434
      %v2658 = vmul.f32 %v2625, %v436
      %2691 = vrot.lane.b32.xlu0 %v2627, 64
      %v2692 = vpop.permute.xlu0 %2691
      %2693 = vrot.lane.b32.xlu0 %v2628, 64
      %v2694 = vpop.permute.xlu0 %2693
      %2695 = vrot.lane.b32.xlu0 %v2629, 64
      %v2696 = vpop.permute.xlu0 %2695
      %2697 = vrot.lane.b32.xlu0 %v2630, 64
      %v2698 = vpop.permute.xlu0 %2697
      %2699 = vrot.lane.b32.xlu0 %v2631, 64
      %v2700 = vpop.permute.xlu0 %2699
      %2701 = vrot.lane.b32.xlu0 %v2632, 64
      %v2702 = vpop.permute.xlu0 %2701
      %2703 = vrot.lane.b32.xlu0 %v2633, 64
      %v2704 = vpop.permute.xlu0 %2703
      %2705 = vrot.lane.b32.xlu0 %v2634, 64
      %v2706 = vpop.permute.xlu0 %2705
      %2707 = vrot.lane.b32.xlu0 %v2635, 64
      %v2708 = vpop.permute.xlu0 %2707
      %2709 = vrot.lane.b32.xlu0 %v2636, 64
      %v2710 = vpop.permute.xlu0 %2709
      %2711 = vrot.lane.b32.xlu0 %v2637, 64
      %v2712 = vpop.permute.xlu0 %2711
      %2713 = vrot.lane.b32.xlu0 %v2638, 64
      %v2714 = vpop.permute.xlu0 %2713
      %2715 = vrot.lane.b32.xlu0 %v2639, 64
      %v2716 = vpop.permute.xlu0 %2715
      %2717 = vrot.lane.b32.xlu0 %v2640, 64
      %v2718 = vpop.permute.xlu0 %2717
      %2719 = vrot.lane.b32.xlu0 %v2641, 64
      %v2720 = vpop.permute.xlu0 %2719
      %2721 = vrot.lane.b32.xlu0 %v2642, 64
      %v2722 = vpop.permute.xlu0 %2721
      %2723 = vrot.lane.b32.xlu0 %v2643, 64
      %v2724 = vpop.permute.xlu0 %2723
      %2725 = vrot.lane.b32.xlu0 %v2644, 64
      %v2726 = vpop.permute.xlu0 %2725
      %2727 = vrot.lane.b32.xlu0 %v2645, 64
      %v2728 = vpop.permute.xlu0 %2727
      %2729 = vrot.lane.b32.xlu0 %v2646, 64
      %v2730 = vpop.permute.xlu0 %2729
      %2731 = vrot.lane.b32.xlu0 %v2647, 64
      %v2732 = vpop.permute.xlu0 %2731
      %2733 = vrot.lane.b32.xlu0 %v2648, 64
      %v2734 = vpop.permute.xlu0 %2733
      %2735 = vrot.lane.b32.xlu0 %v2649, 64
      %v2736 = vpop.permute.xlu0 %2735
      %2737 = vrot.lane.b32.xlu0 %v2650, 64
      %v2738 = vpop.permute.xlu0 %2737
      %2739 = vrot.lane.b32.xlu0 %v2651, 64
      %v2740 = vpop.permute.xlu0 %2739
      %2741 = vrot.lane.b32.xlu0 %v2652, 64
      %v2742 = vpop.permute.xlu0 %2741
      %2743 = vrot.lane.b32.xlu0 %v2653, 64
      %v2744 = vpop.permute.xlu0 %2743
      %2745 = vrot.lane.b32.xlu0 %v2654, 64
      %v2746 = vpop.permute.xlu0 %2745
      %2747 = vrot.lane.b32.xlu0 %v2655, 64
      %v2748 = vpop.permute.xlu0 %2747
      %2749 = vrot.lane.b32.xlu0 %v2656, 64
      %v2750 = vpop.permute.xlu0 %2749
      %2751 = vrot.lane.b32.xlu0 %v2657, 64
      %v2752 = vpop.permute.xlu0 %2751
      %2753 = vrot.lane.b32.xlu0 %v2658, 64
      %v2754 = vpop.permute.xlu0 %2753
      %v2787 = vadd.f32 %v2467, %v2692
      %v2788 = vadd.f32 %v2468, %v2694
      %v2789 = vadd.f32 %v2469, %v2696
      %v2790 = vadd.f32 %v2470, %v2698
      %v2791 = vadd.f32 %v2471, %v2700
      %v2792 = vadd.f32 %v2472, %v2702
      %v2793 = vadd.f32 %v2473, %v2704
      %v2794 = vadd.f32 %v2474, %v2706
      %v2795 = vadd.f32 %v2475, %v2708
      %v2796 = vadd.f32 %v2476, %v2710
      %v2797 = vadd.f32 %v2477, %v2712
      %v2798 = vadd.f32 %v2478, %v2714
      %v2799 = vadd.f32 %v2479, %v2716
      %v2800 = vadd.f32 %v2480, %v2718
      %v2801 = vadd.f32 %v2481, %v2720
      %v2802 = vadd.f32 %v2482, %v2722
      %v2803 = vadd.f32 %v2483, %v2724
      %v2804 = vadd.f32 %v2484, %v2726
      %v2805 = vadd.f32 %v2485, %v2728
      %v2806 = vadd.f32 %v2486, %v2730
      %v2807 = vadd.f32 %v2487, %v2732
      %v2808 = vadd.f32 %v2488, %v2734
      %v2809 = vadd.f32 %v2489, %v2736
      %v2810 = vadd.f32 %v2490, %v2738
      %v2811 = vadd.f32 %v2491, %v2740
      %v2812 = vadd.f32 %v2492, %v2742
      %v2813 = vadd.f32 %v2493, %v2744
      %v2814 = vadd.f32 %v2494, %v2746
      %v2815 = vadd.f32 %v2495, %v2748
      %v2816 = vadd.f32 %v2496, %v2750
      %v2817 = vadd.f32 %v2497, %v2752
      %v2818 = vadd.f32 %v2498, %v2754
      %2819 = vset.pattern.permute.xlu0 5
      %2820 = vperm.xlu0 %2819, %v1283
      %v2821 = vpop.permute.xlu0 %2820
      %2823 = vset.pattern.permute.xlu0 5
      %2824 = vperm.xlu0 %2823, %v1284
      %v2825 = vpop.permute.xlu0 %2824
      %2827 = vset.pattern.permute.xlu0 5
      %2828 = vperm.xlu0 %2827, %v1285
      %v2829 = vpop.permute.xlu0 %2828
      %2831 = vset.pattern.permute.xlu0 5
      %2832 = vperm.xlu0 %2831, %v1286
      %v2833 = vpop.permute.xlu0 %2832
      %2835 = vset.pattern.permute.xlu0 5
      %2836 = vperm.xlu0 %2835, %v1287
      %v2837 = vpop.permute.xlu0 %2836
      %2839 = vset.pattern.permute.xlu0 5
      %2840 = vperm.xlu0 %2839, %v1288
      %v2841 = vpop.permute.xlu0 %2840
      %2843 = vset.pattern.permute.xlu0 5
      %2844 = vperm.xlu0 %2843, %v1289
      %v2845 = vpop.permute.xlu0 %2844
      %2847 = vset.pattern.permute.xlu0 5
      %2848 = vperm.xlu0 %2847, %v1290
      %v2849 = vpop.permute.xlu0 %2848
      %2851 = vset.pattern.permute.xlu0 5
      %2852 = vperm.xlu0 %2851, %v1291
      %v2853 = vpop.permute.xlu0 %2852
      %2855 = vset.pattern.permute.xlu0 5
      %2856 = vperm.xlu0 %2855, %v1292
      %v2857 = vpop.permute.xlu0 %2856
      %2859 = vset.pattern.permute.xlu0 5
      %2860 = vperm.xlu0 %2859, %v1293
      %v2861 = vpop.permute.xlu0 %2860
      %2863 = vset.pattern.permute.xlu0 5
      %2864 = vperm.xlu0 %2863, %v1294
      %v2865 = vpop.permute.xlu0 %2864
      %2867 = vset.pattern.permute.xlu0 5
      %2868 = vperm.xlu0 %2867, %v1295
      %v2869 = vpop.permute.xlu0 %2868
      %2871 = vset.pattern.permute.xlu0 5
      %2872 = vperm.xlu0 %2871, %v1296
      %v2873 = vpop.permute.xlu0 %2872
      %2875 = vset.pattern.permute.xlu0 5
      %2876 = vperm.xlu0 %2875, %v1297
      %v2877 = vpop.permute.xlu0 %2876
      %2879 = vset.pattern.permute.xlu0 5
      %2880 = vperm.xlu0 %2879, %v1298
      %v2881 = vpop.permute.xlu0 %2880
      %2883 = vset.pattern.permute.xlu0 5
      %2884 = vperm.xlu0 %2883, %v1299
      %v2885 = vpop.permute.xlu0 %2884
      %2887 = vset.pattern.permute.xlu0 5
      %2888 = vperm.xlu0 %2887, %v1300
      %v2889 = vpop.permute.xlu0 %2888
      %2891 = vset.pattern.permute.xlu0 5
      %2892 = vperm.xlu0 %2891, %v1301
      %v2893 = vpop.permute.xlu0 %2892
      %2895 = vset.pattern.permute.xlu0 5
      %2896 = vperm.xlu0 %2895, %v1302
      %v2897 = vpop.permute.xlu0 %2896
      %2899 = vset.pattern.permute.xlu0 5
      %2900 = vperm.xlu0 %2899, %v1303
      %v2901 = vpop.permute.xlu0 %2900
      %2903 = vset.pattern.permute.xlu0 5
      %2904 = vperm.xlu0 %2903, %v1304
      %v2905 = vpop.permute.xlu0 %2904
      %2907 = vset.pattern.permute.xlu0 5
      %2908 = vperm.xlu0 %2907, %v1305
      %v2909 = vpop.permute.xlu0 %2908
      %2911 = vset.pattern.permute.xlu0 5
      %2912 = vperm.xlu0 %2911, %v1306
      %v2913 = vpop.permute.xlu0 %2912
      %2915 = vset.pattern.permute.xlu0 5
      %2916 = vperm.xlu0 %2915, %v1307
      %v2917 = vpop.permute.xlu0 %2916
      %2919 = vset.pattern.permute.xlu0 5
      %2920 = vperm.xlu0 %2919, %v1308
      %v2921 = vpop.permute.xlu0 %2920
      %2923 = vset.pattern.permute.xlu0 5
      %2924 = vperm.xlu0 %2923, %v1309
      %v2925 = vpop.permute.xlu0 %2924
      %2927 = vset.pattern.permute.xlu0 5
      %2928 = vperm.xlu0 %2927, %v1310
      %v2929 = vpop.permute.xlu0 %2928
      %2931 = vset.pattern.permute.xlu0 5
      %2932 = vperm.xlu0 %2931, %v1311
      %v2933 = vpop.permute.xlu0 %2932
      %2935 = vset.pattern.permute.xlu0 5
      %2936 = vperm.xlu0 %2935, %v1312
      %v2937 = vpop.permute.xlu0 %2936
      %2939 = vset.pattern.permute.xlu0 5
      %2940 = vperm.xlu0 %2939, %v1313
      %v2941 = vpop.permute.xlu0 %2940
      %2943 = vset.pattern.permute.xlu0 5
      %2944 = vperm.xlu0 %2943, %v1314
      %v2945 = vpop.permute.xlu0 %2944
      %v2947 = vmul.f32 %v2821, %v374
      %v2948 = vmul.f32 %v2825, %v376
      %v2949 = vmul.f32 %v2829, %v378
      %v2950 = vmul.f32 %v2833, %v380
      %v2951 = vmul.f32 %v2837, %v382
      %v2952 = vmul.f32 %v2841, %v384
      %v2953 = vmul.f32 %v2845, %v386
      %v2954 = vmul.f32 %v2849, %v388
      %v2955 = vmul.f32 %v2853, %v390
      %v2956 = vmul.f32 %v2857, %v392
      %v2957 = vmul.f32 %v2861, %v394
      %v2958 = vmul.f32 %v2865, %v396
      %v2959 = vmul.f32 %v2869, %v398
      %v2960 = vmul.f32 %v2873, %v400
      %v2961 = vmul.f32 %v2877, %v402
      %v2962 = vmul.f32 %v2881, %v404
      %v2963 = vmul.f32 %v2885, %v406
      %v2964 = vmul.f32 %v2889, %v408
      %v2965 = vmul.f32 %v2893, %v410
      %v2966 = vmul.f32 %v2897, %v412
      %v2967 = vmul.f32 %v2901, %v414
      %v2968 = vmul.f32 %v2905, %v416
      %v2969 = vmul.f32 %v2909, %v418
      %v2970 = vmul.f32 %v2913, %v420
      %v2971 = vmul.f32 %v2917, %v422
      %v2972 = vmul.f32 %v2921, %v424
      %v2973 = vmul.f32 %v2925, %v426
      %v2974 = vmul.f32 %v2929, %v428
      %v2975 = vmul.f32 %v2933, %v430
      %v2976 = vmul.f32 %v2937, %v432
      %v2977 = vmul.f32 %v2941, %v434
      %v2978 = vmul.f32 %v2945, %v436
      %3011 = vrot.lane.b32.xlu0 %v2947, 48
      %v3012 = vpop.permute.xlu0 %3011
      %3013 = vrot.lane.b32.xlu0 %v2948, 48
      %v3014 = vpop.permute.xlu0 %3013
      %3015 = vrot.lane.b32.xlu0 %v2949, 48
      %v3016 = vpop.permute.xlu0 %3015
      %3017 = vrot.lane.b32.xlu0 %v2950, 48
      %v3018 = vpop.permute.xlu0 %3017
      %3019 = vrot.lane.b32.xlu0 %v2951, 48
      %v3020 = vpop.permute.xlu0 %3019
      %3021 = vrot.lane.b32.xlu0 %v2952, 48
      %v3022 = vpop.permute.xlu0 %3021
      %3023 = vrot.lane.b32.xlu0 %v2953, 48
      %v3024 = vpop.permute.xlu0 %3023
      %3025 = vrot.lane.b32.xlu0 %v2954, 48
      %v3026 = vpop.permute.xlu0 %3025
      %3027 = vrot.lane.b32.xlu0 %v2955, 48
      %v3028 = vpop.permute.xlu0 %3027
      %3029 = vrot.lane.b32.xlu0 %v2956, 48
      %v3030 = vpop.permute.xlu0 %3029
      %3031 = vrot.lane.b32.xlu0 %v2957, 48
      %v3032 = vpop.permute.xlu0 %3031
      %3033 = vrot.lane.b32.xlu0 %v2958, 48
      %v3034 = vpop.permute.xlu0 %3033
      %3035 = vrot.lane.b32.xlu0 %v2959, 48
      %v3036 = vpop.permute.xlu0 %3035
      %3037 = vrot.lane.b32.xlu0 %v2960, 48
      %v3038 = vpop.permute.xlu0 %3037
      %3039 = vrot.lane.b32.xlu0 %v2961, 48
      %v3040 = vpop.permute.xlu0 %3039
      %3041 = vrot.lane.b32.xlu0 %v2962, 48
      %v3042 = vpop.permute.xlu0 %3041
      %3043 = vrot.lane.b32.xlu0 %v2963, 48
      %v3044 = vpop.permute.xlu0 %3043
      %3045 = vrot.lane.b32.xlu0 %v2964, 48
      %v3046 = vpop.permute.xlu0 %3045
      %3047 = vrot.lane.b32.xlu0 %v2965, 48
      %v3048 = vpop.permute.xlu0 %3047
      %3049 = vrot.lane.b32.xlu0 %v2966, 48
      %v3050 = vpop.permute.xlu0 %3049
      %3051 = vrot.lane.b32.xlu0 %v2967, 48
      %v3052 = vpop.permute.xlu0 %3051
      %3053 = vrot.lane.b32.xlu0 %v2968, 48
      %v3054 = vpop.permute.xlu0 %3053
      %3055 = vrot.lane.b32.xlu0 %v2969, 48
      %v3056 = vpop.permute.xlu0 %3055
      %3057 = vrot.lane.b32.xlu0 %v2970, 48
      %v3058 = vpop.permute.xlu0 %3057
      %3059 = vrot.lane.b32.xlu0 %v2971, 48
      %v3060 = vpop.permute.xlu0 %3059
      %3061 = vrot.lane.b32.xlu0 %v2972, 48
      %v3062 = vpop.permute.xlu0 %3061
      %3063 = vrot.lane.b32.xlu0 %v2973, 48
      %v3064 = vpop.permute.xlu0 %3063
      %3065 = vrot.lane.b32.xlu0 %v2974, 48
      %v3066 = vpop.permute.xlu0 %3065
      %3067 = vrot.lane.b32.xlu0 %v2975, 48
      %v3068 = vpop.permute.xlu0 %3067
      %3069 = vrot.lane.b32.xlu0 %v2976, 48
      %v3070 = vpop.permute.xlu0 %3069
      %3071 = vrot.lane.b32.xlu0 %v2977, 48
      %v3072 = vpop.permute.xlu0 %3071
      %3073 = vrot.lane.b32.xlu0 %v2978, 48
      %v3074 = vpop.permute.xlu0 %3073
      %v3107 = vadd.f32 %v2787, %v3012
      %v3108 = vadd.f32 %v2788, %v3014
      %v3109 = vadd.f32 %v2789, %v3016
      %v3110 = vadd.f32 %v2790, %v3018
      %v3111 = vadd.f32 %v2791, %v3020
      %v3112 = vadd.f32 %v2792, %v3022
      %v3113 = vadd.f32 %v2793, %v3024
      %v3114 = vadd.f32 %v2794, %v3026
      %v3115 = vadd.f32 %v2795, %v3028
      %v3116 = vadd.f32 %v2796, %v3030
      %v3117 = vadd.f32 %v2797, %v3032
      %v3118 = vadd.f32 %v2798, %v3034
      %v3119 = vadd.f32 %v2799, %v3036
      %v3120 = vadd.f32 %v2800, %v3038
      %v3121 = vadd.f32 %v2801, %v3040
      %v3122 = vadd.f32 %v2802, %v3042
      %v3123 = vadd.f32 %v2803, %v3044
      %v3124 = vadd.f32 %v2804, %v3046
      %v3125 = vadd.f32 %v2805, %v3048
      %v3126 = vadd.f32 %v2806, %v3050
      %v3127 = vadd.f32 %v2807, %v3052
      %v3128 = vadd.f32 %v2808, %v3054
      %v3129 = vadd.f32 %v2809, %v3056
      %v3130 = vadd.f32 %v2810, %v3058
      %v3131 = vadd.f32 %v2811, %v3060
      %v3132 = vadd.f32 %v2812, %v3062
      %v3133 = vadd.f32 %v2813, %v3064
      %v3134 = vadd.f32 %v2814, %v3066
      %v3135 = vadd.f32 %v2815, %v3068
      %v3136 = vadd.f32 %v2816, %v3070
      %v3137 = vadd.f32 %v2817, %v3072
      %v3138 = vadd.f32 %v2818, %v3074
      %3139 = vset.pattern.permute.xlu0 6
      %3140 = vperm.xlu0 %3139, %v1283
      %v3141 = vpop.permute.xlu0 %3140
      %3143 = vset.pattern.permute.xlu0 6
      %3144 = vperm.xlu0 %3143, %v1284
      %v3145 = vpop.permute.xlu0 %3144
      %3147 = vset.pattern.permute.xlu0 6
      %3148 = vperm.xlu0 %3147, %v1285
      %v3149 = vpop.permute.xlu0 %3148
      %3151 = vset.pattern.permute.xlu0 6
      %3152 = vperm.xlu0 %3151, %v1286
      %v3153 = vpop.permute.xlu0 %3152
      %3155 = vset.pattern.permute.xlu0 6
      %3156 = vperm.xlu0 %3155, %v1287
      %v3157 = vpop.permute.xlu0 %3156
      %3159 = vset.pattern.permute.xlu0 6
      %3160 = vperm.xlu0 %3159, %v1288
      %v3161 = vpop.permute.xlu0 %3160
      %3163 = vset.pattern.permute.xlu0 6
      %3164 = vperm.xlu0 %3163, %v1289
      %v3165 = vpop.permute.xlu0 %3164
      %3167 = vset.pattern.permute.xlu0 6
      %3168 = vperm.xlu0 %3167, %v1290
      %v3169 = vpop.permute.xlu0 %3168
      %3171 = vset.pattern.permute.xlu0 6
      %3172 = vperm.xlu0 %3171, %v1291
      %v3173 = vpop.permute.xlu0 %3172
      %3175 = vset.pattern.permute.xlu0 6
      %3176 = vperm.xlu0 %3175, %v1292
      %v3177 = vpop.permute.xlu0 %3176
      %3179 = vset.pattern.permute.xlu0 6
      %3180 = vperm.xlu0 %3179, %v1293
      %v3181 = vpop.permute.xlu0 %3180
      %3183 = vset.pattern.permute.xlu0 6
      %3184 = vperm.xlu0 %3183, %v1294
      %v3185 = vpop.permute.xlu0 %3184
      %3187 = vset.pattern.permute.xlu0 6
      %3188 = vperm.xlu0 %3187, %v1295
      %v3189 = vpop.permute.xlu0 %3188
      %3191 = vset.pattern.permute.xlu0 6
      %3192 = vperm.xlu0 %3191, %v1296
      %v3193 = vpop.permute.xlu0 %3192
      %3195 = vset.pattern.permute.xlu0 6
      %3196 = vperm.xlu0 %3195, %v1297
      %v3197 = vpop.permute.xlu0 %3196
      %3199 = vset.pattern.permute.xlu0 6
      %3200 = vperm.xlu0 %3199, %v1298
      %v3201 = vpop.permute.xlu0 %3200
      %3203 = vset.pattern.permute.xlu0 6
      %3204 = vperm.xlu0 %3203, %v1299
      %v3205 = vpop.permute.xlu0 %3204
      %3207 = vset.pattern.permute.xlu0 6
      %3208 = vperm.xlu0 %3207, %v1300
      %v3209 = vpop.permute.xlu0 %3208
      %3211 = vset.pattern.permute.xlu0 6
      %3212 = vperm.xlu0 %3211, %v1301
      %v3213 = vpop.permute.xlu0 %3212
      %3215 = vset.pattern.permute.xlu0 6
      %3216 = vperm.xlu0 %3215, %v1302
      %v3217 = vpop.permute.xlu0 %3216
      %3219 = vset.pattern.permute.xlu0 6
      %3220 = vperm.xlu0 %3219, %v1303
      %v3221 = vpop.permute.xlu0 %3220
      %3223 = vset.pattern.permute.xlu0 6
      %3224 = vperm.xlu0 %3223, %v1304
      %v3225 = vpop.permute.xlu0 %3224
      %3227 = vset.pattern.permute.xlu0 6
      %3228 = vperm.xlu0 %3227, %v1305
      %v3229 = vpop.permute.xlu0 %3228
      %3231 = vset.pattern.permute.xlu0 6
      %3232 = vperm.xlu0 %3231, %v1306
      %v3233 = vpop.permute.xlu0 %3232
      %3235 = vset.pattern.permute.xlu0 6
      %3236 = vperm.xlu0 %3235, %v1307
      %v3237 = vpop.permute.xlu0 %3236
      %3239 = vset.pattern.permute.xlu0 6
      %3240 = vperm.xlu0 %3239, %v1308
      %v3241 = vpop.permute.xlu0 %3240
      %3243 = vset.pattern.permute.xlu0 6
      %3244 = vperm.xlu0 %3243, %v1309
      %v3245 = vpop.permute.xlu0 %3244
      %3247 = vset.pattern.permute.xlu0 6
      %3248 = vperm.xlu0 %3247, %v1310
      %v3249 = vpop.permute.xlu0 %3248
      %3251 = vset.pattern.permute.xlu0 6
      %3252 = vperm.xlu0 %3251, %v1311
      %v3253 = vpop.permute.xlu0 %3252
      %3255 = vset.pattern.permute.xlu0 6
      %3256 = vperm.xlu0 %3255, %v1312
      %v3257 = vpop.permute.xlu0 %3256
      %3259 = vset.pattern.permute.xlu0 6
      %3260 = vperm.xlu0 %3259, %v1313
      %v3261 = vpop.permute.xlu0 %3260
      %3263 = vset.pattern.permute.xlu0 6
      %3264 = vperm.xlu0 %3263, %v1314
      %v3265 = vpop.permute.xlu0 %3264
      %v3267 = vmul.f32 %v3141, %v374
      %v3268 = vmul.f32 %v3145, %v376
      %v3269 = vmul.f32 %v3149, %v378
      %v3270 = vmul.f32 %v3153, %v380
      %v3271 = vmul.f32 %v3157, %v382
      %v3272 = vmul.f32 %v3161, %v384
      %v3273 = vmul.f32 %v3165, %v386
      %v3274 = vmul.f32 %v3169, %v388
      %v3275 = vmul.f32 %v3173, %v390
      %v3276 = vmul.f32 %v3177, %v392
      %v3277 = vmul.f32 %v3181, %v394
      %v3278 = vmul.f32 %v3185, %v396
      %v3279 = vmul.f32 %v3189, %v398
      %v3280 = vmul.f32 %v3193, %v400
      %v3281 = vmul.f32 %v3197, %v402
      %v3282 = vmul.f32 %v3201, %v404
      %v3283 = vmul.f32 %v3205, %v406
      %v3284 = vmul.f32 %v3209, %v408
      %v3285 = vmul.f32 %v3213, %v410
      %v3286 = vmul.f32 %v3217, %v412
      %v3287 = vmul.f32 %v3221, %v414
      %v3288 = vmul.f32 %v3225, %v416
      %v3289 = vmul.f32 %v3229, %v418
      %v3290 = vmul.f32 %v3233, %v420
      %v3291 = vmul.f32 %v3237, %v422
      %v3292 = vmul.f32 %v3241, %v424
      %v3293 = vmul.f32 %v3245, %v426
      %v3294 = vmul.f32 %v3249, %v428
      %v3295 = vmul.f32 %v3253, %v430
      %v3296 = vmul.f32 %v3257, %v432
      %v3297 = vmul.f32 %v3261, %v434
      %v3298 = vmul.f32 %v3265, %v436
      %3331 = vrot.lane.b32.xlu0 %v3267, 32
      %v3332 = vpop.permute.xlu0 %3331
      %3333 = vrot.lane.b32.xlu0 %v3268, 32
      %v3334 = vpop.permute.xlu0 %3333
      %3335 = vrot.lane.b32.xlu0 %v3269, 32
      %v3336 = vpop.permute.xlu0 %3335
      %3337 = vrot.lane.b32.xlu0 %v3270, 32
      %v3338 = vpop.permute.xlu0 %3337
      %3339 = vrot.lane.b32.xlu0 %v3271, 32
      %v3340 = vpop.permute.xlu0 %3339
      %3341 = vrot.lane.b32.xlu0 %v3272, 32
      %v3342 = vpop.permute.xlu0 %3341
      %3343 = vrot.lane.b32.xlu0 %v3273, 32
      %v3344 = vpop.permute.xlu0 %3343
      %3345 = vrot.lane.b32.xlu0 %v3274, 32
      %v3346 = vpop.permute.xlu0 %3345
      %3347 = vrot.lane.b32.xlu0 %v3275, 32
      %v3348 = vpop.permute.xlu0 %3347
      %3349 = vrot.lane.b32.xlu0 %v3276, 32
      %v3350 = vpop.permute.xlu0 %3349
      %3351 = vrot.lane.b32.xlu0 %v3277, 32
      %v3352 = vpop.permute.xlu0 %3351
      %3353 = vrot.lane.b32.xlu0 %v3278, 32
      %v3354 = vpop.permute.xlu0 %3353
      %3355 = vrot.lane.b32.xlu0 %v3279, 32
      %v3356 = vpop.permute.xlu0 %3355
      %3357 = vrot.lane.b32.xlu0 %v3280, 32
      %v3358 = vpop.permute.xlu0 %3357
      %3359 = vrot.lane.b32.xlu0 %v3281, 32
      %v3360 = vpop.permute.xlu0 %3359
      %3361 = vrot.lane.b32.xlu0 %v3282, 32
      %v3362 = vpop.permute.xlu0 %3361
      %3363 = vrot.lane.b32.xlu0 %v3283, 32
      %v3364 = vpop.permute.xlu0 %3363
      %3365 = vrot.lane.b32.xlu0 %v3284, 32
      %v3366 = vpop.permute.xlu0 %3365
      %3367 = vrot.lane.b32.xlu0 %v3285, 32
      %v3368 = vpop.permute.xlu0 %3367
      %3369 = vrot.lane.b32.xlu0 %v3286, 32
      %v3370 = vpop.permute.xlu0 %3369
      %3371 = vrot.lane.b32.xlu0 %v3287, 32
      %v3372 = vpop.permute.xlu0 %3371
      %3373 = vrot.lane.b32.xlu0 %v3288, 32
      %v3374 = vpop.permute.xlu0 %3373
      %3375 = vrot.lane.b32.xlu0 %v3289, 32
      %v3376 = vpop.permute.xlu0 %3375
      %3377 = vrot.lane.b32.xlu0 %v3290, 32
      %v3378 = vpop.permute.xlu0 %3377
      %3379 = vrot.lane.b32.xlu0 %v3291, 32
      %v3380 = vpop.permute.xlu0 %3379
      %3381 = vrot.lane.b32.xlu0 %v3292, 32
      %v3382 = vpop.permute.xlu0 %3381
      %3383 = vrot.lane.b32.xlu0 %v3293, 32
      %v3384 = vpop.permute.xlu0 %3383
      %3385 = vrot.lane.b32.xlu0 %v3294, 32
      %v3386 = vpop.permute.xlu0 %3385
      %3387 = vrot.lane.b32.xlu0 %v3295, 32
      %v3388 = vpop.permute.xlu0 %3387
      %3389 = vrot.lane.b32.xlu0 %v3296, 32
      %v3390 = vpop.permute.xlu0 %3389
      %3391 = vrot.lane.b32.xlu0 %v3297, 32
      %v3392 = vpop.permute.xlu0 %3391
      %3393 = vrot.lane.b32.xlu0 %v3298, 32
      %v3394 = vpop.permute.xlu0 %3393
      %v3427 = vadd.f32 %v3107, %v3332
      %v3428 = vadd.f32 %v3108, %v3334
      %v3429 = vadd.f32 %v3109, %v3336
      %v3430 = vadd.f32 %v3110, %v3338
      %v3431 = vadd.f32 %v3111, %v3340
      %v3432 = vadd.f32 %v3112, %v3342
      %v3433 = vadd.f32 %v3113, %v3344
      %v3434 = vadd.f32 %v3114, %v3346
      %v3435 = vadd.f32 %v3115, %v3348
      %v3436 = vadd.f32 %v3116, %v3350
      %v3437 = vadd.f32 %v3117, %v3352
      %v3438 = vadd.f32 %v3118, %v3354
      %v3439 = vadd.f32 %v3119, %v3356
      %v3440 = vadd.f32 %v3120, %v3358
      %v3441 = vadd.f32 %v3121, %v3360
      %v3442 = vadd.f32 %v3122, %v3362
      %v3443 = vadd.f32 %v3123, %v3364
      %v3444 = vadd.f32 %v3124, %v3366
      %v3445 = vadd.f32 %v3125, %v3368
      %v3446 = vadd.f32 %v3126, %v3370
      %v3447 = vadd.f32 %v3127, %v3372
      %v3448 = vadd.f32 %v3128, %v3374
      %v3449 = vadd.f32 %v3129, %v3376
      %v3450 = vadd.f32 %v3130, %v3378
      %v3451 = vadd.f32 %v3131, %v3380
      %v3452 = vadd.f32 %v3132, %v3382
      %v3453 = vadd.f32 %v3133, %v3384
      %v3454 = vadd.f32 %v3134, %v3386
      %v3455 = vadd.f32 %v3135, %v3388
      %v3456 = vadd.f32 %v3136, %v3390
      %v3457 = vadd.f32 %v3137, %v3392
      %v3458 = vadd.f32 %v3138, %v3394
      %3459 = vset.pattern.permute.xlu0 7
      %3460 = vperm.xlu0 %3459, %v1283
      %v3461 = vpop.permute.xlu0 %3460
      %3463 = vset.pattern.permute.xlu0 7
      %3464 = vperm.xlu0 %3463, %v1284
      %v3465 = vpop.permute.xlu0 %3464
      %3467 = vset.pattern.permute.xlu0 7
      %3468 = vperm.xlu0 %3467, %v1285
      %v3469 = vpop.permute.xlu0 %3468
      %3471 = vset.pattern.permute.xlu0 7
      %3472 = vperm.xlu0 %3471, %v1286
      %v3473 = vpop.permute.xlu0 %3472
      %3475 = vset.pattern.permute.xlu0 7
      %3476 = vperm.xlu0 %3475, %v1287
      %v3477 = vpop.permute.xlu0 %3476
      %3479 = vset.pattern.permute.xlu0 7
      %3480 = vperm.xlu0 %3479, %v1288
      %v3481 = vpop.permute.xlu0 %3480
      %3483 = vset.pattern.permute.xlu0 7
      %3484 = vperm.xlu0 %3483, %v1289
      %v3485 = vpop.permute.xlu0 %3484
      %3487 = vset.pattern.permute.xlu0 7
      %3488 = vperm.xlu0 %3487, %v1290
      %v3489 = vpop.permute.xlu0 %3488
      %3491 = vset.pattern.permute.xlu0 7
      %3492 = vperm.xlu0 %3491, %v1291
      %v3493 = vpop.permute.xlu0 %3492
      %3495 = vset.pattern.permute.xlu0 7
      %3496 = vperm.xlu0 %3495, %v1292
      %v3497 = vpop.permute.xlu0 %3496
      %3499 = vset.pattern.permute.xlu0 7
      %3500 = vperm.xlu0 %3499, %v1293
      %v3501 = vpop.permute.xlu0 %3500
      %3503 = vset.pattern.permute.xlu0 7
      %3504 = vperm.xlu0 %3503, %v1294
      %v3505 = vpop.permute.xlu0 %3504
      %3507 = vset.pattern.permute.xlu0 7
      %3508 = vperm.xlu0 %3507, %v1295
      %v3509 = vpop.permute.xlu0 %3508
      %3511 = vset.pattern.permute.xlu0 7
      %3512 = vperm.xlu0 %3511, %v1296
      %v3513 = vpop.permute.xlu0 %3512
      %3515 = vset.pattern.permute.xlu0 7
      %3516 = vperm.xlu0 %3515, %v1297
      %v3517 = vpop.permute.xlu0 %3516
      %3519 = vset.pattern.permute.xlu0 7
      %3520 = vperm.xlu0 %3519, %v1298
      %v3521 = vpop.permute.xlu0 %3520
      %3523 = vset.pattern.permute.xlu0 7
      %3524 = vperm.xlu0 %3523, %v1299
      %v3525 = vpop.permute.xlu0 %3524
      %3527 = vset.pattern.permute.xlu0 7
      %3528 = vperm.xlu0 %3527, %v1300
      %v3529 = vpop.permute.xlu0 %3528
      %3531 = vset.pattern.permute.xlu0 7
      %3532 = vperm.xlu0 %3531, %v1301
      %v3533 = vpop.permute.xlu0 %3532
      %3535 = vset.pattern.permute.xlu0 7
      %3536 = vperm.xlu0 %3535, %v1302
      %v3537 = vpop.permute.xlu0 %3536
      %3539 = vset.pattern.permute.xlu0 7
      %3540 = vperm.xlu0 %3539, %v1303
      %v3541 = vpop.permute.xlu0 %3540
      %3543 = vset.pattern.permute.xlu0 7
      %3544 = vperm.xlu0 %3543, %v1304
      %v3545 = vpop.permute.xlu0 %3544
      %3547 = vset.pattern.permute.xlu0 7
      %3548 = vperm.xlu0 %3547, %v1305
      %v3549 = vpop.permute.xlu0 %3548
      %3551 = vset.pattern.permute.xlu0 7
      %3552 = vperm.xlu0 %3551, %v1306
      %v3553 = vpop.permute.xlu0 %3552
      %3555 = vset.pattern.permute.xlu0 7
      %3556 = vperm.xlu0 %3555, %v1307
      %v3557 = vpop.permute.xlu0 %3556
      %3559 = vset.pattern.permute.xlu0 7
      %3560 = vperm.xlu0 %3559, %v1308
      %v3561 = vpop.permute.xlu0 %3560
      %3563 = vset.pattern.permute.xlu0 7
      %3564 = vperm.xlu0 %3563, %v1309
      %v3565 = vpop.permute.xlu0 %3564
      %3567 = vset.pattern.permute.xlu0 7
      %3568 = vperm.xlu0 %3567, %v1310
      %v3569 = vpop.permute.xlu0 %3568
      %3571 = vset.pattern.permute.xlu0 7
      %3572 = vperm.xlu0 %3571, %v1311
      %v3573 = vpop.permute.xlu0 %3572
      %3575 = vset.pattern.permute.xlu0 7
      %3576 = vperm.xlu0 %3575, %v1312
      %v3577 = vpop.permute.xlu0 %3576
      %3579 = vset.pattern.permute.xlu0 7
      %3580 = vperm.xlu0 %3579, %v1313
      %v3581 = vpop.permute.xlu0 %3580
      %3583 = vset.pattern.permute.xlu0 7
      %3584 = vperm.xlu0 %3583, %v1314
      %v3585 = vpop.permute.xlu0 %3584
      %v3587 = vmul.f32 %v3461, %v374
      %v3588 = vmul.f32 %v3465, %v376
      %v3589 = vmul.f32 %v3469, %v378
      %v3590 = vmul.f32 %v3473, %v380
      %v3591 = vmul.f32 %v3477, %v382
      %v3592 = vmul.f32 %v3481, %v384
      %v3593 = vmul.f32 %v3485, %v386
      %v3594 = vmul.f32 %v3489, %v388
      %v3595 = vmul.f32 %v3493, %v390
      %v3596 = vmul.f32 %v3497, %v392
      %v3597 = vmul.f32 %v3501, %v394
      %v3598 = vmul.f32 %v3505, %v396
      %v3599 = vmul.f32 %v3509, %v398
      %v3600 = vmul.f32 %v3513, %v400
      %v3601 = vmul.f32 %v3517, %v402
      %v3602 = vmul.f32 %v3521, %v404
      %v3603 = vmul.f32 %v3525, %v406
      %v3604 = vmul.f32 %v3529, %v408
      %v3605 = vmul.f32 %v3533, %v410
      %v3606 = vmul.f32 %v3537, %v412
      %v3607 = vmul.f32 %v3541, %v414
      %v3608 = vmul.f32 %v3545, %v416
      %v3609 = vmul.f32 %v3549, %v418
      %v3610 = vmul.f32 %v3553, %v420
      %v3611 = vmul.f32 %v3557, %v422
      %v3612 = vmul.f32 %v3561, %v424
      %v3613 = vmul.f32 %v3565, %v426
      %v3614 = vmul.f32 %v3569, %v428
      %v3615 = vmul.f32 %v3573, %v430
      %v3616 = vmul.f32 %v3577, %v432
      %v3617 = vmul.f32 %v3581, %v434
      %v3618 = vmul.f32 %v3585, %v436
      %3651 = vrot.lane.b32.xlu0 %v3587, 16
      %v3652 = vpop.permute.xlu0 %3651
      %3653 = vrot.lane.b32.xlu0 %v3588, 16
      %v3654 = vpop.permute.xlu0 %3653
      %3655 = vrot.lane.b32.xlu0 %v3589, 16
      %v3656 = vpop.permute.xlu0 %3655
      %3657 = vrot.lane.b32.xlu0 %v3590, 16
      %v3658 = vpop.permute.xlu0 %3657
      %3659 = vrot.lane.b32.xlu0 %v3591, 16
      %v3660 = vpop.permute.xlu0 %3659
      %3661 = vrot.lane.b32.xlu0 %v3592, 16
      %v3662 = vpop.permute.xlu0 %3661
      %3663 = vrot.lane.b32.xlu0 %v3593, 16
      %v3664 = vpop.permute.xlu0 %3663
      %3665 = vrot.lane.b32.xlu0 %v3594, 16
      %v3666 = vpop.permute.xlu0 %3665
      %3667 = vrot.lane.b32.xlu0 %v3595, 16
      %v3668 = vpop.permute.xlu0 %3667
      %3669 = vrot.lane.b32.xlu0 %v3596, 16
      %v3670 = vpop.permute.xlu0 %3669
      %3671 = vrot.lane.b32.xlu0 %v3597, 16
      %v3672 = vpop.permute.xlu0 %3671
      %3673 = vrot.lane.b32.xlu0 %v3598, 16
      %v3674 = vpop.permute.xlu0 %3673
      %3675 = vrot.lane.b32.xlu0 %v3599, 16
      %v3676 = vpop.permute.xlu0 %3675
      %3677 = vrot.lane.b32.xlu0 %v3600, 16
      %v3678 = vpop.permute.xlu0 %3677
      %3679 = vrot.lane.b32.xlu0 %v3601, 16
      %v3680 = vpop.permute.xlu0 %3679
      %3681 = vrot.lane.b32.xlu0 %v3602, 16
      %v3682 = vpop.permute.xlu0 %3681
      %3683 = vrot.lane.b32.xlu0 %v3603, 16
      %v3684 = vpop.permute.xlu0 %3683
      %3685 = vrot.lane.b32.xlu0 %v3604, 16
      %v3686 = vpop.permute.xlu0 %3685
      %3687 = vrot.lane.b32.xlu0 %v3605, 16
      %v3688 = vpop.permute.xlu0 %3687
      %3689 = vrot.lane.b32.xlu0 %v3606, 16
      %v3690 = vpop.permute.xlu0 %3689
      %3691 = vrot.lane.b32.xlu0 %v3607, 16
      %v3692 = vpop.permute.xlu0 %3691
      %3693 = vrot.lane.b32.xlu0 %v3608, 16
      %v3694 = vpop.permute.xlu0 %3693
      %3695 = vrot.lane.b32.xlu0 %v3609, 16
      %v3696 = vpop.permute.xlu0 %3695
      %3697 = vrot.lane.b32.xlu0 %v3610, 16
      %v3698 = vpop.permute.xlu0 %3697
      %3699 = vrot.lane.b32.xlu0 %v3611, 16
      %v3700 = vpop.permute.xlu0 %3699
      %3701 = vrot.lane.b32.xlu0 %v3612, 16
      %v3702 = vpop.permute.xlu0 %3701
      %3703 = vrot.lane.b32.xlu0 %v3613, 16
      %v3704 = vpop.permute.xlu0 %3703
      %3705 = vrot.lane.b32.xlu0 %v3614, 16
      %v3706 = vpop.permute.xlu0 %3705
      %3707 = vrot.lane.b32.xlu0 %v3615, 16
      %v3708 = vpop.permute.xlu0 %3707
      %3709 = vrot.lane.b32.xlu0 %v3616, 16
      %v3710 = vpop.permute.xlu0 %3709
      %3711 = vrot.lane.b32.xlu0 %v3617, 16
      %v3712 = vpop.permute.xlu0 %3711
      %3713 = vrot.lane.b32.xlu0 %v3618, 16
      %v3714 = vpop.permute.xlu0 %3713
      %v3747 = vadd.f32 %v3427, %v3652
      %v3748 = vadd.f32 %v3428, %v3654
      %v3749 = vadd.f32 %v3429, %v3656
      %v3750 = vadd.f32 %v3430, %v3658
      %v3751 = vadd.f32 %v3431, %v3660
      %v3752 = vadd.f32 %v3432, %v3662
      %v3753 = vadd.f32 %v3433, %v3664
      %v3754 = vadd.f32 %v3434, %v3666
      %v3755 = vadd.f32 %v3435, %v3668
      %v3756 = vadd.f32 %v3436, %v3670
      %v3757 = vadd.f32 %v3437, %v3672
      %v3758 = vadd.f32 %v3438, %v3674
      %v3759 = vadd.f32 %v3439, %v3676
      %v3760 = vadd.f32 %v3440, %v3678
      %v3761 = vadd.f32 %v3441, %v3680
      %v3762 = vadd.f32 %v3442, %v3682
      %v3763 = vadd.f32 %v3443, %v3684
      %v3764 = vadd.f32 %v3444, %v3686
      %v3765 = vadd.f32 %v3445, %v3688
      %v3766 = vadd.f32 %v3446, %v3690
      %v3767 = vadd.f32 %v3447, %v3692
      %v3768 = vadd.f32 %v3448, %v3694
      %v3769 = vadd.f32 %v3449, %v3696
      %v3770 = vadd.f32 %v3450, %v3698
      %v3771 = vadd.f32 %v3451, %v3700
      %v3772 = vadd.f32 %v3452, %v3702
      %v3773 = vadd.f32 %v3453, %v3704
      %v3774 = vadd.f32 %v3454, %v3706
      %v3775 = vadd.f32 %v3455, %v3708
      %v3776 = vadd.f32 %v3456, %v3710
      %v3777 = vadd.f32 %v3457, %v3712
      %v3778 = vadd.f32 %v3458, %v3714
      %3779 = vset.pattern.permute.xlu0 8
      %3780 = vperm.xlu0 %3779, %v1283
      %v3781 = vpop.permute.xlu0 %3780
      %3783 = vset.pattern.permute.xlu0 8
      %3784 = vperm.xlu0 %3783, %v1284
      %v3785 = vpop.permute.xlu0 %3784
      %3787 = vset.pattern.permute.xlu0 8
      %3788 = vperm.xlu0 %3787, %v1285
      %v3789 = vpop.permute.xlu0 %3788
      %3791 = vset.pattern.permute.xlu0 8
      %3792 = vperm.xlu0 %3791, %v1286
      %v3793 = vpop.permute.xlu0 %3792
      %3795 = vset.pattern.permute.xlu0 8
      %3796 = vperm.xlu0 %3795, %v1287
      %v3797 = vpop.permute.xlu0 %3796
      %3799 = vset.pattern.permute.xlu0 8
      %3800 = vperm.xlu0 %3799, %v1288
      %v3801 = vpop.permute.xlu0 %3800
      %3803 = vset.pattern.permute.xlu0 8
      %3804 = vperm.xlu0 %3803, %v1289
      %v3805 = vpop.permute.xlu0 %3804
      %3807 = vset.pattern.permute.xlu0 8
      %3808 = vperm.xlu0 %3807, %v1290
      %v3809 = vpop.permute.xlu0 %3808
      %3811 = vset.pattern.permute.xlu0 8
      %3812 = vperm.xlu0 %3811, %v1291
      %v3813 = vpop.permute.xlu0 %3812
      %3815 = vset.pattern.permute.xlu0 8
      %3816 = vperm.xlu0 %3815, %v1292
      %v3817 = vpop.permute.xlu0 %3816
      %3819 = vset.pattern.permute.xlu0 8
      %3820 = vperm.xlu0 %3819, %v1293
      %v3821 = vpop.permute.xlu0 %3820
      %3823 = vset.pattern.permute.xlu0 8
      %3824 = vperm.xlu0 %3823, %v1294
      %v3825 = vpop.permute.xlu0 %3824
      %3827 = vset.pattern.permute.xlu0 8
      %3828 = vperm.xlu0 %3827, %v1295
      %v3829 = vpop.permute.xlu0 %3828
      %3831 = vset.pattern.permute.xlu0 8
      %3832 = vperm.xlu0 %3831, %v1296
      %v3833 = vpop.permute.xlu0 %3832
      %3835 = vset.pattern.permute.xlu0 8
      %3836 = vperm.xlu0 %3835, %v1297
      %v3837 = vpop.permute.xlu0 %3836
      %3839 = vset.pattern.permute.xlu0 8
      %3840 = vperm.xlu0 %3839, %v1298
      %v3841 = vpop.permute.xlu0 %3840
      %3843 = vset.pattern.permute.xlu0 8
      %3844 = vperm.xlu0 %3843, %v1299
      %v3845 = vpop.permute.xlu0 %3844
      %3847 = vset.pattern.permute.xlu0 8
      %3848 = vperm.xlu0 %3847, %v1300
      %v3849 = vpop.permute.xlu0 %3848
      %3851 = vset.pattern.permute.xlu0 8
      %3852 = vperm.xlu0 %3851, %v1301
      %v3853 = vpop.permute.xlu0 %3852
      %3855 = vset.pattern.permute.xlu0 8
      %3856 = vperm.xlu0 %3855, %v1302
      %v3857 = vpop.permute.xlu0 %3856
      %3859 = vset.pattern.permute.xlu0 8
      %3860 = vperm.xlu0 %3859, %v1303
      %v3861 = vpop.permute.xlu0 %3860
      %3863 = vset.pattern.permute.xlu0 8
      %3864 = vperm.xlu0 %3863, %v1304
      %v3865 = vpop.permute.xlu0 %3864
      %3867 = vset.pattern.permute.xlu0 8
      %3868 = vperm.xlu0 %3867, %v1305
      %v3869 = vpop.permute.xlu0 %3868
      %3871 = vset.pattern.permute.xlu0 8
      %3872 = vperm.xlu0 %3871, %v1306
      %v3873 = vpop.permute.xlu0 %3872
      %3875 = vset.pattern.permute.xlu0 8
      %3876 = vperm.xlu0 %3875, %v1307
      %v3877 = vpop.permute.xlu0 %3876
      %3879 = vset.pattern.permute.xlu0 8
      %3880 = vperm.xlu0 %3879, %v1308
      %v3881 = vpop.permute.xlu0 %3880
      %3883 = vset.pattern.permute.xlu0 8
      %3884 = vperm.xlu0 %3883, %v1309
      %v3885 = vpop.permute.xlu0 %3884
      %3887 = vset.pattern.permute.xlu0 8
      %3888 = vperm.xlu0 %3887, %v1310
      %v3889 = vpop.permute.xlu0 %3888
      %3891 = vset.pattern.permute.xlu0 8
      %3892 = vperm.xlu0 %3891, %v1311
      %v3893 = vpop.permute.xlu0 %3892
      %3895 = vset.pattern.permute.xlu0 8
      %3896 = vperm.xlu0 %3895, %v1312
      %v3897 = vpop.permute.xlu0 %3896
      %3899 = vset.pattern.permute.xlu0 8
      %3900 = vperm.xlu0 %3899, %v1313
      %v3901 = vpop.permute.xlu0 %3900
      %3903 = vset.pattern.permute.xlu0 8
      %3904 = vperm.xlu0 %3903, %v1314
      %v3905 = vpop.permute.xlu0 %3904
      %v3907 = vmul.f32 %v3781, %v375
      %v3908 = vmul.f32 %v3785, %v377
      %v3909 = vmul.f32 %v3789, %v379
      %v3910 = vmul.f32 %v3793, %v381
      %v3911 = vmul.f32 %v3797, %v383
      %v3912 = vmul.f32 %v3801, %v385
      %v3913 = vmul.f32 %v3805, %v387
      %v3914 = vmul.f32 %v3809, %v389
      %v3915 = vmul.f32 %v3813, %v391
      %v3916 = vmul.f32 %v3817, %v393
      %v3917 = vmul.f32 %v3821, %v395
      %v3918 = vmul.f32 %v3825, %v397
      %v3919 = vmul.f32 %v3829, %v399
      %v3920 = vmul.f32 %v3833, %v401
      %v3921 = vmul.f32 %v3837, %v403
      %v3922 = vmul.f32 %v3841, %v405
      %v3923 = vmul.f32 %v3845, %v407
      %v3924 = vmul.f32 %v3849, %v409
      %v3925 = vmul.f32 %v3853, %v411
      %v3926 = vmul.f32 %v3857, %v413
      %v3927 = vmul.f32 %v3861, %v415
      %v3928 = vmul.f32 %v3865, %v417
      %v3929 = vmul.f32 %v3869, %v419
      %v3930 = vmul.f32 %v3873, %v421
      %v3931 = vmul.f32 %v3877, %v423
      %v3932 = vmul.f32 %v3881, %v425
      %v3933 = vmul.f32 %v3885, %v427
      %v3934 = vmul.f32 %v3889, %v429
      %v3935 = vmul.f32 %v3893, %v431
      %v3936 = vmul.f32 %v3897, %v433
      %v3937 = vmul.f32 %v3901, %v435
      %v3938 = vmul.f32 %v3905, %v437
      %v3939 = vadd.f32 %v3747, %v3907
      %v3940 = vadd.f32 %v3748, %v3908
      %v3941 = vadd.f32 %v3749, %v3909
      %v3942 = vadd.f32 %v3750, %v3910
      %v3943 = vadd.f32 %v3751, %v3911
      %v3944 = vadd.f32 %v3752, %v3912
      %v3945 = vadd.f32 %v3753, %v3913
      %v3946 = vadd.f32 %v3754, %v3914
      %v3947 = vadd.f32 %v3755, %v3915
      %v3948 = vadd.f32 %v3756, %v3916
      %v3949 = vadd.f32 %v3757, %v3917
      %v3950 = vadd.f32 %v3758, %v3918
      %v3951 = vadd.f32 %v3759, %v3919
      %v3952 = vadd.f32 %v3760, %v3920
      %v3953 = vadd.f32 %v3761, %v3921
      %v3954 = vadd.f32 %v3762, %v3922
      %v3955 = vadd.f32 %v3763, %v3923
      %v3956 = vadd.f32 %v3764, %v3924
      %v3957 = vadd.f32 %v3765, %v3925
      %v3958 = vadd.f32 %v3766, %v3926
      %v3959 = vadd.f32 %v3767, %v3927
      %v3960 = vadd.f32 %v3768, %v3928
      %v3961 = vadd.f32 %v3769, %v3929
      %v3962 = vadd.f32 %v3770, %v3930
      %v3963 = vadd.f32 %v3771, %v3931
      %v3964 = vadd.f32 %v3772, %v3932
      %v3965 = vadd.f32 %v3773, %v3933
      %v3966 = vadd.f32 %v3774, %v3934
      %v3967 = vadd.f32 %v3775, %v3935
      %v3968 = vadd.f32 %v3776, %v3936
      %v3969 = vadd.f32 %v3777, %v3937
      %v3970 = vadd.f32 %v3778, %v3938
      %3971 = vset.pattern.permute.xlu0 9
      %3972 = vperm.xlu0 %3971, %v1283
      %v3973 = vpop.permute.xlu0 %3972
      %3975 = vset.pattern.permute.xlu0 9
      %3976 = vperm.xlu0 %3975, %v1284
      %v3977 = vpop.permute.xlu0 %3976
      %3979 = vset.pattern.permute.xlu0 9
      %3980 = vperm.xlu0 %3979, %v1285
      %v3981 = vpop.permute.xlu0 %3980
      %3983 = vset.pattern.permute.xlu0 9
      %3984 = vperm.xlu0 %3983, %v1286
      %v3985 = vpop.permute.xlu0 %3984
      %3987 = vset.pattern.permute.xlu0 9
      %3988 = vperm.xlu0 %3987, %v1287
      %v3989 = vpop.permute.xlu0 %3988
      %3991 = vset.pattern.permute.xlu0 9
      %3992 = vperm.xlu0 %3991, %v1288
      %v3993 = vpop.permute.xlu0 %3992
      %3995 = vset.pattern.permute.xlu0 9
      %3996 = vperm.xlu0 %3995, %v1289
      %v3997 = vpop.permute.xlu0 %3996
      %3999 = vset.pattern.permute.xlu0 9
      %4000 = vperm.xlu0 %3999, %v1290
      %v4001 = vpop.permute.xlu0 %4000
      %4003 = vset.pattern.permute.xlu0 9
      %4004 = vperm.xlu0 %4003, %v1291
      %v4005 = vpop.permute.xlu0 %4004
      %4007 = vset.pattern.permute.xlu0 9
      %4008 = vperm.xlu0 %4007, %v1292
      %v4009 = vpop.permute.xlu0 %4008
      %4011 = vset.pattern.permute.xlu0 9
      %4012 = vperm.xlu0 %4011, %v1293
      %v4013 = vpop.permute.xlu0 %4012
      %4015 = vset.pattern.permute.xlu0 9
      %4016 = vperm.xlu0 %4015, %v1294
      %v4017 = vpop.permute.xlu0 %4016
      %4019 = vset.pattern.permute.xlu0 9
      %4020 = vperm.xlu0 %4019, %v1295
      %v4021 = vpop.permute.xlu0 %4020
      %4023 = vset.pattern.permute.xlu0 9
      %4024 = vperm.xlu0 %4023, %v1296
      %v4025 = vpop.permute.xlu0 %4024
      %4027 = vset.pattern.permute.xlu0 9
      %4028 = vperm.xlu0 %4027, %v1297
      %v4029 = vpop.permute.xlu0 %4028
      %4031 = vset.pattern.permute.xlu0 9
      %4032 = vperm.xlu0 %4031, %v1298
      %v4033 = vpop.permute.xlu0 %4032
      %4035 = vset.pattern.permute.xlu0 9
      %4036 = vperm.xlu0 %4035, %v1299
      %v4037 = vpop.permute.xlu0 %4036
      %4039 = vset.pattern.permute.xlu0 9
      %4040 = vperm.xlu0 %4039, %v1300
      %v4041 = vpop.permute.xlu0 %4040
      %4043 = vset.pattern.permute.xlu0 9
      %4044 = vperm.xlu0 %4043, %v1301
      %v4045 = vpop.permute.xlu0 %4044
      %4047 = vset.pattern.permute.xlu0 9
      %4048 = vperm.xlu0 %4047, %v1302
      %v4049 = vpop.permute.xlu0 %4048
      %4051 = vset.pattern.permute.xlu0 9
      %4052 = vperm.xlu0 %4051, %v1303
      %v4053 = vpop.permute.xlu0 %4052
      %4055 = vset.pattern.permute.xlu0 9
      %4056 = vperm.xlu0 %4055, %v1304
      %v4057 = vpop.permute.xlu0 %4056
      %4059 = vset.pattern.permute.xlu0 9
      %4060 = vperm.xlu0 %4059, %v1305
      %v4061 = vpop.permute.xlu0 %4060
      %4063 = vset.pattern.permute.xlu0 9
      %4064 = vperm.xlu0 %4063, %v1306
      %v4065 = vpop.permute.xlu0 %4064
      %4067 = vset.pattern.permute.xlu0 9
      %4068 = vperm.xlu0 %4067, %v1307
      %v4069 = vpop.permute.xlu0 %4068
      %4071 = vset.pattern.permute.xlu0 9
      %4072 = vperm.xlu0 %4071, %v1308
      %v4073 = vpop.permute.xlu0 %4072
      %4075 = vset.pattern.permute.xlu0 9
      %4076 = vperm.xlu0 %4075, %v1309
      %v4077 = vpop.permute.xlu0 %4076
      %4079 = vset.pattern.permute.xlu0 9
      %4080 = vperm.xlu0 %4079, %v1310
      %v4081 = vpop.permute.xlu0 %4080
      %4083 = vset.pattern.permute.xlu0 9
      %4084 = vperm.xlu0 %4083, %v1311
      %v4085 = vpop.permute.xlu0 %4084
      %4087 = vset.pattern.permute.xlu0 9
      %4088 = vperm.xlu0 %4087, %v1312
      %v4089 = vpop.permute.xlu0 %4088
      %4091 = vset.pattern.permute.xlu0 9
      %4092 = vperm.xlu0 %4091, %v1313
      %v4093 = vpop.permute.xlu0 %4092
      %4095 = vset.pattern.permute.xlu0 9
      %4096 = vperm.xlu0 %4095, %v1314
      %v4097 = vpop.permute.xlu0 %4096
      %v4099 = vmul.f32 %v3973, %v375
      %v4100 = vmul.f32 %v3977, %v377
      %v4101 = vmul.f32 %v3981, %v379
      %v4102 = vmul.f32 %v3985, %v381
      %v4103 = vmul.f32 %v3989, %v383
      %v4104 = vmul.f32 %v3993, %v385
      %v4105 = vmul.f32 %v3997, %v387
      %v4106 = vmul.f32 %v4001, %v389
      %v4107 = vmul.f32 %v4005, %v391
      %v4108 = vmul.f32 %v4009, %v393
      %v4109 = vmul.f32 %v4013, %v395
      %v4110 = vmul.f32 %v4017, %v397
      %v4111 = vmul.f32 %v4021, %v399
      %v4112 = vmul.f32 %v4025, %v401
      %v4113 = vmul.f32 %v4029, %v403
      %v4114 = vmul.f32 %v4033, %v405
      %v4115 = vmul.f32 %v4037, %v407
      %v4116 = vmul.f32 %v4041, %v409
      %v4117 = vmul.f32 %v4045, %v411
      %v4118 = vmul.f32 %v4049, %v413
      %v4119 = vmul.f32 %v4053, %v415
      %v4120 = vmul.f32 %v4057, %v417
      %v4121 = vmul.f32 %v4061, %v419
      %v4122 = vmul.f32 %v4065, %v421
      %v4123 = vmul.f32 %v4069, %v423
      %v4124 = vmul.f32 %v4073, %v425
      %v4125 = vmul.f32 %v4077, %v427
      %v4126 = vmul.f32 %v4081, %v429
      %v4127 = vmul.f32 %v4085, %v431
      %v4128 = vmul.f32 %v4089, %v433
      %v4129 = vmul.f32 %v4093, %v435
      %v4130 = vmul.f32 %v4097, %v437
      %4163 = vrot.lane.b32.xlu0 %v4099, 112
      %v4164 = vpop.permute.xlu0 %4163
      %4165 = vrot.lane.b32.xlu0 %v4100, 112
      %v4166 = vpop.permute.xlu0 %4165
      %4167 = vrot.lane.b32.xlu0 %v4101, 112
      %v4168 = vpop.permute.xlu0 %4167
      %4169 = vrot.lane.b32.xlu0 %v4102, 112
      %v4170 = vpop.permute.xlu0 %4169
      %4171 = vrot.lane.b32.xlu0 %v4103, 112
      %v4172 = vpop.permute.xlu0 %4171
      %4173 = vrot.lane.b32.xlu0 %v4104, 112
      %v4174 = vpop.permute.xlu0 %4173
      %4175 = vrot.lane.b32.xlu0 %v4105, 112
      %v4176 = vpop.permute.xlu0 %4175
      %4177 = vrot.lane.b32.xlu0 %v4106, 112
      %v4178 = vpop.permute.xlu0 %4177
      %4179 = vrot.lane.b32.xlu0 %v4107, 112
      %v4180 = vpop.permute.xlu0 %4179
      %4181 = vrot.lane.b32.xlu0 %v4108, 112
      %v4182 = vpop.permute.xlu0 %4181
      %4183 = vrot.lane.b32.xlu0 %v4109, 112
      %v4184 = vpop.permute.xlu0 %4183
      %4185 = vrot.lane.b32.xlu0 %v4110, 112
      %v4186 = vpop.permute.xlu0 %4185
      %4187 = vrot.lane.b32.xlu0 %v4111, 112
      %v4188 = vpop.permute.xlu0 %4187
      %4189 = vrot.lane.b32.xlu0 %v4112, 112
      %v4190 = vpop.permute.xlu0 %4189
      %4191 = vrot.lane.b32.xlu0 %v4113, 112
      %v4192 = vpop.permute.xlu0 %4191
      %4193 = vrot.lane.b32.xlu0 %v4114, 112
      %v4194 = vpop.permute.xlu0 %4193
      %4195 = vrot.lane.b32.xlu0 %v4115, 112
      %v4196 = vpop.permute.xlu0 %4195
      %4197 = vrot.lane.b32.xlu0 %v4116, 112
      %v4198 = vpop.permute.xlu0 %4197
      %4199 = vrot.lane.b32.xlu0 %v4117, 112
      %v4200 = vpop.permute.xlu0 %4199
      %4201 = vrot.lane.b32.xlu0 %v4118, 112
      %v4202 = vpop.permute.xlu0 %4201
      %4203 = vrot.lane.b32.xlu0 %v4119, 112
      %v4204 = vpop.permute.xlu0 %4203
      %4205 = vrot.lane.b32.xlu0 %v4120, 112
      %v4206 = vpop.permute.xlu0 %4205
      %4207 = vrot.lane.b32.xlu0 %v4121, 112
      %v4208 = vpop.permute.xlu0 %4207
      %4209 = vrot.lane.b32.xlu0 %v4122, 112
      %v4210 = vpop.permute.xlu0 %4209
      %4211 = vrot.lane.b32.xlu0 %v4123, 112
      %v4212 = vpop.permute.xlu0 %4211
      %4213 = vrot.lane.b32.xlu0 %v4124, 112
      %v4214 = vpop.permute.xlu0 %4213
      %4215 = vrot.lane.b32.xlu0 %v4125, 112
      %v4216 = vpop.permute.xlu0 %4215
      %4217 = vrot.lane.b32.xlu0 %v4126, 112
      %v4218 = vpop.permute.xlu0 %4217
      %4219 = vrot.lane.b32.xlu0 %v4127, 112
      %v4220 = vpop.permute.xlu0 %4219
      %4221 = vrot.lane.b32.xlu0 %v4128, 112
      %v4222 = vpop.permute.xlu0 %4221
      %4223 = vrot.lane.b32.xlu0 %v4129, 112
      %v4224 = vpop.permute.xlu0 %4223
      %4225 = vrot.lane.b32.xlu0 %v4130, 112
      %v4226 = vpop.permute.xlu0 %4225
      %v4259 = vadd.f32 %v3939, %v4164
      %v4260 = vadd.f32 %v3940, %v4166
      %v4261 = vadd.f32 %v3941, %v4168
      %v4262 = vadd.f32 %v3942, %v4170
      %v4263 = vadd.f32 %v3943, %v4172
      %v4264 = vadd.f32 %v3944, %v4174
      %v4265 = vadd.f32 %v3945, %v4176
      %v4266 = vadd.f32 %v3946, %v4178
      %v4267 = vadd.f32 %v3947, %v4180
      %v4268 = vadd.f32 %v3948, %v4182
      %v4269 = vadd.f32 %v3949, %v4184
      %v4270 = vadd.f32 %v3950, %v4186
      %v4271 = vadd.f32 %v3951, %v4188
      %v4272 = vadd.f32 %v3952, %v4190
      %v4273 = vadd.f32 %v3953, %v4192
      %v4274 = vadd.f32 %v3954, %v4194
      %v4275 = vadd.f32 %v3955, %v4196
      %v4276 = vadd.f32 %v3956, %v4198
      %v4277 = vadd.f32 %v3957, %v4200
      %v4278 = vadd.f32 %v3958, %v4202
      %v4279 = vadd.f32 %v3959, %v4204
      %v4280 = vadd.f32 %v3960, %v4206
      %v4281 = vadd.f32 %v3961, %v4208
      %v4282 = vadd.f32 %v3962, %v4210
      %v4283 = vadd.f32 %v3963, %v4212
      %v4284 = vadd.f32 %v3964, %v4214
      %v4285 = vadd.f32 %v3965, %v4216
      %v4286 = vadd.f32 %v3966, %v4218
      %v4287 = vadd.f32 %v3967, %v4220
      %v4288 = vadd.f32 %v3968, %v4222
      %v4289 = vadd.f32 %v3969, %v4224
      %v4290 = vadd.f32 %v3970, %v4226
      %4291 = vset.pattern.permute.xlu0 10
      %4292 = vperm.xlu0 %4291, %v1283
      %v4293 = vpop.permute.xlu0 %4292
      %4295 = vset.pattern.permute.xlu0 10
      %4296 = vperm.xlu0 %4295, %v1284
      %v4297 = vpop.permute.xlu0 %4296
      %4299 = vset.pattern.permute.xlu0 10
      %4300 = vperm.xlu0 %4299, %v1285
      %v4301 = vpop.permute.xlu0 %4300
      %4303 = vset.pattern.permute.xlu0 10
      %4304 = vperm.xlu0 %4303, %v1286
      %v4305 = vpop.permute.xlu0 %4304
      %4307 = vset.pattern.permute.xlu0 10
      %4308 = vperm.xlu0 %4307, %v1287
      %v4309 = vpop.permute.xlu0 %4308
      %4311 = vset.pattern.permute.xlu0 10
      %4312 = vperm.xlu0 %4311, %v1288
      %v4313 = vpop.permute.xlu0 %4312
      %4315 = vset.pattern.permute.xlu0 10
      %4316 = vperm.xlu0 %4315, %v1289
      %v4317 = vpop.permute.xlu0 %4316
      %4319 = vset.pattern.permute.xlu0 10
      %4320 = vperm.xlu0 %4319, %v1290
      %v4321 = vpop.permute.xlu0 %4320
      %4323 = vset.pattern.permute.xlu0 10
      %4324 = vperm.xlu0 %4323, %v1291
      %v4325 = vpop.permute.xlu0 %4324
      %4327 = vset.pattern.permute.xlu0 10
      %4328 = vperm.xlu0 %4327, %v1292
      %v4329 = vpop.permute.xlu0 %4328
      %4331 = vset.pattern.permute.xlu0 10
      %4332 = vperm.xlu0 %4331, %v1293
      %v4333 = vpop.permute.xlu0 %4332
      %4335 = vset.pattern.permute.xlu0 10
      %4336 = vperm.xlu0 %4335, %v1294
      %v4337 = vpop.permute.xlu0 %4336
      %4339 = vset.pattern.permute.xlu0 10
      %4340 = vperm.xlu0 %4339, %v1295
      %v4341 = vpop.permute.xlu0 %4340
      %4343 = vset.pattern.permute.xlu0 10
      %4344 = vperm.xlu0 %4343, %v1296
      %v4345 = vpop.permute.xlu0 %4344
      %4347 = vset.pattern.permute.xlu0 10
      %4348 = vperm.xlu0 %4347, %v1297
      %v4349 = vpop.permute.xlu0 %4348
      %4351 = vset.pattern.permute.xlu0 10
      %4352 = vperm.xlu0 %4351, %v1298
      %v4353 = vpop.permute.xlu0 %4352
      %4355 = vset.pattern.permute.xlu0 10
      %4356 = vperm.xlu0 %4355, %v1299
      %v4357 = vpop.permute.xlu0 %4356
      %4359 = vset.pattern.permute.xlu0 10
      %4360 = vperm.xlu0 %4359, %v1300
      %v4361 = vpop.permute.xlu0 %4360
      %4363 = vset.pattern.permute.xlu0 10
      %4364 = vperm.xlu0 %4363, %v1301
      %v4365 = vpop.permute.xlu0 %4364
      %4367 = vset.pattern.permute.xlu0 10
      %4368 = vperm.xlu0 %4367, %v1302
      %v4369 = vpop.permute.xlu0 %4368
      %4371 = vset.pattern.permute.xlu0 10
      %4372 = vperm.xlu0 %4371, %v1303
      %v4373 = vpop.permute.xlu0 %4372
      %4375 = vset.pattern.permute.xlu0 10
      %4376 = vperm.xlu0 %4375, %v1304
      %v4377 = vpop.permute.xlu0 %4376
      %4379 = vset.pattern.permute.xlu0 10
      %4380 = vperm.xlu0 %4379, %v1305
      %v4381 = vpop.permute.xlu0 %4380
      %4383 = vset.pattern.permute.xlu0 10
      %4384 = vperm.xlu0 %4383, %v1306
      %v4385 = vpop.permute.xlu0 %4384
      %4387 = vset.pattern.permute.xlu0 10
      %4388 = vperm.xlu0 %4387, %v1307
      %v4389 = vpop.permute.xlu0 %4388
      %4391 = vset.pattern.permute.xlu0 10
      %4392 = vperm.xlu0 %4391, %v1308
      %v4393 = vpop.permute.xlu0 %4392
      %4395 = vset.pattern.permute.xlu0 10
      %4396 = vperm.xlu0 %4395, %v1309
      %v4397 = vpop.permute.xlu0 %4396
      %4399 = vset.pattern.permute.xlu0 10
      %4400 = vperm.xlu0 %4399, %v1310
      %v4401 = vpop.permute.xlu0 %4400
      %4403 = vset.pattern.permute.xlu0 10
      %4404 = vperm.xlu0 %4403, %v1311
      %v4405 = vpop.permute.xlu0 %4404
      %4407 = vset.pattern.permute.xlu0 10
      %4408 = vperm.xlu0 %4407, %v1312
      %v4409 = vpop.permute.xlu0 %4408
      %4411 = vset.pattern.permute.xlu0 10
      %4412 = vperm.xlu0 %4411, %v1313
      %v4413 = vpop.permute.xlu0 %4412
      %4415 = vset.pattern.permute.xlu0 10
      %4416 = vperm.xlu0 %4415, %v1314
      %v4417 = vpop.permute.xlu0 %4416
      %v4419 = vmul.f32 %v4293, %v375
      %v4420 = vmul.f32 %v4297, %v377
      %v4421 = vmul.f32 %v4301, %v379
      %v4422 = vmul.f32 %v4305, %v381
      %v4423 = vmul.f32 %v4309, %v383
      %v4424 = vmul.f32 %v4313, %v385
      %v4425 = vmul.f32 %v4317, %v387
      %v4426 = vmul.f32 %v4321, %v389
      %v4427 = vmul.f32 %v4325, %v391
      %v4428 = vmul.f32 %v4329, %v393
      %v4429 = vmul.f32 %v4333, %v395
      %v4430 = vmul.f32 %v4337, %v397
      %v4431 = vmul.f32 %v4341, %v399
      %v4432 = vmul.f32 %v4345, %v401
      %v4433 = vmul.f32 %v4349, %v403
      %v4434 = vmul.f32 %v4353, %v405
      %v4435 = vmul.f32 %v4357, %v407
      %v4436 = vmul.f32 %v4361, %v409
      %v4437 = vmul.f32 %v4365, %v411
      %v4438 = vmul.f32 %v4369, %v413
      %v4439 = vmul.f32 %v4373, %v415
      %v4440 = vmul.f32 %v4377, %v417
      %v4441 = vmul.f32 %v4381, %v419
      %v4442 = vmul.f32 %v4385, %v421
      %v4443 = vmul.f32 %v4389, %v423
      %v4444 = vmul.f32 %v4393, %v425
      %v4445 = vmul.f32 %v4397, %v427
      %v4446 = vmul.f32 %v4401, %v429
      %v4447 = vmul.f32 %v4405, %v431
      %v4448 = vmul.f32 %v4409, %v433
      %v4449 = vmul.f32 %v4413, %v435
      %v4450 = vmul.f32 %v4417, %v437
      %4483 = vrot.lane.b32.xlu0 %v4419, 96
      %v4484 = vpop.permute.xlu0 %4483
      %4485 = vrot.lane.b32.xlu0 %v4420, 96
      %v4486 = vpop.permute.xlu0 %4485
      %4487 = vrot.lane.b32.xlu0 %v4421, 96
      %v4488 = vpop.permute.xlu0 %4487
      %4489 = vrot.lane.b32.xlu0 %v4422, 96
      %v4490 = vpop.permute.xlu0 %4489
      %4491 = vrot.lane.b32.xlu0 %v4423, 96
      %v4492 = vpop.permute.xlu0 %4491
      %4493 = vrot.lane.b32.xlu0 %v4424, 96
      %v4494 = vpop.permute.xlu0 %4493
      %4495 = vrot.lane.b32.xlu0 %v4425, 96
      %v4496 = vpop.permute.xlu0 %4495
      %4497 = vrot.lane.b32.xlu0 %v4426, 96
      %v4498 = vpop.permute.xlu0 %4497
      %4499 = vrot.lane.b32.xlu0 %v4427, 96
      %v4500 = vpop.permute.xlu0 %4499
      %4501 = vrot.lane.b32.xlu0 %v4428, 96
      %v4502 = vpop.permute.xlu0 %4501
      %4503 = vrot.lane.b32.xlu0 %v4429, 96
      %v4504 = vpop.permute.xlu0 %4503
      %4505 = vrot.lane.b32.xlu0 %v4430, 96
      %v4506 = vpop.permute.xlu0 %4505
      %4507 = vrot.lane.b32.xlu0 %v4431, 96
      %v4508 = vpop.permute.xlu0 %4507
      %4509 = vrot.lane.b32.xlu0 %v4432, 96
      %v4510 = vpop.permute.xlu0 %4509
      %4511 = vrot.lane.b32.xlu0 %v4433, 96
      %v4512 = vpop.permute.xlu0 %4511
      %4513 = vrot.lane.b32.xlu0 %v4434, 96
      %v4514 = vpop.permute.xlu0 %4513
      %4515 = vrot.lane.b32.xlu0 %v4435, 96
      %v4516 = vpop.permute.xlu0 %4515
      %4517 = vrot.lane.b32.xlu0 %v4436, 96
      %v4518 = vpop.permute.xlu0 %4517
      %4519 = vrot.lane.b32.xlu0 %v4437, 96
      %v4520 = vpop.permute.xlu0 %4519
      %4521 = vrot.lane.b32.xlu0 %v4438, 96
      %v4522 = vpop.permute.xlu0 %4521
      %4523 = vrot.lane.b32.xlu0 %v4439, 96
      %v4524 = vpop.permute.xlu0 %4523
      %4525 = vrot.lane.b32.xlu0 %v4440, 96
      %v4526 = vpop.permute.xlu0 %4525
      %4527 = vrot.lane.b32.xlu0 %v4441, 96
      %v4528 = vpop.permute.xlu0 %4527
      %4529 = vrot.lane.b32.xlu0 %v4442, 96
      %v4530 = vpop.permute.xlu0 %4529
      %4531 = vrot.lane.b32.xlu0 %v4443, 96
      %v4532 = vpop.permute.xlu0 %4531
      %4533 = vrot.lane.b32.xlu0 %v4444, 96
      %v4534 = vpop.permute.xlu0 %4533
      %4535 = vrot.lane.b32.xlu0 %v4445, 96
      %v4536 = vpop.permute.xlu0 %4535
      %4537 = vrot.lane.b32.xlu0 %v4446, 96
      %v4538 = vpop.permute.xlu0 %4537
      %4539 = vrot.lane.b32.xlu0 %v4447, 96
      %v4540 = vpop.permute.xlu0 %4539
      %4541 = vrot.lane.b32.xlu0 %v4448, 96
      %v4542 = vpop.permute.xlu0 %4541
      %4543 = vrot.lane.b32.xlu0 %v4449, 96
      %v4544 = vpop.permute.xlu0 %4543
      %4545 = vrot.lane.b32.xlu0 %v4450, 96
      %v4546 = vpop.permute.xlu0 %4545
      %v4579 = vadd.f32 %v4259, %v4484
      %v4580 = vadd.f32 %v4260, %v4486
      %v4581 = vadd.f32 %v4261, %v4488
      %v4582 = vadd.f32 %v4262, %v4490
      %v4583 = vadd.f32 %v4263, %v4492
      %v4584 = vadd.f32 %v4264, %v4494
      %v4585 = vadd.f32 %v4265, %v4496
      %v4586 = vadd.f32 %v4266, %v4498
      %v4587 = vadd.f32 %v4267, %v4500
      %v4588 = vadd.f32 %v4268, %v4502
      %v4589 = vadd.f32 %v4269, %v4504
      %v4590 = vadd.f32 %v4270, %v4506
      %v4591 = vadd.f32 %v4271, %v4508
      %v4592 = vadd.f32 %v4272, %v4510
      %v4593 = vadd.f32 %v4273, %v4512
      %v4594 = vadd.f32 %v4274, %v4514
      %v4595 = vadd.f32 %v4275, %v4516
      %v4596 = vadd.f32 %v4276, %v4518
      %v4597 = vadd.f32 %v4277, %v4520
      %v4598 = vadd.f32 %v4278, %v4522
      %v4599 = vadd.f32 %v4279, %v4524
      %v4600 = vadd.f32 %v4280, %v4526
      %v4601 = vadd.f32 %v4281, %v4528
      %v4602 = vadd.f32 %v4282, %v4530
      %v4603 = vadd.f32 %v4283, %v4532
      %v4604 = vadd.f32 %v4284, %v4534
      %v4605 = vadd.f32 %v4285, %v4536
      %v4606 = vadd.f32 %v4286, %v4538
      %v4607 = vadd.f32 %v4287, %v4540
      %v4608 = vadd.f32 %v4288, %v4542
      %v4609 = vadd.f32 %v4289, %v4544
      %v4610 = vadd.f32 %v4290, %v4546
      %4611 = vset.pattern.permute.xlu0 11
      %4612 = vperm.xlu0 %4611, %v1283
      %v4613 = vpop.permute.xlu0 %4612
      %4615 = vset.pattern.permute.xlu0 11
      %4616 = vperm.xlu0 %4615, %v1284
      %v4617 = vpop.permute.xlu0 %4616
      %4619 = vset.pattern.permute.xlu0 11
      %4620 = vperm.xlu0 %4619, %v1285
      %v4621 = vpop.permute.xlu0 %4620
      %4623 = vset.pattern.permute.xlu0 11
      %4624 = vperm.xlu0 %4623, %v1286
      %v4625 = vpop.permute.xlu0 %4624
      %4627 = vset.pattern.permute.xlu0 11
      %4628 = vperm.xlu0 %4627, %v1287
      %v4629 = vpop.permute.xlu0 %4628
      %4631 = vset.pattern.permute.xlu0 11
      %4632 = vperm.xlu0 %4631, %v1288
      %v4633 = vpop.permute.xlu0 %4632
      %4635 = vset.pattern.permute.xlu0 11
      %4636 = vperm.xlu0 %4635, %v1289
      %v4637 = vpop.permute.xlu0 %4636
      %4639 = vset.pattern.permute.xlu0 11
      %4640 = vperm.xlu0 %4639, %v1290
      %v4641 = vpop.permute.xlu0 %4640
      %4643 = vset.pattern.permute.xlu0 11
      %4644 = vperm.xlu0 %4643, %v1291
      %v4645 = vpop.permute.xlu0 %4644
      %4647 = vset.pattern.permute.xlu0 11
      %4648 = vperm.xlu0 %4647, %v1292
      %v4649 = vpop.permute.xlu0 %4648
      %4651 = vset.pattern.permute.xlu0 11
      %4652 = vperm.xlu0 %4651, %v1293
      %v4653 = vpop.permute.xlu0 %4652
      %4655 = vset.pattern.permute.xlu0 11
      %4656 = vperm.xlu0 %4655, %v1294
      %v4657 = vpop.permute.xlu0 %4656
      %4659 = vset.pattern.permute.xlu0 11
      %4660 = vperm.xlu0 %4659, %v1295
      %v4661 = vpop.permute.xlu0 %4660
      %4663 = vset.pattern.permute.xlu0 11
      %4664 = vperm.xlu0 %4663, %v1296
      %v4665 = vpop.permute.xlu0 %4664
      %4667 = vset.pattern.permute.xlu0 11
      %4668 = vperm.xlu0 %4667, %v1297
      %v4669 = vpop.permute.xlu0 %4668
      %4671 = vset.pattern.permute.xlu0 11
      %4672 = vperm.xlu0 %4671, %v1298
      %v4673 = vpop.permute.xlu0 %4672
      %4675 = vset.pattern.permute.xlu0 11
      %4676 = vperm.xlu0 %4675, %v1299
      %v4677 = vpop.permute.xlu0 %4676
      %4679 = vset.pattern.permute.xlu0 11
      %4680 = vperm.xlu0 %4679, %v1300
      %v4681 = vpop.permute.xlu0 %4680
      %4683 = vset.pattern.permute.xlu0 11
      %4684 = vperm.xlu0 %4683, %v1301
      %v4685 = vpop.permute.xlu0 %4684
      %4687 = vset.pattern.permute.xlu0 11
      %4688 = vperm.xlu0 %4687, %v1302
      %v4689 = vpop.permute.xlu0 %4688
      %4691 = vset.pattern.permute.xlu0 11
      %4692 = vperm.xlu0 %4691, %v1303
      %v4693 = vpop.permute.xlu0 %4692
      %4695 = vset.pattern.permute.xlu0 11
      %4696 = vperm.xlu0 %4695, %v1304
      %v4697 = vpop.permute.xlu0 %4696
      %4699 = vset.pattern.permute.xlu0 11
      %4700 = vperm.xlu0 %4699, %v1305
      %v4701 = vpop.permute.xlu0 %4700
      %4703 = vset.pattern.permute.xlu0 11
      %4704 = vperm.xlu0 %4703, %v1306
      %v4705 = vpop.permute.xlu0 %4704
      %4707 = vset.pattern.permute.xlu0 11
      %4708 = vperm.xlu0 %4707, %v1307
      %v4709 = vpop.permute.xlu0 %4708
      %4711 = vset.pattern.permute.xlu0 11
      %4712 = vperm.xlu0 %4711, %v1308
      %v4713 = vpop.permute.xlu0 %4712
      %4715 = vset.pattern.permute.xlu0 11
      %4716 = vperm.xlu0 %4715, %v1309
      %v4717 = vpop.permute.xlu0 %4716
      %4719 = vset.pattern.permute.xlu0 11
      %4720 = vperm.xlu0 %4719, %v1310
      %v4721 = vpop.permute.xlu0 %4720
      %4723 = vset.pattern.permute.xlu0 11
      %4724 = vperm.xlu0 %4723, %v1311
      %v4725 = vpop.permute.xlu0 %4724
      %4727 = vset.pattern.permute.xlu0 11
      %4728 = vperm.xlu0 %4727, %v1312
      %v4729 = vpop.permute.xlu0 %4728
      %4731 = vset.pattern.permute.xlu0 11
      %4732 = vperm.xlu0 %4731, %v1313
      %v4733 = vpop.permute.xlu0 %4732
      %4735 = vset.pattern.permute.xlu0 11
      %4736 = vperm.xlu0 %4735, %v1314
      %v4737 = vpop.permute.xlu0 %4736
      %v4739 = vmul.f32 %v4613, %v375
      %v4740 = vmul.f32 %v4617, %v377
      %v4741 = vmul.f32 %v4621, %v379
      %v4742 = vmul.f32 %v4625, %v381
      %v4743 = vmul.f32 %v4629, %v383
      %v4744 = vmul.f32 %v4633, %v385
      %v4745 = vmul.f32 %v4637, %v387
      %v4746 = vmul.f32 %v4641, %v389
      %v4747 = vmul.f32 %v4645, %v391
      %v4748 = vmul.f32 %v4649, %v393
      %v4749 = vmul.f32 %v4653, %v395
      %v4750 = vmul.f32 %v4657, %v397
      %v4751 = vmul.f32 %v4661, %v399
      %v4752 = vmul.f32 %v4665, %v401
      %v4753 = vmul.f32 %v4669, %v403
      %v4754 = vmul.f32 %v4673, %v405
      %v4755 = vmul.f32 %v4677, %v407
      %v4756 = vmul.f32 %v4681, %v409
      %v4757 = vmul.f32 %v4685, %v411
      %v4758 = vmul.f32 %v4689, %v413
      %v4759 = vmul.f32 %v4693, %v415
      %v4760 = vmul.f32 %v4697, %v417
      %v4761 = vmul.f32 %v4701, %v419
      %v4762 = vmul.f32 %v4705, %v421
      %v4763 = vmul.f32 %v4709, %v423
      %v4764 = vmul.f32 %v4713, %v425
      %v4765 = vmul.f32 %v4717, %v427
      %v4766 = vmul.f32 %v4721, %v429
      %v4767 = vmul.f32 %v4725, %v431
      %v4768 = vmul.f32 %v4729, %v433
      %v4769 = vmul.f32 %v4733, %v435
      %v4770 = vmul.f32 %v4737, %v437
      %4803 = vrot.lane.b32.xlu0 %v4739, 80
      %v4804 = vpop.permute.xlu0 %4803
      %4805 = vrot.lane.b32.xlu0 %v4740, 80
      %v4806 = vpop.permute.xlu0 %4805
      %4807 = vrot.lane.b32.xlu0 %v4741, 80
      %v4808 = vpop.permute.xlu0 %4807
      %4809 = vrot.lane.b32.xlu0 %v4742, 80
      %v4810 = vpop.permute.xlu0 %4809
      %4811 = vrot.lane.b32.xlu0 %v4743, 80
      %v4812 = vpop.permute.xlu0 %4811
      %4813 = vrot.lane.b32.xlu0 %v4744, 80
      %v4814 = vpop.permute.xlu0 %4813
      %4815 = vrot.lane.b32.xlu0 %v4745, 80
      %v4816 = vpop.permute.xlu0 %4815
      %4817 = vrot.lane.b32.xlu0 %v4746, 80
      %v4818 = vpop.permute.xlu0 %4817
      %4819 = vrot.lane.b32.xlu0 %v4747, 80
      %v4820 = vpop.permute.xlu0 %4819
      %4821 = vrot.lane.b32.xlu0 %v4748, 80
      %v4822 = vpop.permute.xlu0 %4821
      %4823 = vrot.lane.b32.xlu0 %v4749, 80
      %v4824 = vpop.permute.xlu0 %4823
      %4825 = vrot.lane.b32.xlu0 %v4750, 80
      %v4826 = vpop.permute.xlu0 %4825
      %4827 = vrot.lane.b32.xlu0 %v4751, 80
      %v4828 = vpop.permute.xlu0 %4827
      %4829 = vrot.lane.b32.xlu0 %v4752, 80
      %v4830 = vpop.permute.xlu0 %4829
      %4831 = vrot.lane.b32.xlu0 %v4753, 80
      %v4832 = vpop.permute.xlu0 %4831
      %4833 = vrot.lane.b32.xlu0 %v4754, 80
      %v4834 = vpop.permute.xlu0 %4833
      %4835 = vrot.lane.b32.xlu0 %v4755, 80
      %v4836 = vpop.permute.xlu0 %4835
      %4837 = vrot.lane.b32.xlu0 %v4756, 80
      %v4838 = vpop.permute.xlu0 %4837
      %4839 = vrot.lane.b32.xlu0 %v4757, 80
      %v4840 = vpop.permute.xlu0 %4839
      %4841 = vrot.lane.b32.xlu0 %v4758, 80
      %v4842 = vpop.permute.xlu0 %4841
      %4843 = vrot.lane.b32.xlu0 %v4759, 80
      %v4844 = vpop.permute.xlu0 %4843
      %4845 = vrot.lane.b32.xlu0 %v4760, 80
      %v4846 = vpop.permute.xlu0 %4845
      %4847 = vrot.lane.b32.xlu0 %v4761, 80
      %v4848 = vpop.permute.xlu0 %4847
      %4849 = vrot.lane.b32.xlu0 %v4762, 80
      %v4850 = vpop.permute.xlu0 %4849
      %4851 = vrot.lane.b32.xlu0 %v4763, 80
      %v4852 = vpop.permute.xlu0 %4851
      %4853 = vrot.lane.b32.xlu0 %v4764, 80
      %v4854 = vpop.permute.xlu0 %4853
      %4855 = vrot.lane.b32.xlu0 %v4765, 80
      %v4856 = vpop.permute.xlu0 %4855
      %4857 = vrot.lane.b32.xlu0 %v4766, 80
      %v4858 = vpop.permute.xlu0 %4857
      %4859 = vrot.lane.b32.xlu0 %v4767, 80
      %v4860 = vpop.permute.xlu0 %4859
      %4861 = vrot.lane.b32.xlu0 %v4768, 80
      %v4862 = vpop.permute.xlu0 %4861
      %4863 = vrot.lane.b32.xlu0 %v4769, 80
      %v4864 = vpop.permute.xlu0 %4863
      %4865 = vrot.lane.b32.xlu0 %v4770, 80
      %v4866 = vpop.permute.xlu0 %4865
      %v4899 = vadd.f32 %v4579, %v4804
      %v4900 = vadd.f32 %v4580, %v4806
      %v4901 = vadd.f32 %v4581, %v4808
      %v4902 = vadd.f32 %v4582, %v4810
      %v4903 = vadd.f32 %v4583, %v4812
      %v4904 = vadd.f32 %v4584, %v4814
      %v4905 = vadd.f32 %v4585, %v4816
      %v4906 = vadd.f32 %v4586, %v4818
      %v4907 = vadd.f32 %v4587, %v4820
      %v4908 = vadd.f32 %v4588, %v4822
      %v4909 = vadd.f32 %v4589, %v4824
      %v4910 = vadd.f32 %v4590, %v4826
      %v4911 = vadd.f32 %v4591, %v4828
      %v4912 = vadd.f32 %v4592, %v4830
      %v4913 = vadd.f32 %v4593, %v4832
      %v4914 = vadd.f32 %v4594, %v4834
      %v4915 = vadd.f32 %v4595, %v4836
      %v4916 = vadd.f32 %v4596, %v4838
      %v4917 = vadd.f32 %v4597, %v4840
      %v4918 = vadd.f32 %v4598, %v4842
      %v4919 = vadd.f32 %v4599, %v4844
      %v4920 = vadd.f32 %v4600, %v4846
      %v4921 = vadd.f32 %v4601, %v4848
      %v4922 = vadd.f32 %v4602, %v4850
      %v4923 = vadd.f32 %v4603, %v4852
      %v4924 = vadd.f32 %v4604, %v4854
      %v4925 = vadd.f32 %v4605, %v4856
      %v4926 = vadd.f32 %v4606, %v4858
      %v4927 = vadd.f32 %v4607, %v4860
      %v4928 = vadd.f32 %v4608, %v4862
      %v4929 = vadd.f32 %v4609, %v4864
      %v4930 = vadd.f32 %v4610, %v4866
      %4931 = vset.pattern.permute.xlu0 12
      %4932 = vperm.xlu0 %4931, %v1283
      %v4933 = vpop.permute.xlu0 %4932
      %4935 = vset.pattern.permute.xlu0 12
      %4936 = vperm.xlu0 %4935, %v1284
      %v4937 = vpop.permute.xlu0 %4936
      %4939 = vset.pattern.permute.xlu0 12
      %4940 = vperm.xlu0 %4939, %v1285
      %v4941 = vpop.permute.xlu0 %4940
      %4943 = vset.pattern.permute.xlu0 12
      %4944 = vperm.xlu0 %4943, %v1286
      %v4945 = vpop.permute.xlu0 %4944
      %4947 = vset.pattern.permute.xlu0 12
      %4948 = vperm.xlu0 %4947, %v1287
      %v4949 = vpop.permute.xlu0 %4948
      %4951 = vset.pattern.permute.xlu0 12
      %4952 = vperm.xlu0 %4951, %v1288
      %v4953 = vpop.permute.xlu0 %4952
      %4955 = vset.pattern.permute.xlu0 12
      %4956 = vperm.xlu0 %4955, %v1289
      %v4957 = vpop.permute.xlu0 %4956
      %4959 = vset.pattern.permute.xlu0 12
      %4960 = vperm.xlu0 %4959, %v1290
      %v4961 = vpop.permute.xlu0 %4960
      %4963 = vset.pattern.permute.xlu0 12
      %4964 = vperm.xlu0 %4963, %v1291
      %v4965 = vpop.permute.xlu0 %4964
      %4967 = vset.pattern.permute.xlu0 12
      %4968 = vperm.xlu0 %4967, %v1292
      %v4969 = vpop.permute.xlu0 %4968
      %4971 = vset.pattern.permute.xlu0 12
      %4972 = vperm.xlu0 %4971, %v1293
      %v4973 = vpop.permute.xlu0 %4972
      %4975 = vset.pattern.permute.xlu0 12
      %4976 = vperm.xlu0 %4975, %v1294
      %v4977 = vpop.permute.xlu0 %4976
      %4979 = vset.pattern.permute.xlu0 12
      %4980 = vperm.xlu0 %4979, %v1295
      %v4981 = vpop.permute.xlu0 %4980
      %4983 = vset.pattern.permute.xlu0 12
      %4984 = vperm.xlu0 %4983, %v1296
      %v4985 = vpop.permute.xlu0 %4984
      %4987 = vset.pattern.permute.xlu0 12
      %4988 = vperm.xlu0 %4987, %v1297
      %v4989 = vpop.permute.xlu0 %4988
      %4991 = vset.pattern.permute.xlu0 12
      %4992 = vperm.xlu0 %4991, %v1298
      %v4993 = vpop.permute.xlu0 %4992
      %4995 = vset.pattern.permute.xlu0 12
      %4996 = vperm.xlu0 %4995, %v1299
      %v4997 = vpop.permute.xlu0 %4996
      %4999 = vset.pattern.permute.xlu0 12
      %5000 = vperm.xlu0 %4999, %v1300
      %v5001 = vpop.permute.xlu0 %5000
      %5003 = vset.pattern.permute.xlu0 12
      %5004 = vperm.xlu0 %5003, %v1301
      %v5005 = vpop.permute.xlu0 %5004
      %5007 = vset.pattern.permute.xlu0 12
      %5008 = vperm.xlu0 %5007, %v1302
      %v5009 = vpop.permute.xlu0 %5008
      %5011 = vset.pattern.permute.xlu0 12
      %5012 = vperm.xlu0 %5011, %v1303
      %v5013 = vpop.permute.xlu0 %5012
      %5015 = vset.pattern.permute.xlu0 12
      %5016 = vperm.xlu0 %5015, %v1304
      %v5017 = vpop.permute.xlu0 %5016
      %5019 = vset.pattern.permute.xlu0 12
      %5020 = vperm.xlu0 %5019, %v1305
      %v5021 = vpop.permute.xlu0 %5020
      %5023 = vset.pattern.permute.xlu0 12
      %5024 = vperm.xlu0 %5023, %v1306
      %v5025 = vpop.permute.xlu0 %5024
      %5027 = vset.pattern.permute.xlu0 12
      %5028 = vperm.xlu0 %5027, %v1307
      %v5029 = vpop.permute.xlu0 %5028
      %5031 = vset.pattern.permute.xlu0 12
      %5032 = vperm.xlu0 %5031, %v1308
      %v5033 = vpop.permute.xlu0 %5032
      %5035 = vset.pattern.permute.xlu0 12
      %5036 = vperm.xlu0 %5035, %v1309
      %v5037 = vpop.permute.xlu0 %5036
      %5039 = vset.pattern.permute.xlu0 12
      %5040 = vperm.xlu0 %5039, %v1310
      %v5041 = vpop.permute.xlu0 %5040
      %5043 = vset.pattern.permute.xlu0 12
      %5044 = vperm.xlu0 %5043, %v1311
      %v5045 = vpop.permute.xlu0 %5044
      %5047 = vset.pattern.permute.xlu0 12
      %5048 = vperm.xlu0 %5047, %v1312
      %v5049 = vpop.permute.xlu0 %5048
      %5051 = vset.pattern.permute.xlu0 12
      %5052 = vperm.xlu0 %5051, %v1313
      %v5053 = vpop.permute.xlu0 %5052
      %5055 = vset.pattern.permute.xlu0 12
      %5056 = vperm.xlu0 %5055, %v1314
      %v5057 = vpop.permute.xlu0 %5056
      %v5059 = vmul.f32 %v4933, %v375
      %v5060 = vmul.f32 %v4937, %v377
      %v5061 = vmul.f32 %v4941, %v379
      %v5062 = vmul.f32 %v4945, %v381
      %v5063 = vmul.f32 %v4949, %v383
      %v5064 = vmul.f32 %v4953, %v385
      %v5065 = vmul.f32 %v4957, %v387
      %v5066 = vmul.f32 %v4961, %v389
      %v5067 = vmul.f32 %v4965, %v391
      %v5068 = vmul.f32 %v4969, %v393
      %v5069 = vmul.f32 %v4973, %v395
      %v5070 = vmul.f32 %v4977, %v397
      %v5071 = vmul.f32 %v4981, %v399
      %v5072 = vmul.f32 %v4985, %v401
      %v5073 = vmul.f32 %v4989, %v403
      %v5074 = vmul.f32 %v4993, %v405
      %v5075 = vmul.f32 %v4997, %v407
      %v5076 = vmul.f32 %v5001, %v409
      %v5077 = vmul.f32 %v5005, %v411
      %v5078 = vmul.f32 %v5009, %v413
      %v5079 = vmul.f32 %v5013, %v415
      %v5080 = vmul.f32 %v5017, %v417
      %v5081 = vmul.f32 %v5021, %v419
      %v5082 = vmul.f32 %v5025, %v421
      %v5083 = vmul.f32 %v5029, %v423
      %v5084 = vmul.f32 %v5033, %v425
      %v5085 = vmul.f32 %v5037, %v427
      %v5086 = vmul.f32 %v5041, %v429
      %v5087 = vmul.f32 %v5045, %v431
      %v5088 = vmul.f32 %v5049, %v433
      %v5089 = vmul.f32 %v5053, %v435
      %v5090 = vmul.f32 %v5057, %v437
      %5123 = vrot.lane.b32.xlu0 %v5059, 64
      %v5124 = vpop.permute.xlu0 %5123
      %5125 = vrot.lane.b32.xlu0 %v5060, 64
      %v5126 = vpop.permute.xlu0 %5125
      %5127 = vrot.lane.b32.xlu0 %v5061, 64
      %v5128 = vpop.permute.xlu0 %5127
      %5129 = vrot.lane.b32.xlu0 %v5062, 64
      %v5130 = vpop.permute.xlu0 %5129
      %5131 = vrot.lane.b32.xlu0 %v5063, 64
      %v5132 = vpop.permute.xlu0 %5131
      %5133 = vrot.lane.b32.xlu0 %v5064, 64
      %v5134 = vpop.permute.xlu0 %5133
      %5135 = vrot.lane.b32.xlu0 %v5065, 64
      %v5136 = vpop.permute.xlu0 %5135
      %5137 = vrot.lane.b32.xlu0 %v5066, 64
      %v5138 = vpop.permute.xlu0 %5137
      %5139 = vrot.lane.b32.xlu0 %v5067, 64
      %v5140 = vpop.permute.xlu0 %5139
      %5141 = vrot.lane.b32.xlu0 %v5068, 64
      %v5142 = vpop.permute.xlu0 %5141
      %5143 = vrot.lane.b32.xlu0 %v5069, 64
      %v5144 = vpop.permute.xlu0 %5143
      %5145 = vrot.lane.b32.xlu0 %v5070, 64
      %v5146 = vpop.permute.xlu0 %5145
      %5147 = vrot.lane.b32.xlu0 %v5071, 64
      %v5148 = vpop.permute.xlu0 %5147
      %5149 = vrot.lane.b32.xlu0 %v5072, 64
      %v5150 = vpop.permute.xlu0 %5149
      %5151 = vrot.lane.b32.xlu0 %v5073, 64
      %v5152 = vpop.permute.xlu0 %5151
      %5153 = vrot.lane.b32.xlu0 %v5074, 64
      %v5154 = vpop.permute.xlu0 %5153
      %5155 = vrot.lane.b32.xlu0 %v5075, 64
      %v5156 = vpop.permute.xlu0 %5155
      %5157 = vrot.lane.b32.xlu0 %v5076, 64
      %v5158 = vpop.permute.xlu0 %5157
      %5159 = vrot.lane.b32.xlu0 %v5077, 64
      %v5160 = vpop.permute.xlu0 %5159
      %5161 = vrot.lane.b32.xlu0 %v5078, 64
      %v5162 = vpop.permute.xlu0 %5161
      %5163 = vrot.lane.b32.xlu0 %v5079, 64
      %v5164 = vpop.permute.xlu0 %5163
      %5165 = vrot.lane.b32.xlu0 %v5080, 64
      %v5166 = vpop.permute.xlu0 %5165
      %5167 = vrot.lane.b32.xlu0 %v5081, 64
      %v5168 = vpop.permute.xlu0 %5167
      %5169 = vrot.lane.b32.xlu0 %v5082, 64
      %v5170 = vpop.permute.xlu0 %5169
      %5171 = vrot.lane.b32.xlu0 %v5083, 64
      %v5172 = vpop.permute.xlu0 %5171
      %5173 = vrot.lane.b32.xlu0 %v5084, 64
      %v5174 = vpop.permute.xlu0 %5173
      %5175 = vrot.lane.b32.xlu0 %v5085, 64
      %v5176 = vpop.permute.xlu0 %5175
      %5177 = vrot.lane.b32.xlu0 %v5086, 64
      %v5178 = vpop.permute.xlu0 %5177
      %5179 = vrot.lane.b32.xlu0 %v5087, 64
      %v5180 = vpop.permute.xlu0 %5179
      %5181 = vrot.lane.b32.xlu0 %v5088, 64
      %v5182 = vpop.permute.xlu0 %5181
      %5183 = vrot.lane.b32.xlu0 %v5089, 64
      %v5184 = vpop.permute.xlu0 %5183
      %5185 = vrot.lane.b32.xlu0 %v5090, 64
      %v5186 = vpop.permute.xlu0 %5185
      %v5219 = vadd.f32 %v4899, %v5124
      %v5220 = vadd.f32 %v4900, %v5126
      %v5221 = vadd.f32 %v4901, %v5128
      %v5222 = vadd.f32 %v4902, %v5130
      %v5223 = vadd.f32 %v4903, %v5132
      %v5224 = vadd.f32 %v4904, %v5134
      %v5225 = vadd.f32 %v4905, %v5136
      %v5226 = vadd.f32 %v4906, %v5138
      %v5227 = vadd.f32 %v4907, %v5140
      %v5228 = vadd.f32 %v4908, %v5142
      %v5229 = vadd.f32 %v4909, %v5144
      %v5230 = vadd.f32 %v4910, %v5146
      %v5231 = vadd.f32 %v4911, %v5148
      %v5232 = vadd.f32 %v4912, %v5150
      %v5233 = vadd.f32 %v4913, %v5152
      %v5234 = vadd.f32 %v4914, %v5154
      %v5235 = vadd.f32 %v4915, %v5156
      %v5236 = vadd.f32 %v4916, %v5158
      %v5237 = vadd.f32 %v4917, %v5160
      %v5238 = vadd.f32 %v4918, %v5162
      %v5239 = vadd.f32 %v4919, %v5164
      %v5240 = vadd.f32 %v4920, %v5166
      %v5241 = vadd.f32 %v4921, %v5168
      %v5242 = vadd.f32 %v4922, %v5170
      %v5243 = vadd.f32 %v4923, %v5172
      %v5244 = vadd.f32 %v4924, %v5174
      %v5245 = vadd.f32 %v4925, %v5176
      %v5246 = vadd.f32 %v4926, %v5178
      %v5247 = vadd.f32 %v4927, %v5180
      %v5248 = vadd.f32 %v4928, %v5182
      %v5249 = vadd.f32 %v4929, %v5184
      %v5250 = vadd.f32 %v4930, %v5186
      %5251 = vset.pattern.permute.xlu0 13
      %5252 = vperm.xlu0 %5251, %v1283
      %v5253 = vpop.permute.xlu0 %5252
      %5255 = vset.pattern.permute.xlu0 13
      %5256 = vperm.xlu0 %5255, %v1284
      %v5257 = vpop.permute.xlu0 %5256
      %5259 = vset.pattern.permute.xlu0 13
      %5260 = vperm.xlu0 %5259, %v1285
      %v5261 = vpop.permute.xlu0 %5260
      %5263 = vset.pattern.permute.xlu0 13
      %5264 = vperm.xlu0 %5263, %v1286
      %v5265 = vpop.permute.xlu0 %5264
      %5267 = vset.pattern.permute.xlu0 13
      %5268 = vperm.xlu0 %5267, %v1287
      %v5269 = vpop.permute.xlu0 %5268
      %5271 = vset.pattern.permute.xlu0 13
      %5272 = vperm.xlu0 %5271, %v1288
      %v5273 = vpop.permute.xlu0 %5272
      %5275 = vset.pattern.permute.xlu0 13
      %5276 = vperm.xlu0 %5275, %v1289
      %v5277 = vpop.permute.xlu0 %5276
      %5279 = vset.pattern.permute.xlu0 13
      %5280 = vperm.xlu0 %5279, %v1290
      %v5281 = vpop.permute.xlu0 %5280
      %5283 = vset.pattern.permute.xlu0 13
      %5284 = vperm.xlu0 %5283, %v1291
      %v5285 = vpop.permute.xlu0 %5284
      %5287 = vset.pattern.permute.xlu0 13
      %5288 = vperm.xlu0 %5287, %v1292
      %v5289 = vpop.permute.xlu0 %5288
      %5291 = vset.pattern.permute.xlu0 13
      %5292 = vperm.xlu0 %5291, %v1293
      %v5293 = vpop.permute.xlu0 %5292
      %5295 = vset.pattern.permute.xlu0 13
      %5296 = vperm.xlu0 %5295, %v1294
      %v5297 = vpop.permute.xlu0 %5296
      %5299 = vset.pattern.permute.xlu0 13
      %5300 = vperm.xlu0 %5299, %v1295
      %v5301 = vpop.permute.xlu0 %5300
      %5303 = vset.pattern.permute.xlu0 13
      %5304 = vperm.xlu0 %5303, %v1296
      %v5305 = vpop.permute.xlu0 %5304
      %5307 = vset.pattern.permute.xlu0 13
      %5308 = vperm.xlu0 %5307, %v1297
      %v5309 = vpop.permute.xlu0 %5308
      %5311 = vset.pattern.permute.xlu0 13
      %5312 = vperm.xlu0 %5311, %v1298
      %v5313 = vpop.permute.xlu0 %5312
      %5315 = vset.pattern.permute.xlu0 13
      %5316 = vperm.xlu0 %5315, %v1299
      %v5317 = vpop.permute.xlu0 %5316
      %5319 = vset.pattern.permute.xlu0 13
      %5320 = vperm.xlu0 %5319, %v1300
      %v5321 = vpop.permute.xlu0 %5320
      %5323 = vset.pattern.permute.xlu0 13
      %5324 = vperm.xlu0 %5323, %v1301
      %v5325 = vpop.permute.xlu0 %5324
      %5327 = vset.pattern.permute.xlu0 13
      %5328 = vperm.xlu0 %5327, %v1302
      %v5329 = vpop.permute.xlu0 %5328
      %5331 = vset.pattern.permute.xlu0 13
      %5332 = vperm.xlu0 %5331, %v1303
      %v5333 = vpop.permute.xlu0 %5332
      %5335 = vset.pattern.permute.xlu0 13
      %5336 = vperm.xlu0 %5335, %v1304
      %v5337 = vpop.permute.xlu0 %5336
      %5339 = vset.pattern.permute.xlu0 13
      %5340 = vperm.xlu0 %5339, %v1305
      %v5341 = vpop.permute.xlu0 %5340
      %5343 = vset.pattern.permute.xlu0 13
      %5344 = vperm.xlu0 %5343, %v1306
      %v5345 = vpop.permute.xlu0 %5344
      %5347 = vset.pattern.permute.xlu0 13
      %5348 = vperm.xlu0 %5347, %v1307
      %v5349 = vpop.permute.xlu0 %5348
      %5351 = vset.pattern.permute.xlu0 13
      %5352 = vperm.xlu0 %5351, %v1308
      %v5353 = vpop.permute.xlu0 %5352
      %5355 = vset.pattern.permute.xlu0 13
      %5356 = vperm.xlu0 %5355, %v1309
      %v5357 = vpop.permute.xlu0 %5356
      %5359 = vset.pattern.permute.xlu0 13
      %5360 = vperm.xlu0 %5359, %v1310
      %v5361 = vpop.permute.xlu0 %5360
      %5363 = vset.pattern.permute.xlu0 13
      %5364 = vperm.xlu0 %5363, %v1311
      %v5365 = vpop.permute.xlu0 %5364
      %5367 = vset.pattern.permute.xlu0 13
      %5368 = vperm.xlu0 %5367, %v1312
      %v5369 = vpop.permute.xlu0 %5368
      %5371 = vset.pattern.permute.xlu0 13
      %5372 = vperm.xlu0 %5371, %v1313
      %v5373 = vpop.permute.xlu0 %5372
      %5375 = vset.pattern.permute.xlu0 13
      %5376 = vperm.xlu0 %5375, %v1314
      %v5377 = vpop.permute.xlu0 %5376
      %v5379 = vmul.f32 %v5253, %v375
      %v5380 = vmul.f32 %v5257, %v377
      %v5381 = vmul.f32 %v5261, %v379
      %v5382 = vmul.f32 %v5265, %v381
      %v5383 = vmul.f32 %v5269, %v383
      %v5384 = vmul.f32 %v5273, %v385
      %v5385 = vmul.f32 %v5277, %v387
      %v5386 = vmul.f32 %v5281, %v389
      %v5387 = vmul.f32 %v5285, %v391
      %v5388 = vmul.f32 %v5289, %v393
      %v5389 = vmul.f32 %v5293, %v395
      %v5390 = vmul.f32 %v5297, %v397
      %v5391 = vmul.f32 %v5301, %v399
      %v5392 = vmul.f32 %v5305, %v401
      %v5393 = vmul.f32 %v5309, %v403
      %v5394 = vmul.f32 %v5313, %v405
      %v5395 = vmul.f32 %v5317, %v407
      %v5396 = vmul.f32 %v5321, %v409
      %v5397 = vmul.f32 %v5325, %v411
      %v5398 = vmul.f32 %v5329, %v413
      %v5399 = vmul.f32 %v5333, %v415
      %v5400 = vmul.f32 %v5337, %v417
      %v5401 = vmul.f32 %v5341, %v419
      %v5402 = vmul.f32 %v5345, %v421
      %v5403 = vmul.f32 %v5349, %v423
      %v5404 = vmul.f32 %v5353, %v425
      %v5405 = vmul.f32 %v5357, %v427
      %v5406 = vmul.f32 %v5361, %v429
      %v5407 = vmul.f32 %v5365, %v431
      %v5408 = vmul.f32 %v5369, %v433
      %v5409 = vmul.f32 %v5373, %v435
      %v5410 = vmul.f32 %v5377, %v437
      %5443 = vrot.lane.b32.xlu0 %v5379, 48
      %v5444 = vpop.permute.xlu0 %5443
      %5445 = vrot.lane.b32.xlu0 %v5380, 48
      %v5446 = vpop.permute.xlu0 %5445
      %5447 = vrot.lane.b32.xlu0 %v5381, 48
      %v5448 = vpop.permute.xlu0 %5447
      %5449 = vrot.lane.b32.xlu0 %v5382, 48
      %v5450 = vpop.permute.xlu0 %5449
      %5451 = vrot.lane.b32.xlu0 %v5383, 48
      %v5452 = vpop.permute.xlu0 %5451
      %5453 = vrot.lane.b32.xlu0 %v5384, 48
      %v5454 = vpop.permute.xlu0 %5453
      %5455 = vrot.lane.b32.xlu0 %v5385, 48
      %v5456 = vpop.permute.xlu0 %5455
      %5457 = vrot.lane.b32.xlu0 %v5386, 48
      %v5458 = vpop.permute.xlu0 %5457
      %5459 = vrot.lane.b32.xlu0 %v5387, 48
      %v5460 = vpop.permute.xlu0 %5459
      %5461 = vrot.lane.b32.xlu0 %v5388, 48
      %v5462 = vpop.permute.xlu0 %5461
      %5463 = vrot.lane.b32.xlu0 %v5389, 48
      %v5464 = vpop.permute.xlu0 %5463
      %5465 = vrot.lane.b32.xlu0 %v5390, 48
      %v5466 = vpop.permute.xlu0 %5465
      %5467 = vrot.lane.b32.xlu0 %v5391, 48
      %v5468 = vpop.permute.xlu0 %5467
      %5469 = vrot.lane.b32.xlu0 %v5392, 48
      %v5470 = vpop.permute.xlu0 %5469
      %5471 = vrot.lane.b32.xlu0 %v5393, 48
      %v5472 = vpop.permute.xlu0 %5471
      %5473 = vrot.lane.b32.xlu0 %v5394, 48
      %v5474 = vpop.permute.xlu0 %5473
      %5475 = vrot.lane.b32.xlu0 %v5395, 48
      %v5476 = vpop.permute.xlu0 %5475
      %5477 = vrot.lane.b32.xlu0 %v5396, 48
      %v5478 = vpop.permute.xlu0 %5477
      %5479 = vrot.lane.b32.xlu0 %v5397, 48
      %v5480 = vpop.permute.xlu0 %5479
      %5481 = vrot.lane.b32.xlu0 %v5398, 48
      %v5482 = vpop.permute.xlu0 %5481
      %5483 = vrot.lane.b32.xlu0 %v5399, 48
      %v5484 = vpop.permute.xlu0 %5483
      %5485 = vrot.lane.b32.xlu0 %v5400, 48
      %v5486 = vpop.permute.xlu0 %5485
      %5487 = vrot.lane.b32.xlu0 %v5401, 48
      %v5488 = vpop.permute.xlu0 %5487
      %5489 = vrot.lane.b32.xlu0 %v5402, 48
      %v5490 = vpop.permute.xlu0 %5489
      %5491 = vrot.lane.b32.xlu0 %v5403, 48
      %v5492 = vpop.permute.xlu0 %5491
      %5493 = vrot.lane.b32.xlu0 %v5404, 48
      %v5494 = vpop.permute.xlu0 %5493
      %5495 = vrot.lane.b32.xlu0 %v5405, 48
      %v5496 = vpop.permute.xlu0 %5495
      %5497 = vrot.lane.b32.xlu0 %v5406, 48
      %v5498 = vpop.permute.xlu0 %5497
      %5499 = vrot.lane.b32.xlu0 %v5407, 48
      %v5500 = vpop.permute.xlu0 %5499
      %5501 = vrot.lane.b32.xlu0 %v5408, 48
      %v5502 = vpop.permute.xlu0 %5501
      %5503 = vrot.lane.b32.xlu0 %v5409, 48
      %v5504 = vpop.permute.xlu0 %5503
      %5505 = vrot.lane.b32.xlu0 %v5410, 48
      %v5506 = vpop.permute.xlu0 %5505
      %v5539 = vadd.f32 %v5219, %v5444
      %v5540 = vadd.f32 %v5220, %v5446
      %v5541 = vadd.f32 %v5221, %v5448
      %v5542 = vadd.f32 %v5222, %v5450
      %v5543 = vadd.f32 %v5223, %v5452
      %v5544 = vadd.f32 %v5224, %v5454
      %v5545 = vadd.f32 %v5225, %v5456
      %v5546 = vadd.f32 %v5226, %v5458
      %v5547 = vadd.f32 %v5227, %v5460
      %v5548 = vadd.f32 %v5228, %v5462
      %v5549 = vadd.f32 %v5229, %v5464
      %v5550 = vadd.f32 %v5230, %v5466
      %v5551 = vadd.f32 %v5231, %v5468
      %v5552 = vadd.f32 %v5232, %v5470
      %v5553 = vadd.f32 %v5233, %v5472
      %v5554 = vadd.f32 %v5234, %v5474
      %v5555 = vadd.f32 %v5235, %v5476
      %v5556 = vadd.f32 %v5236, %v5478
      %v5557 = vadd.f32 %v5237, %v5480
      %v5558 = vadd.f32 %v5238, %v5482
      %v5559 = vadd.f32 %v5239, %v5484
      %v5560 = vadd.f32 %v5240, %v5486
      %v5561 = vadd.f32 %v5241, %v5488
      %v5562 = vadd.f32 %v5242, %v5490
      %v5563 = vadd.f32 %v5243, %v5492
      %v5564 = vadd.f32 %v5244, %v5494
      %v5565 = vadd.f32 %v5245, %v5496
      %v5566 = vadd.f32 %v5246, %v5498
      %v5567 = vadd.f32 %v5247, %v5500
      %v5568 = vadd.f32 %v5248, %v5502
      %v5569 = vadd.f32 %v5249, %v5504
      %v5570 = vadd.f32 %v5250, %v5506
      %5571 = vset.pattern.permute.xlu0 14
      %5572 = vperm.xlu0 %5571, %v1283
      %v5573 = vpop.permute.xlu0 %5572
      %5575 = vset.pattern.permute.xlu0 14
      %5576 = vperm.xlu0 %5575, %v1284
      %v5577 = vpop.permute.xlu0 %5576
      %5579 = vset.pattern.permute.xlu0 14
      %5580 = vperm.xlu0 %5579, %v1285
      %v5581 = vpop.permute.xlu0 %5580
      %5583 = vset.pattern.permute.xlu0 14
      %5584 = vperm.xlu0 %5583, %v1286
      %v5585 = vpop.permute.xlu0 %5584
      %5587 = vset.pattern.permute.xlu0 14
      %5588 = vperm.xlu0 %5587, %v1287
      %v5589 = vpop.permute.xlu0 %5588
      %5591 = vset.pattern.permute.xlu0 14
      %5592 = vperm.xlu0 %5591, %v1288
      %v5593 = vpop.permute.xlu0 %5592
      %5595 = vset.pattern.permute.xlu0 14
      %5596 = vperm.xlu0 %5595, %v1289
      %v5597 = vpop.permute.xlu0 %5596
      %5599 = vset.pattern.permute.xlu0 14
      %5600 = vperm.xlu0 %5599, %v1290
      %v5601 = vpop.permute.xlu0 %5600
      %5603 = vset.pattern.permute.xlu0 14
      %5604 = vperm.xlu0 %5603, %v1291
      %v5605 = vpop.permute.xlu0 %5604
      %5607 = vset.pattern.permute.xlu0 14
      %5608 = vperm.xlu0 %5607, %v1292
      %v5609 = vpop.permute.xlu0 %5608
      %5611 = vset.pattern.permute.xlu0 14
      %5612 = vperm.xlu0 %5611, %v1293
      %v5613 = vpop.permute.xlu0 %5612
      %5615 = vset.pattern.permute.xlu0 14
      %5616 = vperm.xlu0 %5615, %v1294
      %v5617 = vpop.permute.xlu0 %5616
      %5619 = vset.pattern.permute.xlu0 14
      %5620 = vperm.xlu0 %5619, %v1295
      %v5621 = vpop.permute.xlu0 %5620
      %5623 = vset.pattern.permute.xlu0 14
      %5624 = vperm.xlu0 %5623, %v1296
      %v5625 = vpop.permute.xlu0 %5624
      %5627 = vset.pattern.permute.xlu0 14
      %5628 = vperm.xlu0 %5627, %v1297
      %v5629 = vpop.permute.xlu0 %5628
      %5631 = vset.pattern.permute.xlu0 14
      %5632 = vperm.xlu0 %5631, %v1298
      %v5633 = vpop.permute.xlu0 %5632
      %5635 = vset.pattern.permute.xlu0 14
      %5636 = vperm.xlu0 %5635, %v1299
      %v5637 = vpop.permute.xlu0 %5636
      %5639 = vset.pattern.permute.xlu0 14
      %5640 = vperm.xlu0 %5639, %v1300
      %v5641 = vpop.permute.xlu0 %5640
      %5643 = vset.pattern.permute.xlu0 14
      %5644 = vperm.xlu0 %5643, %v1301
      %v5645 = vpop.permute.xlu0 %5644
      %5647 = vset.pattern.permute.xlu0 14
      %5648 = vperm.xlu0 %5647, %v1302
      %v5649 = vpop.permute.xlu0 %5648
      %5651 = vset.pattern.permute.xlu0 14
      %5652 = vperm.xlu0 %5651, %v1303
      %v5653 = vpop.permute.xlu0 %5652
      %5655 = vset.pattern.permute.xlu0 14
      %5656 = vperm.xlu0 %5655, %v1304
      %v5657 = vpop.permute.xlu0 %5656
      %5659 = vset.pattern.permute.xlu0 14
      %5660 = vperm.xlu0 %5659, %v1305
      %v5661 = vpop.permute.xlu0 %5660
      %5663 = vset.pattern.permute.xlu0 14
      %5664 = vperm.xlu0 %5663, %v1306
      %v5665 = vpop.permute.xlu0 %5664
      %5667 = vset.pattern.permute.xlu0 14
      %5668 = vperm.xlu0 %5667, %v1307
      %v5669 = vpop.permute.xlu0 %5668
      %5671 = vset.pattern.permute.xlu0 14
      %5672 = vperm.xlu0 %5671, %v1308
      %v5673 = vpop.permute.xlu0 %5672
      %5675 = vset.pattern.permute.xlu0 14
      %5676 = vperm.xlu0 %5675, %v1309
      %v5677 = vpop.permute.xlu0 %5676
      %5679 = vset.pattern.permute.xlu0 14
      %5680 = vperm.xlu0 %5679, %v1310
      %v5681 = vpop.permute.xlu0 %5680
      %5683 = vset.pattern.permute.xlu0 14
      %5684 = vperm.xlu0 %5683, %v1311
      %v5685 = vpop.permute.xlu0 %5684
      %5687 = vset.pattern.permute.xlu0 14
      %5688 = vperm.xlu0 %5687, %v1312
      %v5689 = vpop.permute.xlu0 %5688
      %5691 = vset.pattern.permute.xlu0 14
      %5692 = vperm.xlu0 %5691, %v1313
      %v5693 = vpop.permute.xlu0 %5692
      %5695 = vset.pattern.permute.xlu0 14
      %5696 = vperm.xlu0 %5695, %v1314
      %v5697 = vpop.permute.xlu0 %5696
      %v5699 = vmul.f32 %v5573, %v375
      %v5700 = vmul.f32 %v5577, %v377
      %v5701 = vmul.f32 %v5581, %v379
      %v5702 = vmul.f32 %v5585, %v381
      %v5703 = vmul.f32 %v5589, %v383
      %v5704 = vmul.f32 %v5593, %v385
      %v5705 = vmul.f32 %v5597, %v387
      %v5706 = vmul.f32 %v5601, %v389
      %v5707 = vmul.f32 %v5605, %v391
      %v5708 = vmul.f32 %v5609, %v393
      %v5709 = vmul.f32 %v5613, %v395
      %v5710 = vmul.f32 %v5617, %v397
      %v5711 = vmul.f32 %v5621, %v399
      %v5712 = vmul.f32 %v5625, %v401
      %v5713 = vmul.f32 %v5629, %v403
      %v5714 = vmul.f32 %v5633, %v405
      %v5715 = vmul.f32 %v5637, %v407
      %v5716 = vmul.f32 %v5641, %v409
      %v5717 = vmul.f32 %v5645, %v411
      %v5718 = vmul.f32 %v5649, %v413
      %v5719 = vmul.f32 %v5653, %v415
      %v5720 = vmul.f32 %v5657, %v417
      %v5721 = vmul.f32 %v5661, %v419
      %v5722 = vmul.f32 %v5665, %v421
      %v5723 = vmul.f32 %v5669, %v423
      %v5724 = vmul.f32 %v5673, %v425
      %v5725 = vmul.f32 %v5677, %v427
      %v5726 = vmul.f32 %v5681, %v429
      %v5727 = vmul.f32 %v5685, %v431
      %v5728 = vmul.f32 %v5689, %v433
      %v5729 = vmul.f32 %v5693, %v435
      %v5730 = vmul.f32 %v5697, %v437
      %5763 = vrot.lane.b32.xlu0 %v5699, 32
      %v5764 = vpop.permute.xlu0 %5763
      %5765 = vrot.lane.b32.xlu0 %v5700, 32
      %v5766 = vpop.permute.xlu0 %5765
      %5767 = vrot.lane.b32.xlu0 %v5701, 32
      %v5768 = vpop.permute.xlu0 %5767
      %5769 = vrot.lane.b32.xlu0 %v5702, 32
      %v5770 = vpop.permute.xlu0 %5769
      %5771 = vrot.lane.b32.xlu0 %v5703, 32
      %v5772 = vpop.permute.xlu0 %5771
      %5773 = vrot.lane.b32.xlu0 %v5704, 32
      %v5774 = vpop.permute.xlu0 %5773
      %5775 = vrot.lane.b32.xlu0 %v5705, 32
      %v5776 = vpop.permute.xlu0 %5775
      %5777 = vrot.lane.b32.xlu0 %v5706, 32
      %v5778 = vpop.permute.xlu0 %5777
      %5779 = vrot.lane.b32.xlu0 %v5707, 32
      %v5780 = vpop.permute.xlu0 %5779
      %5781 = vrot.lane.b32.xlu0 %v5708, 32
      %v5782 = vpop.permute.xlu0 %5781
      %5783 = vrot.lane.b32.xlu0 %v5709, 32
      %v5784 = vpop.permute.xlu0 %5783
      %5785 = vrot.lane.b32.xlu0 %v5710, 32
      %v5786 = vpop.permute.xlu0 %5785
      %5787 = vrot.lane.b32.xlu0 %v5711, 32
      %v5788 = vpop.permute.xlu0 %5787
      %5789 = vrot.lane.b32.xlu0 %v5712, 32
      %v5790 = vpop.permute.xlu0 %5789
      %5791 = vrot.lane.b32.xlu0 %v5713, 32
      %v5792 = vpop.permute.xlu0 %5791
      %5793 = vrot.lane.b32.xlu0 %v5714, 32
      %v5794 = vpop.permute.xlu0 %5793
      %5795 = vrot.lane.b32.xlu0 %v5715, 32
      %v5796 = vpop.permute.xlu0 %5795
      %5797 = vrot.lane.b32.xlu0 %v5716, 32
      %v5798 = vpop.permute.xlu0 %5797
      %5799 = vrot.lane.b32.xlu0 %v5717, 32
      %v5800 = vpop.permute.xlu0 %5799
      %5801 = vrot.lane.b32.xlu0 %v5718, 32
      %v5802 = vpop.permute.xlu0 %5801
      %5803 = vrot.lane.b32.xlu0 %v5719, 32
      %v5804 = vpop.permute.xlu0 %5803
      %5805 = vrot.lane.b32.xlu0 %v5720, 32
      %v5806 = vpop.permute.xlu0 %5805
      %5807 = vrot.lane.b32.xlu0 %v5721, 32
      %v5808 = vpop.permute.xlu0 %5807
      %5809 = vrot.lane.b32.xlu0 %v5722, 32
      %v5810 = vpop.permute.xlu0 %5809
      %5811 = vrot.lane.b32.xlu0 %v5723, 32
      %v5812 = vpop.permute.xlu0 %5811
      %5813 = vrot.lane.b32.xlu0 %v5724, 32
      %v5814 = vpop.permute.xlu0 %5813
      %5815 = vrot.lane.b32.xlu0 %v5725, 32
      %v5816 = vpop.permute.xlu0 %5815
      %5817 = vrot.lane.b32.xlu0 %v5726, 32
      %v5818 = vpop.permute.xlu0 %5817
      %5819 = vrot.lane.b32.xlu0 %v5727, 32
      %v5820 = vpop.permute.xlu0 %5819
      %5821 = vrot.lane.b32.xlu0 %v5728, 32
      %v5822 = vpop.permute.xlu0 %5821
      %5823 = vrot.lane.b32.xlu0 %v5729, 32
      %v5824 = vpop.permute.xlu0 %5823
      %5825 = vrot.lane.b32.xlu0 %v5730, 32
      %v5826 = vpop.permute.xlu0 %5825
      %v5859 = vadd.f32 %v5539, %v5764
      %v5860 = vadd.f32 %v5540, %v5766
      %v5861 = vadd.f32 %v5541, %v5768
      %v5862 = vadd.f32 %v5542, %v5770
      %v5863 = vadd.f32 %v5543, %v5772
      %v5864 = vadd.f32 %v5544, %v5774
      %v5865 = vadd.f32 %v5545, %v5776
      %v5866 = vadd.f32 %v5546, %v5778
      %v5867 = vadd.f32 %v5547, %v5780
      %v5868 = vadd.f32 %v5548, %v5782
      %v5869 = vadd.f32 %v5549, %v5784
      %v5870 = vadd.f32 %v5550, %v5786
      %v5871 = vadd.f32 %v5551, %v5788
      %v5872 = vadd.f32 %v5552, %v5790
      %v5873 = vadd.f32 %v5553, %v5792
      %v5874 = vadd.f32 %v5554, %v5794
      %v5875 = vadd.f32 %v5555, %v5796
      %v5876 = vadd.f32 %v5556, %v5798
      %v5877 = vadd.f32 %v5557, %v5800
      %v5878 = vadd.f32 %v5558, %v5802
      %v5879 = vadd.f32 %v5559, %v5804
      %v5880 = vadd.f32 %v5560, %v5806
      %v5881 = vadd.f32 %v5561, %v5808
      %v5882 = vadd.f32 %v5562, %v5810
      %v5883 = vadd.f32 %v5563, %v5812
      %v5884 = vadd.f32 %v5564, %v5814
      %v5885 = vadd.f32 %v5565, %v5816
      %v5886 = vadd.f32 %v5566, %v5818
      %v5887 = vadd.f32 %v5567, %v5820
      %v5888 = vadd.f32 %v5568, %v5822
      %v5889 = vadd.f32 %v5569, %v5824
      %v5890 = vadd.f32 %v5570, %v5826
      %5891 = vset.pattern.permute.xlu0 15
      %5892 = vperm.xlu0 %5891, %v1283
      %v5893 = vpop.permute.xlu0 %5892
      %5895 = vset.pattern.permute.xlu0 15
      %5896 = vperm.xlu0 %5895, %v1284
      %v5897 = vpop.permute.xlu0 %5896
      %5899 = vset.pattern.permute.xlu0 15
      %5900 = vperm.xlu0 %5899, %v1285
      %v5901 = vpop.permute.xlu0 %5900
      %5903 = vset.pattern.permute.xlu0 15
      %5904 = vperm.xlu0 %5903, %v1286
      %v5905 = vpop.permute.xlu0 %5904
      %5907 = vset.pattern.permute.xlu0 15
      %5908 = vperm.xlu0 %5907, %v1287
      %v5909 = vpop.permute.xlu0 %5908
      %5911 = vset.pattern.permute.xlu0 15
      %5912 = vperm.xlu0 %5911, %v1288
      %v5913 = vpop.permute.xlu0 %5912
      %5915 = vset.pattern.permute.xlu0 15
      %5916 = vperm.xlu0 %5915, %v1289
      %v5917 = vpop.permute.xlu0 %5916
      %5919 = vset.pattern.permute.xlu0 15
      %5920 = vperm.xlu0 %5919, %v1290
      %v5921 = vpop.permute.xlu0 %5920
      %5923 = vset.pattern.permute.xlu0 15
      %5924 = vperm.xlu0 %5923, %v1291
      %v5925 = vpop.permute.xlu0 %5924
      %5927 = vset.pattern.permute.xlu0 15
      %5928 = vperm.xlu0 %5927, %v1292
      %v5929 = vpop.permute.xlu0 %5928
      %5931 = vset.pattern.permute.xlu0 15
      %5932 = vperm.xlu0 %5931, %v1293
      %v5933 = vpop.permute.xlu0 %5932
      %5935 = vset.pattern.permute.xlu0 15
      %5936 = vperm.xlu0 %5935, %v1294
      %v5937 = vpop.permute.xlu0 %5936
      %5939 = vset.pattern.permute.xlu0 15
      %5940 = vperm.xlu0 %5939, %v1295
      %v5941 = vpop.permute.xlu0 %5940
      %5943 = vset.pattern.permute.xlu0 15
      %5944 = vperm.xlu0 %5943, %v1296
      %v5945 = vpop.permute.xlu0 %5944
      %5947 = vset.pattern.permute.xlu0 15
      %5948 = vperm.xlu0 %5947, %v1297
      %v5949 = vpop.permute.xlu0 %5948
      %5951 = vset.pattern.permute.xlu0 15
      %5952 = vperm.xlu0 %5951, %v1298
      %v5953 = vpop.permute.xlu0 %5952
      %5955 = vset.pattern.permute.xlu0 15
      %5956 = vperm.xlu0 %5955, %v1299
      %v5957 = vpop.permute.xlu0 %5956
      %5959 = vset.pattern.permute.xlu0 15
      %5960 = vperm.xlu0 %5959, %v1300
      %v5961 = vpop.permute.xlu0 %5960
      %5963 = vset.pattern.permute.xlu0 15
      %5964 = vperm.xlu0 %5963, %v1301
      %v5965 = vpop.permute.xlu0 %5964
      %5967 = vset.pattern.permute.xlu0 15
      %5968 = vperm.xlu0 %5967, %v1302
      %v5969 = vpop.permute.xlu0 %5968
      %5971 = vset.pattern.permute.xlu0 15
      %5972 = vperm.xlu0 %5971, %v1303
      %v5973 = vpop.permute.xlu0 %5972
      %5975 = vset.pattern.permute.xlu0 15
      %5976 = vperm.xlu0 %5975, %v1304
      %v5977 = vpop.permute.xlu0 %5976
      %5979 = vset.pattern.permute.xlu0 15
      %5980 = vperm.xlu0 %5979, %v1305
      %v5981 = vpop.permute.xlu0 %5980
      %5983 = vset.pattern.permute.xlu0 15
      %5984 = vperm.xlu0 %5983, %v1306
      %v5985 = vpop.permute.xlu0 %5984
      %5987 = vset.pattern.permute.xlu0 15
      %5988 = vperm.xlu0 %5987, %v1307
      %v5989 = vpop.permute.xlu0 %5988
      %5991 = vset.pattern.permute.xlu0 15
      %5992 = vperm.xlu0 %5991, %v1308
      %v5993 = vpop.permute.xlu0 %5992
      %5995 = vset.pattern.permute.xlu0 15
      %5996 = vperm.xlu0 %5995, %v1309
      %v5997 = vpop.permute.xlu0 %5996
      %5999 = vset.pattern.permute.xlu0 15
      %6000 = vperm.xlu0 %5999, %v1310
      %v6001 = vpop.permute.xlu0 %6000
      %6003 = vset.pattern.permute.xlu0 15
      %6004 = vperm.xlu0 %6003, %v1311
      %v6005 = vpop.permute.xlu0 %6004
      %6007 = vset.pattern.permute.xlu0 15
      %6008 = vperm.xlu0 %6007, %v1312
      %v6009 = vpop.permute.xlu0 %6008
      %6011 = vset.pattern.permute.xlu0 15
      %6012 = vperm.xlu0 %6011, %v1313
      %v6013 = vpop.permute.xlu0 %6012
      %6015 = vset.pattern.permute.xlu0 15
      %6016 = vperm.xlu0 %6015, %v1314
      %v6017 = vpop.permute.xlu0 %6016
      %v6019 = vmul.f32 %v5893, %v375
      %v6020 = vmul.f32 %v5897, %v377
      %v6021 = vmul.f32 %v5901, %v379
      %v6022 = vmul.f32 %v5905, %v381
      %v6023 = vmul.f32 %v5909, %v383
      %v6024 = vmul.f32 %v5913, %v385
      %v6025 = vmul.f32 %v5917, %v387
      %v6026 = vmul.f32 %v5921, %v389
      %v6027 = vmul.f32 %v5925, %v391
      %v6028 = vmul.f32 %v5929, %v393
      %v6029 = vmul.f32 %v5933, %v395
      %v6030 = vmul.f32 %v5937, %v397
      %v6031 = vmul.f32 %v5941, %v399
      %v6032 = vmul.f32 %v5945, %v401
      %v6033 = vmul.f32 %v5949, %v403
      %v6034 = vmul.f32 %v5953, %v405
      %v6035 = vmul.f32 %v5957, %v407
      %v6036 = vmul.f32 %v5961, %v409
      %v6037 = vmul.f32 %v5965, %v411
      %v6038 = vmul.f32 %v5969, %v413
      %v6039 = vmul.f32 %v5973, %v415
      %v6040 = vmul.f32 %v5977, %v417
      %v6041 = vmul.f32 %v5981, %v419
      %v6042 = vmul.f32 %v5985, %v421
      %v6043 = vmul.f32 %v5989, %v423
      %v6044 = vmul.f32 %v5993, %v425
      %v6045 = vmul.f32 %v5997, %v427
      %v6046 = vmul.f32 %v6001, %v429
      %v6047 = vmul.f32 %v6005, %v431
      %v6048 = vmul.f32 %v6009, %v433
      %v6049 = vmul.f32 %v6013, %v435
      %v6050 = vmul.f32 %v6017, %v437
      %6083 = vrot.lane.b32.xlu0 %v6019, 16
      %v6084 = vpop.permute.xlu0 %6083
      %6085 = vrot.lane.b32.xlu0 %v6020, 16
      %v6086 = vpop.permute.xlu0 %6085
      %6087 = vrot.lane.b32.xlu0 %v6021, 16
      %v6088 = vpop.permute.xlu0 %6087
      %6089 = vrot.lane.b32.xlu0 %v6022, 16
      %v6090 = vpop.permute.xlu0 %6089
      %6091 = vrot.lane.b32.xlu0 %v6023, 16
      %v6092 = vpop.permute.xlu0 %6091
      %6093 = vrot.lane.b32.xlu0 %v6024, 16
      %v6094 = vpop.permute.xlu0 %6093
      %6095 = vrot.lane.b32.xlu0 %v6025, 16
      %v6096 = vpop.permute.xlu0 %6095
      %6097 = vrot.lane.b32.xlu0 %v6026, 16
      %v6098 = vpop.permute.xlu0 %6097
      %6099 = vrot.lane.b32.xlu0 %v6027, 16
      %v6100 = vpop.permute.xlu0 %6099
      %6101 = vrot.lane.b32.xlu0 %v6028, 16
      %v6102 = vpop.permute.xlu0 %6101
      %6103 = vrot.lane.b32.xlu0 %v6029, 16
      %v6104 = vpop.permute.xlu0 %6103
      %6105 = vrot.lane.b32.xlu0 %v6030, 16
      %v6106 = vpop.permute.xlu0 %6105
      %6107 = vrot.lane.b32.xlu0 %v6031, 16
      %v6108 = vpop.permute.xlu0 %6107
      %6109 = vrot.lane.b32.xlu0 %v6032, 16
      %v6110 = vpop.permute.xlu0 %6109
      %6111 = vrot.lane.b32.xlu0 %v6033, 16
      %v6112 = vpop.permute.xlu0 %6111
      %6113 = vrot.lane.b32.xlu0 %v6034, 16
      %v6114 = vpop.permute.xlu0 %6113
      %6115 = vrot.lane.b32.xlu0 %v6035, 16
      %v6116 = vpop.permute.xlu0 %6115
      %6117 = vrot.lane.b32.xlu0 %v6036, 16
      %v6118 = vpop.permute.xlu0 %6117
      %6119 = vrot.lane.b32.xlu0 %v6037, 16
      %v6120 = vpop.permute.xlu0 %6119
      %6121 = vrot.lane.b32.xlu0 %v6038, 16
      %v6122 = vpop.permute.xlu0 %6121
      %6123 = vrot.lane.b32.xlu0 %v6039, 16
      %v6124 = vpop.permute.xlu0 %6123
      %6125 = vrot.lane.b32.xlu0 %v6040, 16
      %v6126 = vpop.permute.xlu0 %6125
      %6127 = vrot.lane.b32.xlu0 %v6041, 16
      %v6128 = vpop.permute.xlu0 %6127
      %6129 = vrot.lane.b32.xlu0 %v6042, 16
      %v6130 = vpop.permute.xlu0 %6129
      %6131 = vrot.lane.b32.xlu0 %v6043, 16
      %v6132 = vpop.permute.xlu0 %6131
      %6133 = vrot.lane.b32.xlu0 %v6044, 16
      %v6134 = vpop.permute.xlu0 %6133
      %6135 = vrot.lane.b32.xlu0 %v6045, 16
      %v6136 = vpop.permute.xlu0 %6135
      %6137 = vrot.lane.b32.xlu0 %v6046, 16
      %v6138 = vpop.permute.xlu0 %6137
      %6139 = vrot.lane.b32.xlu0 %v6047, 16
      %v6140 = vpop.permute.xlu0 %6139
      %6141 = vrot.lane.b32.xlu0 %v6048, 16
      %v6142 = vpop.permute.xlu0 %6141
      %6143 = vrot.lane.b32.xlu0 %v6049, 16
      %v6144 = vpop.permute.xlu0 %6143
      %6145 = vrot.lane.b32.xlu0 %v6050, 16
      %v6146 = vpop.permute.xlu0 %6145
      %v6179 = vadd.f32 %v5859, %v6084
      %v6180 = vadd.f32 %v5860, %v6086
      %v6181 = vadd.f32 %v5861, %v6088
      %v6182 = vadd.f32 %v5862, %v6090
      %v6183 = vadd.f32 %v5863, %v6092
      %v6184 = vadd.f32 %v5864, %v6094
      %v6185 = vadd.f32 %v5865, %v6096
      %v6186 = vadd.f32 %v5866, %v6098
      %v6187 = vadd.f32 %v5867, %v6100
      %v6188 = vadd.f32 %v5868, %v6102
      %v6189 = vadd.f32 %v5869, %v6104
      %v6190 = vadd.f32 %v5870, %v6106
      %v6191 = vadd.f32 %v5871, %v6108
      %v6192 = vadd.f32 %v5872, %v6110
      %v6193 = vadd.f32 %v5873, %v6112
      %v6194 = vadd.f32 %v5874, %v6114
      %v6195 = vadd.f32 %v5875, %v6116
      %v6196 = vadd.f32 %v5876, %v6118
      %v6197 = vadd.f32 %v5877, %v6120
      %v6198 = vadd.f32 %v5878, %v6122
      %v6199 = vadd.f32 %v5879, %v6124
      %v6200 = vadd.f32 %v5880, %v6126
      %v6201 = vadd.f32 %v5881, %v6128
      %v6202 = vadd.f32 %v5882, %v6130
      %v6203 = vadd.f32 %v5883, %v6132
      %v6204 = vadd.f32 %v5884, %v6134
      %v6205 = vadd.f32 %v5885, %v6136
      %v6206 = vadd.f32 %v5886, %v6138
      %v6207 = vadd.f32 %v5887, %v6140
      %v6208 = vadd.f32 %v5888, %v6142
      %v6209 = vadd.f32 %v5889, %v6144
      %v6210 = vadd.f32 %v5890, %v6146
      %v6211 = vmul.f32 %v6179, 0.0625
      %v6212 = vmul.f32 %v6180, 0.0625
      %v6213 = vmul.f32 %v6181, 0.0625
      %v6214 = vmul.f32 %v6182, 0.0625
      %v6215 = vmul.f32 %v6183, 0.0625
      %v6216 = vmul.f32 %v6184, 0.0625
      %v6217 = vmul.f32 %v6185, 0.0625
      %v6218 = vmul.f32 %v6186, 0.0625
      %v6219 = vmul.f32 %v6187, 0.0625
      %v6220 = vmul.f32 %v6188, 0.0625
      %v6221 = vmul.f32 %v6189, 0.0625
      %v6222 = vmul.f32 %v6190, 0.0625
      %v6223 = vmul.f32 %v6191, 0.0625
      %v6224 = vmul.f32 %v6192, 0.0625
      %v6225 = vmul.f32 %v6193, 0.0625
      %v6226 = vmul.f32 %v6194, 0.0625
      %v6227 = vmul.f32 %v6195, 0.0625
      %v6228 = vmul.f32 %v6196, 0.0625
      %v6229 = vmul.f32 %v6197, 0.0625
      %v6230 = vmul.f32 %v6198, 0.0625
      %v6231 = vmul.f32 %v6199, 0.0625
      %v6232 = vmul.f32 %v6200, 0.0625
      %v6233 = vmul.f32 %v6201, 0.0625
      %v6234 = vmul.f32 %v6202, 0.0625
      %v6235 = vmul.f32 %v6203, 0.0625
      %v6236 = vmul.f32 %v6204, 0.0625
      %v6237 = vmul.f32 %v6205, 0.0625
      %v6238 = vmul.f32 %v6206, 0.0625
      %v6239 = vmul.f32 %v6207, 0.0625
      %v6240 = vmul.f32 %v6208, 0.0625
      %v6241 = vmul.f32 %v6209, 0.0625
      %v6242 = vmul.f32 %v6210, 0.0625
      %vm6243 = vcmask 130048
      %6244 = vst.msk [vmem:[%s308] sm:$0xff] %vm6243, %v6211
      %6245 = vst.msk [vmem:[%s308 + $0x8] sm:$0xff] %vm6243, %v6212
      %6246 = vst.msk [vmem:[%s308 + $0x10] sm:$0xff] %vm6243, %v6213
      %6247 = vst.msk [vmem:[%s308 + $0x18] sm:$0xff] %vm6243, %v6214
      %6248 = vst.msk [vmem:[%s308 + $0x20] sm:$0xff] %vm6243, %v6215
      %6249 = vst.msk [vmem:[%s308 + $0x28] sm:$0xff] %vm6243, %v6216
      %6250 = vst.msk [vmem:[%s308 + $0x30] sm:$0xff] %vm6243, %v6217
      %6251 = vst.msk [vmem:[%s308 + $0x38] sm:$0xff] %vm6243, %v6218
      %6252 = vst.msk [vmem:[%s308 + $0x40] sm:$0xff] %vm6243, %v6219
      %6253 = vst.msk [vmem:[%s308 + $0x48] sm:$0xff] %vm6243, %v6220
      %6254 = vst.msk [vmem:[%s308 + $0x50] sm:$0xff] %vm6243, %v6221
      %6255 = vst.msk [vmem:[%s308 + $0x58] sm:$0xff] %vm6243, %v6222
      %6256 = vst.msk [vmem:[%s308 + $0x60] sm:$0xff] %vm6243, %v6223
      %6257 = vst.msk [vmem:[%s308 + $0x68] sm:$0xff] %vm6243, %v6224
      %6258 = vst.msk [vmem:[%s308 + $0x70] sm:$0xff] %vm6243, %v6225
      %6259 = vst.msk [vmem:[%s308 + $0x78] sm:$0xff] %vm6243, %v6226
      %6260 = vst.msk [vmem:[%s308 + $0x80] sm:$0xff] %vm6243, %v6227
      %6261 = vst.msk [vmem:[%s308 + $0x88] sm:$0xff] %vm6243, %v6228
      %6262 = vst.msk [vmem:[%s308 + $0x90] sm:$0xff] %vm6243, %v6229
      %6263 = vst.msk [vmem:[%s308 + $0x98] sm:$0xff] %vm6243, %v6230
      %6264 = vst.msk [vmem:[%s308 + $0xa0] sm:$0xff] %vm6243, %v6231
      %6265 = vst.msk [vmem:[%s308 + $0xa8] sm:$0xff] %vm6243, %v6232
      %6266 = vst.msk [vmem:[%s308 + $0xb0] sm:$0xff] %vm6243, %v6233
      %6267 = vst.msk [vmem:[%s308 + $0xb8] sm:$0xff] %vm6243, %v6234
      %6268 = vst.msk [vmem:[%s308 + $0xc0] sm:$0xff] %vm6243, %v6235
      %6269 = vst.msk [vmem:[%s308 + $0xc8] sm:$0xff] %vm6243, %v6236
      %6270 = vst.msk [vmem:[%s308 + $0xd0] sm:$0xff] %vm6243, %v6237
      %6271 = vst.msk [vmem:[%s308 + $0xd8] sm:$0xff] %vm6243, %v6238
      %6272 = vst.msk [vmem:[%s308 + $0xe0] sm:$0xff] %vm6243, %v6239
      %6273 = vst.msk [vmem:[%s308 + $0xe8] sm:$0xff] %vm6243, %v6240
      %6274 = vst.msk [vmem:[%s308 + $0xf0] sm:$0xff] %vm6243, %v6241
      %6275 = vst.msk [vmem:[%s308 + $0xf8] sm:$0xff] %vm6243, %v6242
      %s6276 = smul.u32 32, %s18
      %p6277 = scmp.lt.s32.totalorder %s6276, 63
      %s6278 = scalar_select %p6277, %s6276, 63
      %s6279 = smul.addr %s6278, 8
      %s6280 = scalar_lea.vmem %s7, %s6279
      // Predicated region
      $region49: #{extractor_attn_forward.1} parent=47 // pred_check
        %p6281 = pneg %p193
      $region50: #{extractor_attn_forward.1} parent=47 // pred_check_branch
        %6283 = sbr.rel (%p6281) target = $region52
      $region51: #{extractor_attn_forward.1} parent=47 // pred_region
        %s6284 = smul.u32 32, %s18
      $region52: #{extractor_attn_forward.1} parent=47 // pred_fallthru
        _
    $region48: #{extractor_attn_forward.1} parent=5 // pred_fallthru
      _
    %p6285 = scmp.le.s32.totalorder 2, %s13
    // Predicated region
    $region53: #{extractor_attn_forward.1} parent=5 // pred_check
      %p6286 = pneg %p6285
    $region54: #{extractor_attn_forward.1} parent=5 // pred_check_branch
      %6288 = sbr.rel (%p6286) target = $region56
    $region55: #{extractor_attn_forward.1} parent=5 // pred_region
      %s6289 = ssub.s32 %s13, 2
      // Predicated region
      $region57: #{extractor_attn_forward.1} parent=55 // pred_check
        %p6290 = pneg %p199
      $region58: #{extractor_attn_forward.1} parent=55 // pred_check_branch
        %6292 = sbr.rel (%p6290) target = $region60
      $region59: #{extractor_attn_forward.1} parent=55 // pred_region
        %s6293 = smul.u32 32, %s19
        %p6294 = scmp.lt.s32.totalorder %s6293, 63
        %s6295 = scalar_select %p6294, %s6293, 63
        %s6296 = smul.addr %s6295, 8
        %s6297 = scalar_lea.vmem %s7, %s6296
      $region60: #{extractor_attn_forward.1} parent=55 // pred_fallthru
        _
    $region56: #{extractor_attn_forward.1} parent=5 // pred_fallthru
      _
  $region6: #{extractor_attn_forward.1} parent=0 // loop_footer
    %s17 = sadd.s32 1, %s13
  $region7: #{extractor_attn_forward.1} parent=0 // loop_footer_branch
    %12 = sbr.rel target = $region3
  $region8: #{extractor_attn_forward.1} parent=0 // loop_exit
    _

</llo_original>
